<compile_context>
chip_gen: v7x
topology: tpu7x:2x2x1
jax: 0.10.0
libtpu: 0.0.40
codegen_flags: <defaults>
</compile_context>

<pallas_src>
import functools

import jax
import jax.numpy as jnp
from jax.experimental import pallas as pl
from jax.experimental.pallas import tpu as pltpu


def transformer_block_kernel(
    x_ref, wqkv_ref, wo_ref, w1_ref, w2_ref, vec_ref, o_ref,
    *, n_heads, mxu_dtype,
):
    bt, S, D = x_ref.shape
    H = n_heads
    hd = D // H
    FF = w1_ref.shape[1]
    M = bt * S

    # Packed per-feature vectors (f32).  Rows:
    #   0: bqkv (3D wide, q-part pre-scaled)   1: b1 (FF wide)
    #   2: bo   3: b2   4: gamma1   5: beta1   6: gamma2   7: beta2   (D wide)
    bqkv = vec_ref[0:1, 0:3 * D]
    b1 = vec_ref[1:2, 0:FF]
    bo = vec_ref[2:3, 0:D]
    b2 = vec_ref[3:4, 0:D]
    g1 = vec_ref[4:5, 0:D]
    be1 = vec_ref[5:6, 0:D]
    g2 = vec_ref[6:7, 0:D]
    be2 = vec_ref[7:8, 0:D]

    x = x_ref[...].astype(jnp.float32).reshape(M, D)   # merge leading dims (layout-free)

    # ---- fused QKV projection: one MXU pass with N = 3D (scale folded into Wq/bq) ----
    qkv = jnp.dot(x.astype(mxu_dtype), wqkv_ref[...],
                  preferred_element_type=jnp.float32) + bqkv          # (M, 3D) f32
    q = qkv[:, 0 * D:1 * D]
    k = qkv[:, 1 * D:2 * D]
    v = qkv[:, 2 * D:3 * D]

    # ---- head split: (M, D) -> (bt*H, S, hd), single bf16 cast per tensor ----
    # With the default batch_tile=1 the grid (not a Python loop) walks the batch, so only
    # one batch element's intermediates are live per step.
    def split_heads(t):
        return jnp.stack(
            [t[b * S:(b + 1) * S, h * hd:(h + 1) * hd]
             for b in range(bt) for h in range(H)], axis=0
        ).astype(mxu_dtype)                                           # (bt*H, S, hd)

    qh = split_heads(q)
    kh = split_heads(k)
    vh = split_heads(v)

    # ---- self-attention: (batch*head)-batched dot_generals, softmax math in f32 ----
    s = jnp.einsum("nqd,nkd->nqk", qh, kh,
                   preferred_element_type=jnp.float32)                # (bt*H, S, S)
    s = s - jnp.max(s, axis=-1, keepdims=True)
    p = jnp.exp(s)
    p = p * pl.reciprocal(jnp.sum(p, axis=-1, keepdims=True), approx=True)
    ah = jnp.einsum("nqk,nkd->nqd", p.astype(mxu_dtype), vh,
                    preferred_element_type=jnp.float32)               # (bt*H, S, hd)

    rows = [jnp.concatenate([ah[b * H + h] for h in range(H)], axis=-1)   # (S, D)
            for b in range(bt)]
    attn = rows[0] if bt == 1 else jnp.concatenate(rows, axis=0)      # (M, D)

    # out-projection over all tokens of this tile
    attn = jnp.dot(attn.astype(mxu_dtype), wo_ref[...],
                   preferred_element_type=jnp.float32) + bo

    def layer_norm(y, g, b, eps=1e-5):
        mu = jnp.mean(y, axis=-1, keepdims=True)
        d = y - mu
        var = jnp.mean(d * d, axis=-1, keepdims=True)                 # two-pass variance
        return d * jax.lax.rsqrt(var + eps) * g + b

    # residual + norm1
    y = layer_norm(x + attn, g1, be1)

    # feed-forward: relu(y @ W1 + b1) @ W2 + b2   (dropout = identity)
    h1 = jnp.maximum(
        jnp.dot(y.astype(mxu_dtype), w1_ref[...],
                preferred_element_type=jnp.float32) + b1, 0.0
    ).astype(mxu_dtype)                         # largest activation kept in bf16
    ff = jnp.dot(h1, w2_ref[...], preferred_element_type=jnp.float32) + b2

    # residual + norm2
    out = layer_norm(y + ff, g2, be2)
    o_ref[...] = out.reshape(bt, S, D).astype(o_ref.dtype)


def transformer_block(x, p, *, n_heads, batch_tile=1, mxu_dtype=jnp.bfloat16):
    B, S, D = x.shape
    FF = p["w1"].shape[1]
    assert D % n_heads == 0
    bt = batch_tile
    assert B % bt == 0

    hd = D // n_heads
    scale = 1.0 / (hd ** 0.5)

    # Fuse QKV weights, fold the attention scale into the q columns / q bias, ship all
    # matmul weights as bf16 (f32 accumulation on the MXU).
    wqkv = jnp.concatenate([p["wq"] * scale, p["wk"], p["wv"]], axis=1).astype(mxu_dtype)
    wo = p["wo"].astype(mxu_dtype)
    w1 = p["w1"].astype(mxu_dtype)
    w2 = p["w2"].astype(mxu_dtype)

    # Pack all per-feature vectors (f32) into ONE (8, W) array: one DMA instead of nine.
    W = max(3 * D, FF)

    def row(v):
        return jnp.pad(v, ((0, 0), (0, W - v.shape[1])))

    vecs = jnp.concatenate([
        row(jnp.concatenate([p["bq"] * scale, p["bk"], p["bv"]], axis=1)),  # bqkv
        row(p["b1"]),
        row(p["bo"]), row(p["b2"]),
        row(p["g1"]), row(p["be1"]), row(p["g2"]), row(p["be2"]),
    ], axis=0)                                                              # (8, W) f32

    def resident(shape):
        # Constant block index -> stays in VMEM across all grid steps (no re-DMA).
        return pl.BlockSpec(shape, lambda b: (0, 0))

    return pl.pallas_call(
        functools.partial(transformer_block_kernel, n_heads=n_heads, mxu_dtype=mxu_dtype),
        out_shape=jax.ShapeDtypeStruct((B, S, D), x.dtype),
        grid=(B // bt,),
        in_specs=[
            pl.BlockSpec((bt, S, D), lambda b: (b, 0, 0)),   # x: streamed / pipelined
            resident((D, 3 * D)),                            # fused Wqkv
            resident((D, D)),                                # Wo
            resident((D, FF)),                               # W1
            resident((FF, D)),                               # W2
            resident((8, W)),                                # packed biases / LN params
        ],
        out_specs=pl.BlockSpec((bt, S, D), lambda b: (b, 0, 0)),
        compiler_params=pltpu.CompilerParams(
            # >= 2 grid steps -> the parallel axis can split across v7x's 2 TensorCores.
            dimension_semantics=("parallel",),
            # Toy shapes need ~nothing; re-derive per generation for realistic D/FF
            # (raise toward ~100 MiB on v5e/v6e, cap <= 48 MiB on v7x's 64 MiB VMEM).
            vmem_limit_bytes=32 * 1024 * 1024,
        ),
    )(x, wqkv, wo, w1, w2, vecs)


def ref_forward(x, p, n_heads, mxu_dtype=jnp.float32):
    """Pure-JAX reference matching the PyTorch forward (dropout in eval mode).
    mxu_dtype lets us mirror the kernel's bf16 matmul operands for a tight check."""
    def mm(a, w):
        return jnp.dot(a.astype(mxu_dtype), w.astype(mxu_dtype),
                       preferred_element_type=jnp.float32)

    def ln(y, g, b, eps=1e-5):
        mu = y.mean(-1, keepdims=True)
        var = ((y - mu) ** 2).mean(-1, keepdims=True)
        return (y - mu) / jnp.sqrt(var + eps) * g + b

    B, S, D = x.shape
    hd = D // n_heads
    scale = 1.0 / (hd ** 0.5)
    q = (mm(x, p["wq"]) + p["bq"]).reshape(B, S, n_heads, hd).transpose(0, 2, 1, 3)
    k = (mm(x, p["wk"]) + p["bk"]).reshape(B, S, n_heads, hd).transpose(0, 2, 1, 3)
    v = (mm(x, p["wv"]) + p["bv"]).reshape(B, S, n_heads, hd).transpose(0, 2, 1, 3)
    s = jnp.einsum("bhqd,bhkd->bhqk", (q * scale).astype(mxu_dtype), k.astype(mxu_dtype),
                   preferred_element_type=jnp.float32)
    a = jax.nn.softmax(s, axis=-1)
    attn = jnp.einsum("bhqk,bhkd->bhqd", a.astype(mxu_dtype), v.astype(mxu_dtype),
                      preferred_element_type=jnp.float32)
    attn = attn.transpose(0, 2, 1, 3).reshape(B, S, D)
    attn = mm(attn, p["wo"]) + p["bo"]
    y = ln(x + attn, p["g1"], p["be1"])
    ff = mm(jnp.maximum(mm(y, p["w1"]) + p["b1"], 0.0), p["w2"]) + p["b2"]
    return ln(y + ff, p["g2"], p["be2"])


def init_params(key, d_model, n_heads, dim_feedforward):
    ks = jax.random.split(key, 8)
    sd = 0.05
    D, FF = d_model, dim_feedforward
    return {
        # attention in-projection (stored transposed: x @ W)
        "wq": jax.random.normal(ks[0], (D, D), jnp.float32) * sd,
        "wk": jax.random.normal(ks[1], (D, D), jnp.float32) * sd,
        "wv": jax.random.normal(ks[2], (D, D), jnp.float32) * sd,
        "bq": jax.random.normal(ks[3], (1, D), jnp.float32) * sd,
        "bk": jax.random.normal(ks[4], (1, D), jnp.float32) * sd,
        "bv": jax.random.normal(ks[5], (1, D), jnp.float32) * sd,
        # attention out-projection
        "wo": jax.random.normal(ks[6], (D, D), jnp.float32) * sd,
        "bo": jnp.zeros((1, D), jnp.float32),
        # feed-forward
        "w1": jax.random.normal(ks[7], (D, FF), jnp.float32) * sd,
        "b1": jnp.zeros((1, FF), jnp.float32),
        "w2": jax.random.normal(jax.random.fold_in(key, 99), (FF, D), jnp.float32) * sd,
        "b2": jnp.zeros((1, D), jnp.float32),
        # layer norms (PyTorch default init: gamma=1, beta=0)
        "g1": jnp.ones((1, D), jnp.float32),
        "be1": jnp.zeros((1, D), jnp.float32),
        "g2": jnp.ones((1, D), jnp.float32),
        "be2": jnp.zeros((1, D), jnp.float32),
    }


if __name__ == "__main__":
    # Small-but-lane-dense shapes consistent with the module:
    # TransformerBlock(d_model=128, n_heads=4, dim_feedforward=256), batch=2, seq=128.
    B, S, D, H, FF = 2, 128, 128, 4, 256
    key = jax.random.PRNGKey(0)
    kx, kp = jax.random.split(key)

    x = jax.random.normal(kx, (B, S, D), jnp.float32)
    params = init_params(kp, D, H, FF)

    out = transformer_block(x, params, n_heads=H)   # grid = (2,) -> pipelined / 2-TC-able
    out = jax.block_until_ready(out)
    assert out.shape == (B, S, D)

    # Tight check against a reference that mirrors the kernel's bf16 matmul operands,
    # looser sanity check against the full-f32 reference.
    ref_bf16 = ref_forward(x, params, H, mxu_dtype=jnp.bfloat16)
    ref_f32 = ref_forward(x, params, H, mxu_dtype=jnp.float32)
    err_bf16 = float(jnp.max(jnp.abs(out - ref_bf16)))
    err_f32 = float(jnp.max(jnp.abs(out - ref_f32)))
    assert err_bf16 < 3e-2, f"mismatch vs bf16 reference: {err_bf16}"
    assert err_f32 < 1e-1, f"mismatch vs f32 reference: {err_f32}"

    print("KERNEL_OK")
</pallas_src>

<mosaic_0001>
module attributes {stable_mosaic.version = 11 : i64} {
  func.func @transformer_block_kernel(%arg0: i32, %arg1: memref<1x128x128xf32, #tpu.memory_space<vmem>>, %arg2: memref<128x384xbf16, #tpu.memory_space<vmem>>, %arg3: memref<128x128xbf16, #tpu.memory_space<vmem>>, %arg4: memref<128x256xbf16, #tpu.memory_space<vmem>>, %arg5: memref<256x128xbf16, #tpu.memory_space<vmem>>, %arg6: memref<8x384xf32, #tpu.memory_space<vmem>>, %arg7: memref<1x128x128xf32, #tpu.memory_space<vmem>>) attributes {dimension_semantics = [#tpu.dimension_semantics<parallel>], iteration_bounds = array<i64: 2>, scalar_prefetch = 0 : i64, scratch_operands = 0 : i64, tpu.core_type = #tpu.core_type<tc>, window_params = [{transform_indices = @transform_0, window_bounds = array<i64: 1, 128, 128>}, {pipeline_mode = #tpu.pipeline_mode<synchronous>, transform_indices = @transform_1, window_bounds = array<i64: 128, 384>}, {pipeline_mode = #tpu.pipeline_mode<synchronous>, transform_indices = @transform_2, window_bounds = array<i64: 128, 128>}, {pipeline_mode = #tpu.pipeline_mode<synchronous>, transform_indices = @transform_3, window_bounds = array<i64: 128, 256>}, {pipeline_mode = #tpu.pipeline_mode<synchronous>, transform_indices = @transform_4, window_bounds = array<i64: 256, 128>}, {pipeline_mode = #tpu.pipeline_mode<synchronous>, transform_indices = @transform_5, window_bounds = array<i64: 8, 384>}, {transform_indices = @transform_6, window_bounds = array<i64: 1, 128, 128>}]} {
    %c0 = arith.constant 0 : index
    %c0_0 = arith.constant 0 : index
    %0 = vector.load %arg6[%c0, %c0_0] : memref<8x384xf32, #tpu.memory_space<vmem>>, vector<1x384xf32>
    %c1 = arith.constant 1 : index
    %c0_1 = arith.constant 0 : index
    %1 = vector.load %arg6[%c1, %c0_1] : memref<8x384xf32, #tpu.memory_space<vmem>>, vector<1x256xf32>
    %c2 = arith.constant 2 : index
    %c0_2 = arith.constant 0 : index
    %2 = vector.load %arg6[%c2, %c0_2] : memref<8x384xf32, #tpu.memory_space<vmem>>, vector<1x128xf32>
    %c3 = arith.constant 3 : index
    %c0_3 = arith.constant 0 : index
    %3 = vector.load %arg6[%c3, %c0_3] : memref<8x384xf32, #tpu.memory_space<vmem>>, vector<1x128xf32>
    %c4 = arith.constant 4 : index
    %c0_4 = arith.constant 0 : index
    %4 = vector.load %arg6[%c4, %c0_4] : memref<8x384xf32, #tpu.memory_space<vmem>>, vector<1x128xf32>
    %c5 = arith.constant 5 : index
    %c0_5 = arith.constant 0 : index
    %5 = vector.load %arg6[%c5, %c0_5] : memref<8x384xf32, #tpu.memory_space<vmem>>, vector<1x128xf32>
    %c6 = arith.constant 6 : index
    %c0_6 = arith.constant 0 : index
    %6 = vector.load %arg6[%c6, %c0_6] : memref<8x384xf32, #tpu.memory_space<vmem>>, vector<1x128xf32>
    %c7 = arith.constant 7 : index
    %c0_7 = arith.constant 0 : index
    %7 = vector.load %arg6[%c7, %c0_7] : memref<8x384xf32, #tpu.memory_space<vmem>>, vector<1x128xf32>
    %c0_8 = arith.constant 0 : index
    %c0_9 = arith.constant 0 : index
    %c0_10 = arith.constant 0 : index
    %8 = vector.load %arg1[%c0_8, %c0_9, %c0_10] : memref<1x128x128xf32, #tpu.memory_space<vmem>>, vector<1x128x128xf32>
    %9 = vector.shape_cast %8 : vector<1x128x128xf32> to vector<128x128xf32>
    %10 = arith.truncf %9 : vector<128x128xf32> to vector<128x128xbf16>
    %c0_11 = arith.constant 0 : index
    %c0_12 = arith.constant 0 : index
    %11 = vector.load %arg2[%c0_11, %c0_12] : memref<128x384xbf16, #tpu.memory_space<vmem>>, vector<128x384xbf16>
    %cst = arith.constant dense<0.000000e+00> : vector<128x384xf32>
    %12 = tpu.matmul %10, %11, %cst {dimension_numbers = #tpu.dot_dimension_numbers<[1], [0], [0], [1], [0, 0, 1, 1], [], []>} : vector<128x128xbf16>, vector<128x384xbf16>, vector<128x384xf32> -> vector<128x384xf32>
    %13 = vector.broadcast %0 : vector<1x384xf32> to vector<128x384xf32>
    %14 = arith.addf %12, %13 : vector<128x384xf32>
    %15 = vector.extract_strided_slice %14 {offsets = [0, 0], sizes = [128, 128], strides = [1, 1]} : vector<128x384xf32> to vector<128x128xf32>
    %16 = vector.extract_strided_slice %14 {offsets = [0, 128], sizes = [128, 128], strides = [1, 1]} : vector<128x384xf32> to vector<128x128xf32>
    %17 = vector.extract_strided_slice %14 {offsets = [0, 256], sizes = [128, 128], strides = [1, 1]} : vector<128x384xf32> to vector<128x128xf32>
    %18 = vector.extract_strided_slice %15 {offsets = [0, 0], sizes = [128, 32], strides = [1, 1]} : vector<128x128xf32> to vector<128x32xf32>
    %19 = vector.extract_strided_slice %15 {offsets = [0, 32], sizes = [128, 32], strides = [1, 1]} : vector<128x128xf32> to vector<128x32xf32>
    %20 = vector.extract_strided_slice %15 {offsets = [0, 64], sizes = [128, 32], strides = [1, 1]} : vector<128x128xf32> to vector<128x32xf32>
    %21 = vector.extract_strided_slice %15 {offsets = [0, 96], sizes = [128, 32], strides = [1, 1]} : vector<128x128xf32> to vector<128x32xf32>
    %22 = vector.shape_cast %18 : vector<128x32xf32> to vector<1x128x32xf32>
    %23 = vector.shape_cast %19 : vector<128x32xf32> to vector<1x128x32xf32>
    %24 = vector.shape_cast %20 : vector<128x32xf32> to vector<1x128x32xf32>
    %25 = vector.shape_cast %21 : vector<128x32xf32> to vector<1x128x32xf32>
    %26 = tpu.concatenate %22, %23, %24, %25 in 0 : vector<1x128x32xf32>, vector<1x128x32xf32>, vector<1x128x32xf32>, vector<1x128x32xf32> -> vector<4x128x32xf32>
    %27 = arith.truncf %26 : vector<4x128x32xf32> to vector<4x128x32xbf16>
    %28 = vector.extract_strided_slice %16 {offsets = [0, 0], sizes = [128, 32], strides = [1, 1]} : vector<128x128xf32> to vector<128x32xf32>
    %29 = vector.extract_strided_slice %16 {offsets = [0, 32], sizes = [128, 32], strides = [1, 1]} : vector<128x128xf32> to vector<128x32xf32>
    %30 = vector.extract_strided_slice %16 {offsets = [0, 64], sizes = [128, 32], strides = [1, 1]} : vector<128x128xf32> to vector<128x32xf32>
    %31 = vector.extract_strided_slice %16 {offsets = [0, 96], sizes = [128, 32], strides = [1, 1]} : vector<128x128xf32> to vector<128x32xf32>
    %32 = vector.shape_cast %28 : vector<128x32xf32> to vector<1x128x32xf32>
    %33 = vector.shape_cast %29 : vector<128x32xf32> to vector<1x128x32xf32>
    %34 = vector.shape_cast %30 : vector<128x32xf32> to vector<1x128x32xf32>
    %35 = vector.shape_cast %31 : vector<128x32xf32> to vector<1x128x32xf32>
    %36 = tpu.concatenate %32, %33, %34, %35 in 0 : vector<1x128x32xf32>, vector<1x128x32xf32>, vector<1x128x32xf32>, vector<1x128x32xf32> -> vector<4x128x32xf32>
    %37 = arith.truncf %36 : vector<4x128x32xf32> to vector<4x128x32xbf16>
    %38 = vector.extract_strided_slice %17 {offsets = [0, 0], sizes = [128, 32], strides = [1, 1]} : vector<128x128xf32> to vector<128x32xf32>
    %39 = vector.extract_strided_slice %17 {offsets = [0, 32], sizes = [128, 32], strides = [1, 1]} : vector<128x128xf32> to vector<128x32xf32>
    %40 = vector.extract_strided_slice %17 {offsets = [0, 64], sizes = [128, 32], strides = [1, 1]} : vector<128x128xf32> to vector<128x32xf32>
    %41 = vector.extract_strided_slice %17 {offsets = [0, 96], sizes = [128, 32], strides = [1, 1]} : vector<128x128xf32> to vector<128x32xf32>
    %42 = vector.shape_cast %38 : vector<128x32xf32> to vector<1x128x32xf32>
    %43 = vector.shape_cast %39 : vector<128x32xf32> to vector<1x128x32xf32>
    %44 = vector.shape_cast %40 : vector<128x32xf32> to vector<1x128x32xf32>
    %45 = vector.shape_cast %41 : vector<128x32xf32> to vector<1x128x32xf32>
    %46 = tpu.concatenate %42, %43, %44, %45 in 0 : vector<1x128x32xf32>, vector<1x128x32xf32>, vector<1x128x32xf32>, vector<1x128x32xf32> -> vector<4x128x32xf32>
    %47 = arith.truncf %46 : vector<4x128x32xf32> to vector<4x128x32xbf16>
    "tpu.trace_start"() <{level = 10 : i32, message = "nqd,nkd->nqk"}> : () -> ()
    %cst_13 = arith.constant dense<0.000000e+00> : vector<4x128x128xf32>
    %48 = tpu.matmul %27, %37, %cst_13 {dimension_numbers = #tpu.dot_dimension_numbers<[2], [2], [1], [1], [0, 0, 0, 1, 1, 1], [0], [0]>} : vector<4x128x32xbf16>, vector<4x128x32xbf16>, vector<4x128x128xf32> -> vector<4x128x128xf32>
    "tpu.trace_stop"() : () -> ()
    %cst_14 = arith.constant dense<0xFF800000> : vector<4x128xf32>
    %49 = vector.multi_reduction <maximumf>, %48, %cst_14 [2] : vector<4x128x128xf32> to vector<4x128xf32>
    %50 = vector.shape_cast %49 : vector<4x128xf32> to vector<4x128x1xf32>
    %51 = vector.broadcast %50 : vector<4x128x1xf32> to vector<4x128x128xf32>
    %52 = arith.subf %48, %51 : vector<4x128x128xf32>
    %53 = math.exp %52 : vector<4x128x128xf32>
    %cst_15 = arith.constant dense<0.000000e+00> : vector<4x128xf32>
    %54 = vector.multi_reduction <add>, %53, %cst_15 [2] : vector<4x128x128xf32> to vector<4x128xf32>
    %55 = vector.shape_cast %54 : vector<4x128xf32> to vector<4x128x1xf32>
    %56 = tpu.reciprocal %55 {approx = true} : vector<4x128x1xf32> -> vector<4x128x1xf32>
    %57 = vector.broadcast %56 : vector<4x128x1xf32> to vector<4x128x128xf32>
    %58 = arith.mulf %53, %57 : vector<4x128x128xf32>
    %59 = arith.truncf %58 : vector<4x128x128xf32> to vector<4x128x128xbf16>
    "tpu.trace_start"() <{level = 10 : i32, message = "nqk,nkd->nqd"}> : () -> ()
    %cst_16 = arith.constant dense<0.000000e+00> : vector<4x128x32xf32>
    %60 = tpu.matmul %59, %47, %cst_16 {dimension_numbers = #tpu.dot_dimension_numbers<[2], [1], [1], [2], [0, 0, 0, 1, 1, 2], [0], [0]>} : vector<4x128x128xbf16>, vector<4x128x32xbf16>, vector<4x128x32xf32> -> vector<4x128x32xf32>
    "tpu.trace_stop"() : () -> ()
    %61 = vector.extract_strided_slice %60 {offsets = [0, 0, 0], sizes = [1, 128, 32], strides = [1, 1, 1]} : vector<4x128x32xf32> to vector<1x128x32xf32>
    %62 = vector.shape_cast %61 : vector<1x128x32xf32> to vector<128x32xf32>
    %63 = vector.extract_strided_slice %60 {offsets = [1, 0, 0], sizes = [1, 128, 32], strides = [1, 1, 1]} : vector<4x128x32xf32> to vector<1x128x32xf32>
    %64 = vector.shape_cast %63 : vector<1x128x32xf32> to vector<128x32xf32>
    %65 = vector.extract_strided_slice %60 {offsets = [2, 0, 0], sizes = [1, 128, 32], strides = [1, 1, 1]} : vector<4x128x32xf32> to vector<1x128x32xf32>
    %66 = vector.shape_cast %65 : vector<1x128x32xf32> to vector<128x32xf32>
    %67 = vector.extract_strided_slice %60 {offsets = [3, 0, 0], sizes = [1, 128, 32], strides = [1, 1, 1]} : vector<4x128x32xf32> to vector<1x128x32xf32>
    %68 = vector.shape_cast %67 : vector<1x128x32xf32> to vector<128x32xf32>
    %69 = tpu.concatenate %62, %64, %66, %68 in 1 : vector<128x32xf32>, vector<128x32xf32>, vector<128x32xf32>, vector<128x32xf32> -> vector<128x128xf32>
    %70 = arith.truncf %69 : vector<128x128xf32> to vector<128x128xbf16>
    %c0_17 = arith.constant 0 : index
    %c0_18 = arith.constant 0 : index
    %71 = vector.load %arg3[%c0_17, %c0_18] : memref<128x128xbf16, #tpu.memory_space<vmem>>, vector<128x128xbf16>
    %cst_19 = arith.constant dense<0.000000e+00> : vector<128x128xf32>
    %72 = tpu.matmul %70, %71, %cst_19 {dimension_numbers = #tpu.dot_dimension_numbers<[1], [0], [0], [1], [0, 0, 1, 1], [], []>} : vector<128x128xbf16>, vector<128x128xbf16>, vector<128x128xf32> -> vector<128x128xf32>
    %73 = vector.broadcast %2 : vector<1x128xf32> to vector<128x128xf32>
    %74 = arith.addf %72, %73 : vector<128x128xf32>
    %75 = arith.addf %9, %74 : vector<128x128xf32>
    %cst_20 = arith.constant dense<0.000000e+00> : vector<128xf32>
    %76 = vector.multi_reduction <add>, %75, %cst_20 [1] : vector<128x128xf32> to vector<128xf32>
    %77 = vector.shape_cast %76 : vector<128xf32> to vector<128x1xf32>
    %cst_21 = arith.constant 1.280000e+02 : f32
    %78 = vector.broadcast %cst_21 : f32 to vector<128x1xf32>
    %79 = arith.divf %77, %78 : vector<128x1xf32>
    %80 = vector.broadcast %79 : vector<128x1xf32> to vector<128x128xf32>
    %81 = arith.subf %75, %80 : vector<128x128xf32>
    %82 = arith.mulf %81, %81 : vector<128x128xf32>
    %cst_22 = arith.constant dense<0.000000e+00> : vector<128xf32>
    %83 = vector.multi_reduction <add>, %82, %cst_22 [1] : vector<128x128xf32> to vector<128xf32>
    %84 = vector.shape_cast %83 : vector<128xf32> to vector<128x1xf32>
    %cst_23 = arith.constant 1.280000e+02 : f32
    %85 = vector.broadcast %cst_23 : f32 to vector<128x1xf32>
    %86 = arith.divf %84, %85 : vector<128x1xf32>
    %cst_24 = arith.constant 9.99999974E-6 : f32
    %87 = vector.broadcast %cst_24 : f32 to vector<128x1xf32>
    %88 = arith.addf %86, %87 : vector<128x1xf32>
    %89 = math.rsqrt %88 : vector<128x1xf32>
    %90 = vector.broadcast %89 : vector<128x1xf32> to vector<128x128xf32>
    %91 = arith.mulf %81, %90 : vector<128x128xf32>
    %92 = vector.broadcast %4 : vector<1x128xf32> to vector<128x128xf32>
    %93 = arith.mulf %91, %92 : vector<128x128xf32>
    %94 = vector.broadcast %5 : vector<1x128xf32> to vector<128x128xf32>
    %95 = arith.addf %93, %94 : vector<128x128xf32>
    %96 = arith.truncf %95 : vector<128x128xf32> to vector<128x128xbf16>
    %c0_25 = arith.constant 0 : index
    %c0_26 = arith.constant 0 : index
    %97 = vector.load %arg4[%c0_25, %c0_26] : memref<128x256xbf16, #tpu.memory_space<vmem>>, vector<128x256xbf16>
    %cst_27 = arith.constant dense<0.000000e+00> : vector<128x256xf32>
    %98 = tpu.matmul %96, %97, %cst_27 {dimension_numbers = #tpu.dot_dimension_numbers<[1], [0], [0], [1], [0, 0, 1, 1], [], []>} : vector<128x128xbf16>, vector<128x256xbf16>, vector<128x256xf32> -> vector<128x256xf32>
    %99 = vector.broadcast %1 : vector<1x256xf32> to vector<128x256xf32>
    %100 = arith.addf %98, %99 : vector<128x256xf32>
    %cst_28 = arith.constant 0.000000e+00 : f32
    %101 = vector.broadcast %cst_28 : f32 to vector<128x256xf32>
    %102 = arith.maximumf %100, %101 : vector<128x256xf32>
    %103 = arith.truncf %102 : vector<128x256xf32> to vector<128x256xbf16>
    %c0_29 = arith.constant 0 : index
    %c0_30 = arith.constant 0 : index
    %104 = vector.load %arg5[%c0_29, %c0_30] : memref<256x128xbf16, #tpu.memory_space<vmem>>, vector<256x128xbf16>
    %cst_31 = arith.constant dense<0.000000e+00> : vector<128x128xf32>
    %105 = tpu.matmul %103, %104, %cst_31 {dimension_numbers = #tpu.dot_dimension_numbers<[1], [0], [0], [1], [0, 0, 1, 1], [], []>} : vector<128x256xbf16>, vector<256x128xbf16>, vector<128x128xf32> -> vector<128x128xf32>
    %106 = vector.broadcast %3 : vector<1x128xf32> to vector<128x128xf32>
    %107 = arith.addf %105, %106 : vector<128x128xf32>
    %108 = arith.addf %95, %107 : vector<128x128xf32>
    %cst_32 = arith.constant dense<0.000000e+00> : vector<128xf32>
    %109 = vector.multi_reduction <add>, %108, %cst_32 [1] : vector<128x128xf32> to vector<128xf32>
    %110 = vector.shape_cast %109 : vector<128xf32> to vector<128x1xf32>
    %cst_33 = arith.constant 1.280000e+02 : f32
    %111 = vector.broadcast %cst_33 : f32 to vector<128x1xf32>
    %112 = arith.divf %110, %111 : vector<128x1xf32>
    %113 = vector.broadcast %112 : vector<128x1xf32> to vector<128x128xf32>
    %114 = arith.subf %108, %113 : vector<128x128xf32>
    %115 = arith.mulf %114, %114 : vector<128x128xf32>
    %cst_34 = arith.constant dense<0.000000e+00> : vector<128xf32>
    %116 = vector.multi_reduction <add>, %115, %cst_34 [1] : vector<128x128xf32> to vector<128xf32>
    %117 = vector.shape_cast %116 : vector<128xf32> to vector<128x1xf32>
    %cst_35 = arith.constant 1.280000e+02 : f32
    %118 = vector.broadcast %cst_35 : f32 to vector<128x1xf32>
    %119 = arith.divf %117, %118 : vector<128x1xf32>
    %cst_36 = arith.constant 9.99999974E-6 : f32
    %120 = vector.broadcast %cst_36 : f32 to vector<128x1xf32>
    %121 = arith.addf %119, %120 : vector<128x1xf32>
    %122 = math.rsqrt %121 : vector<128x1xf32>
    %123 = vector.broadcast %122 : vector<128x1xf32> to vector<128x128xf32>
    %124 = arith.mulf %114, %123 : vector<128x128xf32>
    %125 = vector.broadcast %6 : vector<1x128xf32> to vector<128x128xf32>
    %126 = arith.mulf %124, %125 : vector<128x128xf32>
    %127 = vector.broadcast %7 : vector<1x128xf32> to vector<128x128xf32>
    %128 = arith.addf %126, %127 : vector<128x128xf32>
    %129 = vector.shape_cast %128 : vector<128x128xf32> to vector<1x128x128xf32>
    %c0_37 = arith.constant 0 : index
    %c0_38 = arith.constant 0 : index
    %c0_39 = arith.constant 0 : index
    %130 = vector.load %arg7[%c0_37, %c0_38, %c0_39] : memref<1x128x128xf32, #tpu.memory_space<vmem>>, vector<1x128x128xf32>
    tpu.vector_store %arg7[%c0_37, %c0_38, %c0_39], %129 {strides = array<i32>} : memref<1x128x128xf32, #tpu.memory_space<vmem>>, vector<1x128x128xf32>,
    return
  }
  func.func @transform_0(%arg0: i32) -> (i32, i32, i32) {
    %c0_i32 = arith.constant 0 : i32
    %c0_i32_0 = arith.constant 0 : i32
    %c0_i32_1 = arith.constant 0 : i32
    return %arg0, %c0_i32, %c0_i32_0 : i32, i32, i32
  }
  func.func @transform_1(%arg0: i32) -> (i32, i32) {
    %c0_i32 = arith.constant 0 : i32
    %c0_i32_0 = arith.constant 0 : i32
    %c0_i32_1 = arith.constant 0 : i32
    return %c0_i32, %c0_i32_0 : i32, i32
  }
  func.func @transform_2(%arg0: i32) -> (i32, i32) {
    %c0_i32 = arith.constant 0 : i32
    %c0_i32_0 = arith.constant 0 : i32
    %c0_i32_1 = arith.constant 0 : i32
    return %c0_i32, %c0_i32_0 : i32, i32
  }
  func.func @transform_3(%arg0: i32) -> (i32, i32) {
    %c0_i32 = arith.constant 0 : i32
    %c0_i32_0 = arith.constant 0 : i32
    %c0_i32_1 = arith.constant 0 : i32
    return %c0_i32, %c0_i32_0 : i32, i32
  }
  func.func @transform_4(%arg0: i32) -> (i32, i32) {
    %c0_i32 = arith.constant 0 : i32
    %c0_i32_0 = arith.constant 0 : i32
    %c0_i32_1 = arith.constant 0 : i32
    return %c0_i32, %c0_i32_0 : i32, i32
  }
  func.func @transform_5(%arg0: i32) -> (i32, i32) {
    %c0_i32 = arith.constant 0 : i32
    %c0_i32_0 = arith.constant 0 : i32
    %c0_i32_1 = arith.constant 0 : i32
    return %c0_i32, %c0_i32_0 : i32, i32
  }
  func.func @transform_6(%arg0: i32) -> (i32, i32, i32) {
    %c0_i32 = arith.constant 0 : i32
    %c0_i32_0 = arith.constant 0 : i32
    %c0_i32_1 = arith.constant 0 : i32
    return %arg0, %c0_i32, %c0_i32_0 : i32, i32, i32
  }
}

</mosaic_0001>

<llo_original>
// kernel: tpu_custom_call.1
$region0: #{tpu_custom_call.1}
  #allocation0 [shape = 'u32[]', space=smem, size = 0x4, offset = 0x4, fixed_abs, tag = 'smem constant byte address 0x4 - core index']
  #allocation1 [shape = 'u32[144,128]{1,0:T(1,128)}', space=vmem, size = 0x12000, scoped, tag = 'internal scratch']
  %s0 = inlined_call_operand.hbm [shape: f32[2,128,128], index: 0, kind: input, shape index: {}]
  %s1 = inlined_call_operand.hbm [shape: bf16[128,384], index: 1, kind: input, shape index: {}]
  %s2 = inlined_call_operand.hbm [shape: bf16[128,128], index: 2, kind: input, shape index: {}]
  %s3 = inlined_call_operand.hbm [shape: bf16[128,256], index: 3, kind: input, shape index: {}]
  %s4 = inlined_call_operand.hbm [shape: bf16[256,128], index: 4, kind: input, shape index: {}]
  %s5 = inlined_call_operand.hbm [shape: f32[8,384], index: 5, kind: input, shape index: {}]
  %s6 = inlined_call_operand.hbm [shape: f32[2,128,128], index: 6, kind: output, shape index: {}]
  %s7 = sld [smem:[#allocation0]]
  $region81: #{tpu_custom_call.1} parent=0
    _
  %s9 = ssub.s32 1, %s7
  %s10 = scalar_select 0, %s9, %s7
  $region1: #{tpu_custom_call.1} parent=0
    #allocation2 [shape = 'u8[131072]{0}', space=vmem, size = 0x20000, scoped, tag = 'input window, operand 0']
    #allocation3 [shape = 's32[2]{0}', space=sflag, size = 0x8, scoped, tag = 'scoped memory for tpu_custom_call.1']
    #allocation4 [shape = 's32[2]{0}', space=sflag, size = 0x8, scoped, tag = 'scoped memory for tpu_custom_call.1']
    #allocation5 [shape = 'u8[98304]{0}', space=vmem, size = 0x18000, scoped, tag = 'input window, operand 1, single buffered']
    #allocation6 [shape = 's32[1]{0}', space=sflag, size = 0x4, scoped, tag = 'scoped memory for tpu_custom_call.1']
    #allocation7 [shape = 'u8[32768]{0}', space=vmem, size = 0x8000, scoped, tag = 'input window, operand 2, single buffered']
    #allocation8 [shape = 'u8[65536]{0}', space=vmem, size = 0x10000, scoped, tag = 'input window, operand 3, single buffered']
    #allocation9 [shape = 's32[1]{0}', space=sflag, size = 0x4, scoped, tag = 'scoped memory for tpu_custom_call.1']
    #allocation10 [shape = 'u8[65536]{0}', space=vmem, size = 0x10000, scoped, tag = 'input window, operand 4, single buffered']
    #allocation11 [shape = 'u8[12288]{0}', space=vmem, size = 0x3000, scoped, tag = 'input window, operand 5, single buffered']
    #allocation12 [shape = 's32[1]{0}', space=sflag, size = 0x4, scoped, tag = 'scoped memory for tpu_custom_call.1']
    #allocation13 [shape = 'u8[131072]{0}', space=vmem, size = 0x20000, scoped, tag = 'output window, operand 0']
    %11 = vsyncpa [#allocation3], 0
    %s12 = scalar_lea.sflag [#allocation3], 1
    %13 = vsyncpa %s12, 0
    %14 = vsyncpa [#allocation6], 0
    %15 = vsyncpa [#allocation9], 0
    %16 = vsyncpa [#allocation12], 0
    %17 = vsyncpa [#allocation4], 0
    %s18 = scalar_lea.sflag [#allocation4], 1
    %19 = vsyncpa %s18, 0
    loop: start=0, step=1, limit=4
    $region2: #{tpu_custom_call.1} parent=1 // loop_pre_header
      _
    $region3: #{tpu_custom_call.1} parent=1 // loop_header
      %s21 = sphi 0, %s25
      %p22 = scmp.ge.s32.totalorder %s21, 4
      %s31 = sphi 0, %s33
      %s34 = sphi 0, %s31
      %s35 = sphi 0, %s34
      %s51 = sphi 0, %s35
      %s55 = sphi 0, %s55
      %s57 = sphi 0, %s55
      %s58 = sphi 0, %s57
      %s72 = sphi 0, %s58
      %s76 = sphi 0, %s76
      %s78 = sphi 0, %s76
      %s79 = sphi 0, %s78
      %s93 = sphi 0, %s79
      %s97 = sphi 0, %s97
      %s99 = sphi 0, %s97
      %s100 = sphi 0, %s99
      %s114 = sphi 0, %s100
      %s118 = sphi 0, %s118
      %s120 = sphi 0, %s118
      %s121 = sphi 0, %s120
      %s135 = sphi 0, %s121
      %s139 = sphi 0, %s139
      %s141 = sphi 0, %s139
      %s142 = sphi 0, %s141
      %s156 = sphi 0, %s142
      %s162 = sphi 0, %s164
      %s165 = sphi 0, %s162
      %s166 = sphi 0, %s165
      %s182 = sphi 0, %s166
    $region4: #{tpu_custom_call.1} parent=1 // loop_header_branch
      %24 = sbr.rel (%p22) target = $region8
    $region5: #{tpu_custom_call.1} parent=1 // loop_body
      %s26 = ssub.s32 %s21, 1
      %s27 = ssub.s32 %s21, 2
      %s28 = sadd.s32 %s21, 1
      %s29 = ssub.s32 %s21, %s28
      %p30 = scmp.eq.s32.totalorder %s29, 0
      %s32 = sadd.s32 %s31, 1
      %s33 = scalar_select %p30, %s31, %s32
      %p36 = pneg %p30
      %p37 = scmp.eq.s32.totalorder %s21, 1
      %p38 = por %p36, %p37
      %p39 = scmp.ne.s32.totalorder %s31, %s34
      %p40 = scmp.eq.s32.totalorder %s21, 0
      %p41 = por %p39, %p40
      %p42 = scmp.ne.s32.totalorder %s31, %s34
      %p43 = scmp.eq.s32.totalorder %s26, 1
      %p44 = por %p42, %p43
      %p45 = scmp.ne.s32.totalorder %s34, %s35
      %p46 = scmp.eq.s32.totalorder %s26, 0
      %p47 = por %p45, %p46
      %p48 = scmp.ne.s32.totalorder %s34, %s35
      %p49 = scmp.eq.s32.totalorder %s27, 1
      %p50 = por %p48, %p49
      %p52 = scmp.ne.s32.totalorder %s35, %s51
      %p53 = scmp.eq.s32.totalorder %s27, 0
      %p54 = por %p52, %p53
      %s56 = sadd.s32 %s55, 1
      %p59 = scmp.eq.s32.totalorder %s21, 1
      %p60 = scmp.ne.s32.totalorder %s55, %s57
      %p61 = scmp.eq.s32.totalorder %s21, 0
      %p62 = por %p60, %p61
      %p63 = scmp.ne.s32.totalorder %s55, %s57
      %p64 = scmp.eq.s32.totalorder %s26, 1
      %p65 = por %p63, %p64
      %p66 = scmp.ne.s32.totalorder %s57, %s58
      %p67 = scmp.eq.s32.totalorder %s26, 0
      %p68 = por %p66, %p67
      %p69 = scmp.ne.s32.totalorder %s57, %s58
      %p70 = scmp.eq.s32.totalorder %s27, 1
      %p71 = por %p69, %p70
      %p73 = scmp.ne.s32.totalorder %s58, %s72
      %p74 = scmp.eq.s32.totalorder %s27, 0
      %p75 = por %p73, %p74
      %s77 = sadd.s32 %s76, 1
      %p80 = scmp.eq.s32.totalorder %s21, 1
      %p81 = scmp.ne.s32.totalorder %s76, %s78
      %p82 = scmp.eq.s32.totalorder %s21, 0
      %p83 = por %p81, %p82
      %p84 = scmp.ne.s32.totalorder %s76, %s78
      %p85 = scmp.eq.s32.totalorder %s26, 1
      %p86 = por %p84, %p85
      %p87 = scmp.ne.s32.totalorder %s78, %s79
      %p88 = scmp.eq.s32.totalorder %s26, 0
      %p89 = por %p87, %p88
      %p90 = scmp.ne.s32.totalorder %s78, %s79
      %p91 = scmp.eq.s32.totalorder %s27, 1
      %p92 = por %p90, %p91
      %p94 = scmp.ne.s32.totalorder %s79, %s93
      %p95 = scmp.eq.s32.totalorder %s27, 0
      %p96 = por %p94, %p95
      %s98 = sadd.s32 %s97, 1
      %p101 = scmp.eq.s32.totalorder %s21, 1
      %p102 = scmp.ne.s32.totalorder %s97, %s99
      %p103 = scmp.eq.s32.totalorder %s21, 0
      %p104 = por %p102, %p103
      %p105 = scmp.ne.s32.totalorder %s97, %s99
      %p106 = scmp.eq.s32.totalorder %s26, 1
      %p107 = por %p105, %p106
      %p108 = scmp.ne.s32.totalorder %s99, %s100
      %p109 = scmp.eq.s32.totalorder %s26, 0
      %p110 = por %p108, %p109
      %p111 = scmp.ne.s32.totalorder %s99, %s100
      %p112 = scmp.eq.s32.totalorder %s27, 1
      %p113 = por %p111, %p112
      %p115 = scmp.ne.s32.totalorder %s100, %s114
      %p116 = scmp.eq.s32.totalorder %s27, 0
      %p117 = por %p115, %p116
      %s119 = sadd.s32 %s118, 1
      %p122 = scmp.eq.s32.totalorder %s21, 1
      %p123 = scmp.ne.s32.totalorder %s118, %s120
      %p124 = scmp.eq.s32.totalorder %s21, 0
      %p125 = por %p123, %p124
      %p126 = scmp.ne.s32.totalorder %s118, %s120
      %p127 = scmp.eq.s32.totalorder %s26, 1
      %p128 = por %p126, %p127
      %p129 = scmp.ne.s32.totalorder %s120, %s121
      %p130 = scmp.eq.s32.totalorder %s26, 0
      %p131 = por %p129, %p130
      %p132 = scmp.ne.s32.totalorder %s120, %s121
      %p133 = scmp.eq.s32.totalorder %s27, 1
      %p134 = por %p132, %p133
      %p136 = scmp.ne.s32.totalorder %s121, %s135
      %p137 = scmp.eq.s32.totalorder %s27, 0
      %p138 = por %p136, %p137
      %s140 = sadd.s32 %s139, 1
      %p143 = scmp.eq.s32.totalorder %s21, 1
      %p144 = scmp.ne.s32.totalorder %s139, %s141
      %p145 = scmp.eq.s32.totalorder %s21, 0
      %p146 = por %p144, %p145
      %p147 = scmp.ne.s32.totalorder %s139, %s141
      %p148 = scmp.eq.s32.totalorder %s26, 1
      %p149 = por %p147, %p148
      %p150 = scmp.ne.s32.totalorder %s141, %s142
      %p151 = scmp.eq.s32.totalorder %s26, 0
      %p152 = por %p150, %p151
      %p153 = scmp.ne.s32.totalorder %s141, %s142
      %p154 = scmp.eq.s32.totalorder %s27, 1
      %p155 = por %p153, %p154
      %p157 = scmp.ne.s32.totalorder %s142, %s156
      %p158 = scmp.eq.s32.totalorder %s27, 0
      %p159 = por %p157, %p158
      %s160 = ssub.s32 %s21, %s28
      %p161 = scmp.eq.s32.totalorder %s160, 0
      %s163 = sadd.s32 %s162, 1
      %s164 = scalar_select %p161, %s162, %s163
      %p167 = pneg %p161
      %p168 = scmp.eq.s32.totalorder %s21, 1
      %p169 = por %p167, %p168
      %p170 = scmp.ne.s32.totalorder %s162, %s165
      %p171 = scmp.eq.s32.totalorder %s21, 0
      %p172 = por %p170, %p171
      %p173 = scmp.ne.s32.totalorder %s162, %s165
      %p174 = scmp.eq.s32.totalorder %s26, 1
      %p175 = por %p173, %p174
      %p176 = scmp.ne.s32.totalorder %s165, %s166
      %p177 = scmp.eq.s32.totalorder %s26, 0
      %p178 = por %p176, %p177
      %p179 = scmp.ne.s32.totalorder %s165, %s166
      %p180 = scmp.eq.s32.totalorder %s27, 1
      %p181 = por %p179, %p180
      %p183 = scmp.ne.s32.totalorder %s166, %s182
      %p184 = scmp.eq.s32.totalorder %s27, 0
      %p185 = por %p183, %p184
      %p186 = scmp.le.s32.totalorder 1, %s21
      %p187 = scmp.lt.s32.totalorder %s21, 3
      %p188 = pnand %p186, %p187
      %p189 = pneg %p188
      // Predicated region
      $region9: #{tpu_custom_call.1} parent=5 // pred_check
        _
      $region10: #{tpu_custom_call.1} parent=5 // pred_check_branch
        %191 = sbr.rel (%p188) target = $region12
      $region11: #{tpu_custom_call.1} parent=5 // pred_region
        %s192 = ssub.s32 %s21, 1
        // Predicated region
        $region13: #{tpu_custom_call.1} parent=11 // pred_check
          %p193 = pneg %p68
        $region14: #{tpu_custom_call.1} parent=11 // pred_check_branch
          %195 = sbr.rel (%p193) target = $region16
        $region15: #{tpu_custom_call.1} parent=11 // pred_region
          %s197 = ssub.s32 3072, 3072
          %198 = vsyncadd [#allocation6], %s197
          %s199 = sshll.u32 [#allocation5], 4
          %s200 = int_to_ptr.vmem [resolvable:$true] %s199
          %205 = dma.hbm_to_vmem [thread:$0]  %s1, 3072, %s200, [#allocation6], 192, 192, 12
        $region16: #{tpu_custom_call.1} parent=11 // pred_fallthru
          _
        // Predicated region
        $region17: #{tpu_custom_call.1} parent=11 // pred_check
          %p206 = pneg %p89
        $region18: #{tpu_custom_call.1} parent=11 // pred_check_branch
          %208 = sbr.rel (%p206) target = $region20
        $region19: #{tpu_custom_call.1} parent=11 // pred_region
          %s210 = ssub.s32 1024, 1024
          %211 = vsyncadd [#allocation6], %s210
          %s212 = sshll.u32 [#allocation7], 4
          %s213 = int_to_ptr.vmem [resolvable:$true] %s212
          %218 = dma.hbm_to_vmem [thread:$0]  %s2, 1024, %s213, [#allocation6], 64, 64, 4
        $region20: #{tpu_custom_call.1} parent=11 // pred_fallthru
          _
        // Predicated region
        $region21: #{tpu_custom_call.1} parent=11 // pred_check
          %p219 = pneg %p110
        $region22: #{tpu_custom_call.1} parent=11 // pred_check_branch
          %221 = sbr.rel (%p219) target = $region24
        $region23: #{tpu_custom_call.1} parent=11 // pred_region
          %s223 = ssub.s32 2048, 2048
          %224 = vsyncadd [#allocation9], %s223
          %s225 = sshll.u32 [#allocation8], 4
          %s226 = int_to_ptr.vmem [resolvable:$true] %s225
          %231 = dma.hbm_to_vmem [thread:$0]  %s3, 2048, %s226, [#allocation9], 128, 128, 8
        $region24: #{tpu_custom_call.1} parent=11 // pred_fallthru
          _
        // Predicated region
        $region25: #{tpu_custom_call.1} parent=11 // pred_check
          %p232 = pneg %p131
        $region26: #{tpu_custom_call.1} parent=11 // pred_check_branch
          %234 = sbr.rel (%p232) target = $region28
        $region27: #{tpu_custom_call.1} parent=11 // pred_region
          %s236 = ssub.s32 2048, 2048
          %237 = vsyncadd [#allocation9], %s236
          %s238 = sshll.u32 [#allocation10], 4
          %s239 = int_to_ptr.vmem [resolvable:$true] %s238
          %244 = dma.hbm_to_vmem [thread:$0]  %s4, 2048, %s239, [#allocation9], 64, 64, 4
        $region28: #{tpu_custom_call.1} parent=11 // pred_fallthru
          _
        // Predicated region
        $region29: #{tpu_custom_call.1} parent=11 // pred_check
          %p245 = pneg %p152
        $region30: #{tpu_custom_call.1} parent=11 // pred_check_branch
          %247 = sbr.rel (%p245) target = $region32
        $region31: #{tpu_custom_call.1} parent=11 // pred_region
          %s249 = ssub.s32 384, 384
          %250 = vsyncadd [#allocation12], %s249
          %s252 = sshll.u32 [#allocation11], 4
          %s253 = int_to_ptr.vmem [resolvable:$true] %s252
          %255 = dma.hbm_to_vmem [thread:$0]  %s5, 384, %s253, [#allocation12]
        $region32: #{tpu_custom_call.1} parent=11 // pred_fallthru
          _
      $region12: #{tpu_custom_call.1} parent=5 // pred_fallthru
        _
      %p256 = scmp.lt.s32.totalorder %s21, 2
      // Predicated region
      $region33: #{tpu_custom_call.1} parent=5 // pred_check
        %p257 = pneg %p256
      $region34: #{tpu_custom_call.1} parent=5 // pred_check_branch
        %259 = sbr.rel (%p257) target = $region36
      $region35: #{tpu_custom_call.1} parent=5 // pred_region
        // Predicated region
        $region37: #{tpu_custom_call.1} parent=35 // pred_check
          %p260 = pneg %p41
        $region38: #{tpu_custom_call.1} parent=35 // pred_check_branch
          %262 = sbr.rel (%p260) target = $region40
        $region39: #{tpu_custom_call.1} parent=35 // pred_region
          %s263 = sand.u32 %s31, 1
          %s264 = scalar_lea.sflag [#allocation3], %s263
          %s265 = sand.u32 %s31, 1
          %s266 = smul.addr %s265, 128
          %s267 = scalar_lea.vmem [#allocation2], %s266
          %s269 = ssub.s32 2048, 2048
          %270 = vsyncadd %s264, %s269
          %s271 = smul.addr %s21, 16
          %s272 = smul.addr %s271, 128
          %s273 = scalar_lea.hbm %s0, %s272
          %s274 = sshll.u32 %s267, 4
          %s275 = int_to_ptr.vmem [resolvable:$true] %s274
          %280 = dma.hbm_to_vmem [thread:$0]  %s273, 2048, %s275, %s264, 128, 128, 8
        $region40: #{tpu_custom_call.1} parent=35 // pred_fallthru
          _
      $region36: #{tpu_custom_call.1} parent=5 // pred_fallthru
        _
      %p281 = scmp.le.s32.totalorder 1, %s21
      %p282 = scmp.lt.s32.totalorder %s21, 3
      %p283 = pnand %p281, %p282
      %p284 = pneg %p283
      // Predicated region
      $region41: #{tpu_custom_call.1} parent=5 // pred_check
        _
      $region42: #{tpu_custom_call.1} parent=5 // pred_check_branch
        %286 = sbr.rel (%p283) target = $region44
      $region43: #{tpu_custom_call.1} parent=5 // pred_region
        %s287 = ssub.s32 %s21, 1
        %s288 = sand.u32 %s34, 1
        %s289 = scalar_lea.sflag [#allocation3], %s288
        %s290 = sand.u32 %s34, 1
        %s291 = smul.addr %s290, 128
        %s292 = scalar_lea.vmem [#allocation2], %s291
        // Predicated region
        $region45: #{tpu_custom_call.1} parent=43 // pred_check
          %p293 = pneg %p47
        $region46: #{tpu_custom_call.1} parent=43 // pred_check_branch
          %295 = sbr.rel (%p293) target = $region48
        $region47: #{tpu_custom_call.1} parent=43 // pred_region
          %296 = dma.done %s289, 2048
        $region48: #{tpu_custom_call.1} parent=43 // pred_fallthru
          _
        // Predicated region
        $region49: #{tpu_custom_call.1} parent=43 // pred_check
          %p297 = pneg %p68
        $region50: #{tpu_custom_call.1} parent=43 // pred_check_branch
          %299 = sbr.rel (%p297) target = $region52
        $region51: #{tpu_custom_call.1} parent=43 // pred_region
          %300 = dma.done [#allocation6], 3072
        $region52: #{tpu_custom_call.1} parent=43 // pred_fallthru
          _
        // Predicated region
        $region53: #{tpu_custom_call.1} parent=43 // pred_check
          %p301 = pneg %p89
        $region54: #{tpu_custom_call.1} parent=43 // pred_check_branch
          %303 = sbr.rel (%p301) target = $region56
        $region55: #{tpu_custom_call.1} parent=43 // pred_region
          %304 = dma.done [#allocation6], 1024
        $region56: #{tpu_custom_call.1} parent=43 // pred_fallthru
          _
        // Predicated region
        $region57: #{tpu_custom_call.1} parent=43 // pred_check
          %p305 = pneg %p110
        $region58: #{tpu_custom_call.1} parent=43 // pred_check_branch
          %307 = sbr.rel (%p305) target = $region60
        $region59: #{tpu_custom_call.1} parent=43 // pred_region
          %308 = dma.done [#allocation9], 2048
        $region60: #{tpu_custom_call.1} parent=43 // pred_fallthru
          _
        // Predicated region
        $region61: #{tpu_custom_call.1} parent=43 // pred_check
          %p309 = pneg %p131
        $region62: #{tpu_custom_call.1} parent=43 // pred_check_branch
          %311 = sbr.rel (%p309) target = $region64
        $region63: #{tpu_custom_call.1} parent=43 // pred_region
          %312 = dma.done [#allocation9], 2048
        $region64: #{tpu_custom_call.1} parent=43 // pred_fallthru
          _
        // Predicated region
        $region65: #{tpu_custom_call.1} parent=43 // pred_check
          %p313 = pneg %p152
        $region66: #{tpu_custom_call.1} parent=43 // pred_check_branch
          %315 = sbr.rel (%p313) target = $region68
        $region67: #{tpu_custom_call.1} parent=43 // pred_region
          %316 = dma.done [#allocation12], 384
        $region68: #{tpu_custom_call.1} parent=43 // pred_fallthru
          _
        %s317 = sand.u32 %s34, 1
        %s318 = scalar_lea.sflag [#allocation3], %s317
        %s319 = sand.u32 %s34, 1
        %s320 = smul.addr %s319, 128
        %s321 = scalar_lea.vmem [#allocation2], %s320
        %p322 = pneg %p47
        %p323 = pneg %p44
        %p324 = pneg %p68
        %p325 = pneg %p65
        %p326 = pneg %p89
        %p327 = pneg %p86
        %p328 = pneg %p110
        %p329 = pneg %p107
        %p330 = pneg %p131
        %p331 = pneg %p128
        %p332 = pneg %p152
        %p333 = pneg %p149
        %p334 = pneg %p178
        %p335 = pneg %p175
        %s336 = sand.u32 %s165, 1
        %s337 = scalar_lea.sflag [#allocation4], %s336
        %s338 = sand.u32 %s165, 1
        %s339 = smul.addr %s338, 128
        %s340 = scalar_lea.vmem [#allocation13], %s339
        %v342 = vld [vmem:[#allocation11] ss:$8 sm:$0x7]
        %s343 = scalar_lea.vmem [#allocation11], 1
        %v344 = vld [vmem:[%s343] ss:$8 sm:$0x3]
        %v345 = vld [vmem:[#allocation11 + $0x2] ss:$0 sm:$0xff]
        %v346 = vld [vmem:[#allocation11 + $0x3] ss:$0 sm:$0xff]
        %v347 = vld [vmem:[#allocation11 + $0x4] ss:$0 sm:$0xff]
        %v348 = vld [vmem:[#allocation11 + $0x5] ss:$0 sm:$0xff]
        %v349 = vld [vmem:[#allocation11 + $0x6] ss:$0 sm:$0xff]
        %v350 = vld [vmem:[#allocation11 + $0x7] ss:$0 sm:$0xff]
        %v351 = vld [vmem:[%s292] sm:$0xff]
        %v352 = vld [vmem:[%s292 + $0x8] sm:$0xff]
        %v353 = vld [vmem:[%s292 + $0x10] sm:$0xff]
        %v354 = vld [vmem:[%s292 + $0x18] sm:$0xff]
        %v355 = vld [vmem:[%s292 + $0x20] sm:$0xff]
        %v356 = vld [vmem:[%s292 + $0x28] sm:$0xff]
        %v357 = vld [vmem:[%s292 + $0x30] sm:$0xff]
        %v358 = vld [vmem:[%s292 + $0x38] sm:$0xff]
        %v359 = vld [vmem:[%s292 + $0x40] sm:$0xff]
        %v360 = vld [vmem:[%s292 + $0x48] sm:$0xff]
        %v361 = vld [vmem:[%s292 + $0x50] sm:$0xff]
        %v362 = vld [vmem:[%s292 + $0x58] sm:$0xff]
        %v363 = vld [vmem:[%s292 + $0x60] sm:$0xff]
        %v364 = vld [vmem:[%s292 + $0x68] sm:$0xff]
        %v365 = vld [vmem:[%s292 + $0x70] sm:$0xff]
        %v366 = vld [vmem:[%s292 + $0x78] sm:$0xff]
        %v367 = vpack.c.bf16 %v352, %v351
        %v368 = vpack.c.bf16 %v354, %v353
        %v369 = vpack.c.bf16 %v356, %v355
        %v370 = vpack.c.bf16 %v358, %v357
        %v371 = vpack.c.bf16 %v360, %v359
        %v372 = vpack.c.bf16 %v362, %v361
        %v373 = vpack.c.bf16 %v364, %v363
        %v374 = vpack.c.bf16 %v366, %v365
        %v375 = vld [vmem:[#allocation5] sm:$0xff]
        %v376 = vld [vmem:[#allocation5 + $0x8] sm:$0xf]
        %v377 = vld [vmem:[#allocation5 + $0xc] sm:$0xff]
        %v378 = vld [vmem:[#allocation5 + $0x14] sm:$0xf]
        %v379 = vld [vmem:[#allocation5 + $0x18] sm:$0xff]
        %v380 = vld [vmem:[#allocation5 + $0x20] sm:$0xf]
        %v381 = vld [vmem:[#allocation5 + $0x24] sm:$0xff]
        %v382 = vld [vmem:[#allocation5 + $0x2c] sm:$0xf]
        %v383 = vld [vmem:[#allocation5 + $0x30] sm:$0xff]
        %v384 = vld [vmem:[#allocation5 + $0x38] sm:$0xf]
        %v385 = vld [vmem:[#allocation5 + $0x3c] sm:$0xff]
        %v386 = vld [vmem:[#allocation5 + $0x44] sm:$0xf]
        %v387 = vld [vmem:[#allocation5 + $0x48] sm:$0xff]
        %v388 = vld [vmem:[#allocation5 + $0x50] sm:$0xf]
        %v389 = vld [vmem:[#allocation5 + $0x54] sm:$0xff]
        %v390 = vld [vmem:[#allocation5 + $0x5c] sm:$0xf]
        %v391 = vld [vmem:[#allocation5 + $0x60] sm:$0xff]
        %v392 = vld [vmem:[#allocation5 + $0x68] sm:$0xf]
        %v393 = vld [vmem:[#allocation5 + $0x6c] sm:$0xff]
        %v394 = vld [vmem:[#allocation5 + $0x74] sm:$0xf]
        %v395 = vld [vmem:[#allocation5 + $0x78] sm:$0xff]
        %v396 = vld [vmem:[#allocation5 + $0x80] sm:$0xf]
        %v397 = vld [vmem:[#allocation5 + $0x84] sm:$0xff]
        %v398 = vld [vmem:[#allocation5 + $0x8c] sm:$0xf]
        %v399 = vld [vmem:[#allocation5 + $0x90] sm:$0xff]
        %v400 = vld [vmem:[#allocation5 + $0x98] sm:$0xf]
        %v401 = vld [vmem:[#allocation5 + $0x9c] sm:$0xff]
        %v402 = vld [vmem:[#allocation5 + $0xa4] sm:$0xf]
        %v403 = vld [vmem:[#allocation5 + $0xa8] sm:$0xff]
        %v404 = vld [vmem:[#allocation5 + $0xb0] sm:$0xf]
        %v405 = vld [vmem:[#allocation5 + $0xb4] sm:$0xff]
        %v406 = vld [vmem:[#allocation5 + $0xbc] sm:$0xf]
        %v408 = vlaneseq
        %v409 = vshrl.u32 %v408, 7
        %v410 = vsub.s32 0, %v409
        %v411 = vrot.slane %v342, %v410
        %v412 = vlaneseq
        %v413 = vshrl.u32 %v412, 7
        %v414 = vsub.s32 1, %v413
        %v415 = vrot.slane %v342, %v414
        %v416 = vlaneseq
        %v417 = vshrl.u32 %v416, 7
        %v418 = vsub.s32 2, %v417
        %v419 = vrot.slane %v342, %v418
        %v455 = vunpack.c.l.b16 %v375
        %v456 = vunpack.c.h.b16 %v375
        %v457 = vunpack.c.l.b16 %v376
        %v458 = vunpack.c.l.b16 %v377
        %v459 = vunpack.c.h.b16 %v377
        %v460 = vunpack.c.l.b16 %v378
        %v461 = vunpack.c.l.b16 %v379
        %v462 = vunpack.c.h.b16 %v379
        %v463 = vunpack.c.l.b16 %v380
        %v464 = vunpack.c.l.b16 %v381
        %v465 = vunpack.c.h.b16 %v381
        %v466 = vunpack.c.l.b16 %v382
        %v467 = vunpack.c.l.b16 %v383
        %v468 = vunpack.c.h.b16 %v383
        %v469 = vunpack.c.l.b16 %v384
        %v470 = vunpack.c.l.b16 %v385
        %v471 = vunpack.c.h.b16 %v385
        %v472 = vunpack.c.l.b16 %v386
        %v473 = vunpack.c.l.b16 %v387
        %v474 = vunpack.c.h.b16 %v387
        %v475 = vunpack.c.l.b16 %v388
        %v476 = vunpack.c.l.b16 %v389
        %v477 = vunpack.c.h.b16 %v389
        %v478 = vunpack.c.l.b16 %v390
        %v479 = vunpack.c.l.b16 %v391
        %v480 = vunpack.c.h.b16 %v391
        %v481 = vunpack.c.l.b16 %v392
        %v482 = vunpack.c.l.b16 %v393
        %v483 = vunpack.c.h.b16 %v393
        %v484 = vunpack.c.l.b16 %v394
        %v485 = vunpack.c.l.b16 %v395
        %v486 = vunpack.c.h.b16 %v395
        %v487 = vunpack.c.l.b16 %v396
        %v488 = vunpack.c.l.b16 %v397
        %v489 = vunpack.c.h.b16 %v397
        %v490 = vunpack.c.l.b16 %v398
        %v491 = vunpack.c.l.b16 %v399
        %v492 = vunpack.c.h.b16 %v399
        %v493 = vunpack.c.l.b16 %v400
        %v494 = vunpack.c.l.b16 %v401
        %v495 = vunpack.c.h.b16 %v401
        %v496 = vunpack.c.l.b16 %v402
        %v497 = vunpack.c.l.b16 %v403
        %v498 = vunpack.c.h.b16 %v403
        %v499 = vunpack.c.l.b16 %v404
        %v500 = vunpack.c.l.b16 %v405
        %v501 = vunpack.c.h.b16 %v405
        %v502 = vunpack.c.l.b16 %v406
        %v503 = vpack.c.b16 %v458, %v455
        %v504 = vpack.c.b16 %v459, %v456
        %v505 = vpack.c.b16 %v460, %v457
        %v506 = vpack.c.b16 %v464, %v461
        %v507 = vpack.c.b16 %v465, %v462
        %v508 = vpack.c.b16 %v466, %v463
        %v509 = vpack.c.b16 %v470, %v467
        %v510 = vpack.c.b16 %v471, %v468
        %v511 = vpack.c.b16 %v472, %v469
        %v512 = vpack.c.b16 %v476, %v473
        %v513 = vpack.c.b16 %v477, %v474
        %v514 = vpack.c.b16 %v478, %v475
        %v515 = vpack.c.b16 %v482, %v479
        %v516 = vpack.c.b16 %v483, %v480
        %v517 = vpack.c.b16 %v484, %v481
        %v518 = vpack.c.b16 %v488, %v485
        %v519 = vpack.c.b16 %v489, %v486
        %v520 = vpack.c.b16 %v490, %v487
        %v521 = vpack.c.b16 %v494, %v491
        %v522 = vpack.c.b16 %v495, %v492
        %v523 = vpack.c.b16 %v496, %v493
        %v524 = vpack.c.b16 %v500, %v497
        %v525 = vpack.c.b16 %v501, %v498
        %v526 = vpack.c.b16 %v502, %v499
        %551 = vmatprep.subr.bf16.mxu0 %v504
        %552 = vmatpush1.bf16.msra.mxu0 %v503
        %553 = vmatprep.subr.bf16.mxu0 %v507
        %554 = vmatpush1.bf16.msra.mxu0 %v506
        %555 = vmatprep.subr.bf16.mxu0 %v510
        %556 = vmatpush1.bf16.msra.mxu0 %v509
        %557 = vmatprep.subr.bf16.mxu0 %v513
        %558 = vmatpush1.bf16.msra.mxu0 %v512
        %559 = vmatprep.subr.bf16.mxu0 %v516
        %560 = vmatpush1.bf16.msra.mxu0 %v515
        %561 = vmatprep.subr.bf16.mxu0 %v519
        %562 = vmatpush1.bf16.msra.mxu0 %v518
        %563 = vmatprep.subr.bf16.mxu0 %v522
        %564 = vmatpush1.bf16.msra.mxu0 %v521
        %565 = vmatprep.subr.bf16.mxu0 %v525
        %566 = vmatpush1.bf16.msra.mxu0 %v524
        %567 = vmatprep.subr.bf16.mxu0 0
        %568 = vmatpush1.bf16.msra.mxu0 0
        %569 = vmatprep.subr.bf16.mxu0 0
        %570 = vmatpush1.bf16.msra.mxu0 0
        %571 = vmatprep.subr.bf16.mxu0 0
        %572 = vmatpush1.bf16.msra.mxu0 0
        %573 = vmatprep.subr.bf16.mxu0 0
        %574 = vmatpush1.bf16.msra.mxu0 0
        %575 = vmatprep.subr.bf16.mxu0 0
        %576 = vmatpush1.bf16.msra.mxu0 0
        %577 = vmatprep.subr.bf16.mxu0 0
        %578 = vmatpush1.bf16.msra.mxu0 0
        %579 = vmatprep.subr.bf16.mxu0 0
        %580 = vmatpush1.bf16.msra.mxu0 0
        %581 = vmatprep.subr.bf16.mxu0 0
        %582 = vmatpush1.bf16.msra.mxu0 0
        %583 = vmatprep.mubr.bf16.mxu0 0
        %584 = vmatmul.mubr.bf16.gmra.mrb[0].mxu0 %v367
        %v585 = vpop.f32.mrb[0].mxu0
        %v586 = vadd.f32 %v411, %v585
        %v587 = vpop.f32.mrb[0].mxu0
        %v588 = vadd.f32 %v415, %v587
        %v589 = vpop.f32.mrb[0].mxu0
        %v590 = vadd.f32 %v411, %v589
        %v591 = vpop.f32.mrb[0].mxu0
        %v592 = vadd.f32 %v415, %v591
        %593 = vmatprep.mubr.bf16.mxu0 0
        %594 = vmatmul.mubr.bf16.gmra.mrb[0].mxu0 %v368
        %v595 = vpop.f32.mrb[0].mxu0
        %v596 = vadd.f32 %v411, %v595
        %v597 = vpop.f32.mrb[0].mxu0
        %v598 = vadd.f32 %v415, %v597
        %v599 = vpop.f32.mrb[0].mxu0
        %v600 = vadd.f32 %v411, %v599
        %v601 = vpop.f32.mrb[0].mxu0
        %v602 = vadd.f32 %v415, %v601
        %603 = vmatprep.mubr.bf16.mxu0 0
        %604 = vmatmul.mubr.bf16.gmra.mrb[0].mxu0 %v369
        %v605 = vpop.f32.mrb[0].mxu0
        %v606 = vadd.f32 %v411, %v605
        %v607 = vpop.f32.mrb[0].mxu0
        %v608 = vadd.f32 %v415, %v607
        %v609 = vpop.f32.mrb[0].mxu0
        %v610 = vadd.f32 %v411, %v609
        %v611 = vpop.f32.mrb[0].mxu0
        %v612 = vadd.f32 %v415, %v611
        %613 = vmatprep.mubr.bf16.mxu0 0
        %614 = vmatmul.mubr.bf16.gmra.mrb[0].mxu0 %v370
        %v615 = vpop.f32.mrb[0].mxu0
        %v616 = vadd.f32 %v411, %v615
        %v617 = vpop.f32.mrb[0].mxu0
        %v618 = vadd.f32 %v415, %v617
        %v619 = vpop.f32.mrb[0].mxu0
        %v620 = vadd.f32 %v411, %v619
        %v621 = vpop.f32.mrb[0].mxu0
        %v622 = vadd.f32 %v415, %v621
        %623 = vmatprep.mubr.bf16.mxu0 0
        %624 = vmatmul.mubr.bf16.gmra.mrb[0].mxu0 %v371
        %v625 = vpop.f32.mrb[0].mxu0
        %v626 = vadd.f32 %v411, %v625
        %v627 = vpop.f32.mrb[0].mxu0
        %v628 = vadd.f32 %v415, %v627
        %v629 = vpop.f32.mrb[0].mxu0
        %v630 = vadd.f32 %v411, %v629
        %v631 = vpop.f32.mrb[0].mxu0
        %v632 = vadd.f32 %v415, %v631
        %633 = vmatprep.mubr.bf16.mxu0 0
        %634 = vmatmul.mubr.bf16.gmra.mrb[0].mxu0 %v372
        %v635 = vpop.f32.mrb[0].mxu0
        %v636 = vadd.f32 %v411, %v635
        %v637 = vpop.f32.mrb[0].mxu0
        %v638 = vadd.f32 %v415, %v637
        %v639 = vpop.f32.mrb[0].mxu0
        %v640 = vadd.f32 %v411, %v639
        %v641 = vpop.f32.mrb[0].mxu0
        %v642 = vadd.f32 %v415, %v641
        %643 = vmatprep.mubr.bf16.mxu0 0
        %644 = vmatmul.mubr.bf16.gmra.mrb[0].mxu0 %v373
        %v645 = vpop.f32.mrb[0].mxu0
        %v646 = vadd.f32 %v411, %v645
        %v647 = vpop.f32.mrb[0].mxu0
        %v648 = vadd.f32 %v415, %v647
        %v649 = vpop.f32.mrb[0].mxu0
        %v650 = vadd.f32 %v411, %v649
        %v651 = vpop.f32.mrb[0].mxu0
        %v652 = vadd.f32 %v415, %v651
        %653 = vmatprep.mubr.bf16.mxu0 0
        %654 = vmatmul.mubr.bf16.gmra.mrb[0].mxu0 %v374
        %v655 = vpop.f32.mrb[0].mxu0
        %v656 = vadd.f32 %v411, %v655
        %v657 = vpop.f32.mrb[0].mxu0
        %v658 = vadd.f32 %v415, %v657
        %v659 = vpop.f32.mrb[0].mxu0
        %v660 = vadd.f32 %v411, %v659
        %v661 = vpop.f32.mrb[0].mxu0
        %v662 = vadd.f32 %v415, %v661
        %663 = vdwg.mxu0
        %664 = vmatprep.subr.bf16.mxu0 0
        %665 = vmatpush1.bf16.msra.mxu0 %v505
        %666 = vmatprep.subr.bf16.mxu0 0
        %667 = vmatpush1.bf16.msra.mxu0 %v508
        %668 = vmatprep.subr.bf16.mxu0 0
        %669 = vmatpush1.bf16.msra.mxu0 %v511
        %670 = vmatprep.subr.bf16.mxu0 0
        %671 = vmatpush1.bf16.msra.mxu0 %v514
        %672 = vmatprep.subr.bf16.mxu0 0
        %673 = vmatpush1.bf16.msra.mxu0 %v517
        %674 = vmatprep.subr.bf16.mxu0 0
        %675 = vmatpush1.bf16.msra.mxu0 %v520
        %676 = vmatprep.subr.bf16.mxu0 0
        %677 = vmatpush1.bf16.msra.mxu0 %v523
        %678 = vmatprep.subr.bf16.mxu0 0
        %679 = vmatpush1.bf16.msra.mxu0 %v526
        %680 = vmatprep.subr.bf16.mxu0 0
        %681 = vmatpush1.bf16.msra.mxu0 0
        %682 = vmatprep.subr.bf16.mxu0 0
        %683 = vmatpush1.bf16.msra.mxu0 0
        %684 = vmatprep.subr.bf16.mxu0 0
        %685 = vmatpush1.bf16.msra.mxu0 0
        %686 = vmatprep.subr.bf16.mxu0 0
        %687 = vmatpush1.bf16.msra.mxu0 0
        %688 = vmatprep.subr.bf16.mxu0 0
        %689 = vmatpush1.bf16.msra.mxu0 0
        %690 = vmatprep.subr.bf16.mxu0 0
        %691 = vmatpush1.bf16.msra.mxu0 0
        %692 = vmatprep.subr.bf16.mxu0 0
        %693 = vmatpush1.bf16.msra.mxu0 0
        %694 = vmatprep.subr.bf16.mxu0 0
        %695 = vmatpush1.bf16.msra.mxu0 0
        %696 = vmatprep.mubr.bf16.mxu0 0
        %697 = vmatmul.mubr.bf16.gmra.mrb[0].mxu0 %v367
        %v698 = vpop.f32.mrb[0].mxu0
        %v699 = vadd.f32 %v419, %v698
        %v700 = vpop.f32.mrb[0].mxu0
        %v701 = vpop.f32.mrb[0].mxu0
        %v702 = vadd.f32 %v419, %v701
        %v703 = vpop.f32.mrb[0].mxu0
        %704 = vmatprep.mubr.bf16.mxu0 0
        %705 = vmatmul.mubr.bf16.gmra.mrb[0].mxu0 %v368
        %v706 = vpop.f32.mrb[0].mxu0
        %v707 = vadd.f32 %v419, %v706
        %v708 = vpop.f32.mrb[0].mxu0
        %v709 = vpop.f32.mrb[0].mxu0
        %v710 = vadd.f32 %v419, %v709
        %v711 = vpop.f32.mrb[0].mxu0
        %712 = vmatprep.mubr.bf16.mxu0 0
        %713 = vmatmul.mubr.bf16.gmra.mrb[0].mxu0 %v369
        %v714 = vpop.f32.mrb[0].mxu0
        %v715 = vadd.f32 %v419, %v714
        %v716 = vpop.f32.mrb[0].mxu0
        %v717 = vpop.f32.mrb[0].mxu0
        %v718 = vadd.f32 %v419, %v717
        %v719 = vpop.f32.mrb[0].mxu0
        %720 = vmatprep.mubr.bf16.mxu0 0
        %721 = vmatmul.mubr.bf16.gmra.mrb[0].mxu0 %v370
        %v722 = vpop.f32.mrb[0].mxu0
        %v723 = vadd.f32 %v419, %v722
        %v724 = vpop.f32.mrb[0].mxu0
        %v725 = vpop.f32.mrb[0].mxu0
        %v726 = vadd.f32 %v419, %v725
        %v727 = vpop.f32.mrb[0].mxu0
        %728 = vmatprep.mubr.bf16.mxu0 0
        %729 = vmatmul.mubr.bf16.gmra.mrb[0].mxu0 %v371
        %v730 = vpop.f32.mrb[0].mxu0
        %v731 = vadd.f32 %v419, %v730
        %v732 = vpop.f32.mrb[0].mxu0
        %v733 = vpop.f32.mrb[0].mxu0
        %v734 = vadd.f32 %v419, %v733
        %v735 = vpop.f32.mrb[0].mxu0
        %736 = vmatprep.mubr.bf16.mxu0 0
        %737 = vmatmul.mubr.bf16.gmra.mrb[0].mxu0 %v372
        %v738 = vpop.f32.mrb[0].mxu0
        %v739 = vadd.f32 %v419, %v738
        %v740 = vpop.f32.mrb[0].mxu0
        %v741 = vpop.f32.mrb[0].mxu0
        %v742 = vadd.f32 %v419, %v741
        %v743 = vpop.f32.mrb[0].mxu0
        %744 = vmatprep.mubr.bf16.mxu0 0
        %745 = vmatmul.mubr.bf16.gmra.mrb[0].mxu0 %v373
        %v746 = vpop.f32.mrb[0].mxu0
        %v747 = vadd.f32 %v419, %v746
        %v748 = vpop.f32.mrb[0].mxu0
        %v749 = vpop.f32.mrb[0].mxu0
        %v750 = vadd.f32 %v419, %v749
        %v751 = vpop.f32.mrb[0].mxu0
        %752 = vmatprep.mubr.bf16.mxu0 0
        %753 = vmatmul.mubr.bf16.gmra.mrb[0].mxu0 %v374
        %v754 = vpop.f32.mrb[0].mxu0
        %v755 = vadd.f32 %v419, %v754
        %v756 = vpop.f32.mrb[0].mxu0
        %v757 = vpop.f32.mrb[0].mxu0
        %v758 = vadd.f32 %v419, %v757
        %v759 = vpop.f32.mrb[0].mxu0
        %760 = vdwg.mxu0
        %777 = vrot.lane.b32.xlu0 %v586, 96
        %v778 = vpop.permute.xlu0 %777
        %779 = vrot.lane.b32.xlu0 %v590, 96
        %v780 = vpop.permute.xlu0 %779
        %781 = vrot.lane.b32.xlu0 %v596, 96
        %v782 = vpop.permute.xlu0 %781
        %783 = vrot.lane.b32.xlu0 %v600, 96
        %v784 = vpop.permute.xlu0 %783
        %785 = vrot.lane.b32.xlu0 %v606, 96
        %v786 = vpop.permute.xlu0 %785
        %787 = vrot.lane.b32.xlu0 %v610, 96
        %v788 = vpop.permute.xlu0 %787
        %789 = vrot.lane.b32.xlu0 %v616, 96
        %v790 = vpop.permute.xlu0 %789
        %791 = vrot.lane.b32.xlu0 %v620, 96
        %v792 = vpop.permute.xlu0 %791
        %793 = vrot.lane.b32.xlu0 %v626, 96
        %v794 = vpop.permute.xlu0 %793
        %795 = vrot.lane.b32.xlu0 %v630, 96
        %v796 = vpop.permute.xlu0 %795
        %797 = vrot.lane.b32.xlu0 %v636, 96
        %v798 = vpop.permute.xlu0 %797
        %799 = vrot.lane.b32.xlu0 %v640, 96
        %v800 = vpop.permute.xlu0 %799
        %801 = vrot.lane.b32.xlu0 %v646, 96
        %v802 = vpop.permute.xlu0 %801
        %803 = vrot.lane.b32.xlu0 %v650, 96
        %v804 = vpop.permute.xlu0 %803
        %805 = vrot.lane.b32.xlu0 %v656, 96
        %v806 = vpop.permute.xlu0 %805
        %807 = vrot.lane.b32.xlu0 %v660, 96
        %v808 = vpop.permute.xlu0 %807
        %825 = vrot.lane.b32.xlu0 %v586, 64
        %v826 = vpop.permute.xlu0 %825
        %827 = vrot.lane.b32.xlu0 %v590, 64
        %v828 = vpop.permute.xlu0 %827
        %829 = vrot.lane.b32.xlu0 %v596, 64
        %v830 = vpop.permute.xlu0 %829
        %831 = vrot.lane.b32.xlu0 %v600, 64
        %v832 = vpop.permute.xlu0 %831
        %833 = vrot.lane.b32.xlu0 %v606, 64
        %v834 = vpop.permute.xlu0 %833
        %835 = vrot.lane.b32.xlu0 %v610, 64
        %v836 = vpop.permute.xlu0 %835
        %837 = vrot.lane.b32.xlu0 %v616, 64
        %v838 = vpop.permute.xlu0 %837
        %839 = vrot.lane.b32.xlu0 %v620, 64
        %v840 = vpop.permute.xlu0 %839
        %841 = vrot.lane.b32.xlu0 %v626, 64
        %v842 = vpop.permute.xlu0 %841
        %843 = vrot.lane.b32.xlu0 %v630, 64
        %v844 = vpop.permute.xlu0 %843
        %845 = vrot.lane.b32.xlu0 %v636, 64
        %v846 = vpop.permute.xlu0 %845
        %847 = vrot.lane.b32.xlu0 %v640, 64
        %v848 = vpop.permute.xlu0 %847
        %849 = vrot.lane.b32.xlu0 %v646, 64
        %v850 = vpop.permute.xlu0 %849
        %851 = vrot.lane.b32.xlu0 %v650, 64
        %v852 = vpop.permute.xlu0 %851
        %853 = vrot.lane.b32.xlu0 %v656, 64
        %v854 = vpop.permute.xlu0 %853
        %855 = vrot.lane.b32.xlu0 %v660, 64
        %v856 = vpop.permute.xlu0 %855
        %873 = vrot.lane.b32.xlu0 %v586, 32
        %v874 = vpop.permute.xlu0 %873
        %875 = vrot.lane.b32.xlu0 %v590, 32
        %v876 = vpop.permute.xlu0 %875
        %877 = vrot.lane.b32.xlu0 %v596, 32
        %v878 = vpop.permute.xlu0 %877
        %879 = vrot.lane.b32.xlu0 %v600, 32
        %v880 = vpop.permute.xlu0 %879
        %881 = vrot.lane.b32.xlu0 %v606, 32
        %v882 = vpop.permute.xlu0 %881
        %883 = vrot.lane.b32.xlu0 %v610, 32
        %v884 = vpop.permute.xlu0 %883
        %885 = vrot.lane.b32.xlu0 %v616, 32
        %v886 = vpop.permute.xlu0 %885
        %887 = vrot.lane.b32.xlu0 %v620, 32
        %v888 = vpop.permute.xlu0 %887
        %889 = vrot.lane.b32.xlu0 %v626, 32
        %v890 = vpop.permute.xlu0 %889
        %891 = vrot.lane.b32.xlu0 %v630, 32
        %v892 = vpop.permute.xlu0 %891
        %893 = vrot.lane.b32.xlu0 %v636, 32
        %v894 = vpop.permute.xlu0 %893
        %895 = vrot.lane.b32.xlu0 %v640, 32
        %v896 = vpop.permute.xlu0 %895
        %897 = vrot.lane.b32.xlu0 %v646, 32
        %v898 = vpop.permute.xlu0 %897
        %899 = vrot.lane.b32.xlu0 %v650, 32
        %v900 = vpop.permute.xlu0 %899
        %901 = vrot.lane.b32.xlu0 %v656, 32
        %v902 = vpop.permute.xlu0 %901
        %903 = vrot.lane.b32.xlu0 %v660, 32
        %v904 = vpop.permute.xlu0 %903
        %v921 = vpack.c.bf16 %v590, %v586
        %v922 = vpack.c.bf16 %v600, %v596
        %v923 = vpack.c.bf16 %v610, %v606
        %v924 = vpack.c.bf16 %v620, %v616
        %v925 = vpack.c.bf16 %v630, %v626
        %v926 = vpack.c.bf16 %v640, %v636
        %v927 = vpack.c.bf16 %v650, %v646
        %v928 = vpack.c.bf16 %v660, %v656
        %v929 = vpack.c.bf16 %v780, %v778
        %v930 = vpack.c.bf16 %v784, %v782
        %v931 = vpack.c.bf16 %v788, %v786
        %v932 = vpack.c.bf16 %v792, %v790
        %v933 = vpack.c.bf16 %v796, %v794
        %v934 = vpack.c.bf16 %v800, %v798
        %v935 = vpack.c.bf16 %v804, %v802
        %v936 = vpack.c.bf16 %v808, %v806
        %v937 = vpack.c.bf16 %v828, %v826
        %v938 = vpack.c.bf16 %v832, %v830
        %v939 = vpack.c.bf16 %v836, %v834
        %v940 = vpack.c.bf16 %v840, %v838
        %v941 = vpack.c.bf16 %v844, %v842
        %v942 = vpack.c.bf16 %v848, %v846
        %v943 = vpack.c.bf16 %v852, %v850
        %v944 = vpack.c.bf16 %v856, %v854
        %v945 = vpack.c.bf16 %v876, %v874
        %v946 = vpack.c.bf16 %v880, %v878
        %v947 = vpack.c.bf16 %v884, %v882
        %v948 = vpack.c.bf16 %v888, %v886
        %v949 = vpack.c.bf16 %v892, %v890
        %v950 = vpack.c.bf16 %v896, %v894
        %v951 = vpack.c.bf16 %v900, %v898
        %v952 = vpack.c.bf16 %v904, %v902
        %969 = vrot.lane.b32.xlu0 %v588, 96
        %v970 = vpop.permute.xlu0 %969
        %971 = vrot.lane.b32.xlu0 %v592, 96
        %v972 = vpop.permute.xlu0 %971
        %973 = vrot.lane.b32.xlu0 %v598, 96
        %v974 = vpop.permute.xlu0 %973
        %975 = vrot.lane.b32.xlu0 %v602, 96
        %v976 = vpop.permute.xlu0 %975
        %977 = vrot.lane.b32.xlu0 %v608, 96
        %v978 = vpop.permute.xlu0 %977
        %979 = vrot.lane.b32.xlu0 %v612, 96
        %v980 = vpop.permute.xlu0 %979
        %981 = vrot.lane.b32.xlu0 %v618, 96
        %v982 = vpop.permute.xlu0 %981
        %983 = vrot.lane.b32.xlu0 %v622, 96
        %v984 = vpop.permute.xlu0 %983
        %985 = vrot.lane.b32.xlu0 %v628, 96
        %v986 = vpop.permute.xlu0 %985
        %987 = vrot.lane.b32.xlu0 %v632, 96
        %v988 = vpop.permute.xlu0 %987
        %989 = vrot.lane.b32.xlu0 %v638, 96
        %v990 = vpop.permute.xlu0 %989
        %991 = vrot.lane.b32.xlu0 %v642, 96
        %v992 = vpop.permute.xlu0 %991
        %993 = vrot.lane.b32.xlu0 %v648, 96
        %v994 = vpop.permute.xlu0 %993
        %995 = vrot.lane.b32.xlu0 %v652, 96
        %v996 = vpop.permute.xlu0 %995
        %997 = vrot.lane.b32.xlu0 %v658, 96
        %v998 = vpop.permute.xlu0 %997
        %999 = vrot.lane.b32.xlu0 %v662, 96
        %v1000 = vpop.permute.xlu0 %999
        %1017 = vrot.lane.b32.xlu0 %v588, 64
        %v1018 = vpop.permute.xlu0 %1017
        %1019 = vrot.lane.b32.xlu0 %v592, 64
        %v1020 = vpop.permute.xlu0 %1019
        %1021 = vrot.lane.b32.xlu0 %v598, 64
        %v1022 = vpop.permute.xlu0 %1021
        %1023 = vrot.lane.b32.xlu0 %v602, 64
        %v1024 = vpop.permute.xlu0 %1023
        %1025 = vrot.lane.b32.xlu0 %v608, 64
        %v1026 = vpop.permute.xlu0 %1025
        %1027 = vrot.lane.b32.xlu0 %v612, 64
        %v1028 = vpop.permute.xlu0 %1027
        %1029 = vrot.lane.b32.xlu0 %v618, 64
        %v1030 = vpop.permute.xlu0 %1029
        %1031 = vrot.lane.b32.xlu0 %v622, 64
        %v1032 = vpop.permute.xlu0 %1031
        %1033 = vrot.lane.b32.xlu0 %v628, 64
        %v1034 = vpop.permute.xlu0 %1033
        %1035 = vrot.lane.b32.xlu0 %v632, 64
        %v1036 = vpop.permute.xlu0 %1035
        %1037 = vrot.lane.b32.xlu0 %v638, 64
        %v1038 = vpop.permute.xlu0 %1037
        %1039 = vrot.lane.b32.xlu0 %v642, 64
        %v1040 = vpop.permute.xlu0 %1039
        %1041 = vrot.lane.b32.xlu0 %v648, 64
        %v1042 = vpop.permute.xlu0 %1041
        %1043 = vrot.lane.b32.xlu0 %v652, 64
        %v1044 = vpop.permute.xlu0 %1043
        %1045 = vrot.lane.b32.xlu0 %v658, 64
        %v1046 = vpop.permute.xlu0 %1045
        %1047 = vrot.lane.b32.xlu0 %v662, 64
        %v1048 = vpop.permute.xlu0 %1047
        %1065 = vrot.lane.b32.xlu0 %v588, 32
        %v1066 = vpop.permute.xlu0 %1065
        %1067 = vrot.lane.b32.xlu0 %v592, 32
        %v1068 = vpop.permute.xlu0 %1067
        %1069 = vrot.lane.b32.xlu0 %v598, 32
        %v1070 = vpop.permute.xlu0 %1069
        %1071 = vrot.lane.b32.xlu0 %v602, 32
        %v1072 = vpop.permute.xlu0 %1071
        %1073 = vrot.lane.b32.xlu0 %v608, 32
        %v1074 = vpop.permute.xlu0 %1073
        %1075 = vrot.lane.b32.xlu0 %v612, 32
        %v1076 = vpop.permute.xlu0 %1075
        %1077 = vrot.lane.b32.xlu0 %v618, 32
        %v1078 = vpop.permute.xlu0 %1077
        %1079 = vrot.lane.b32.xlu0 %v622, 32
        %v1080 = vpop.permute.xlu0 %1079
        %1081 = vrot.lane.b32.xlu0 %v628, 32
        %v1082 = vpop.permute.xlu0 %1081
        %1083 = vrot.lane.b32.xlu0 %v632, 32
        %v1084 = vpop.permute.xlu0 %1083
        %1085 = vrot.lane.b32.xlu0 %v638, 32
        %v1086 = vpop.permute.xlu0 %1085
        %1087 = vrot.lane.b32.xlu0 %v642, 32
        %v1088 = vpop.permute.xlu0 %1087
        %1089 = vrot.lane.b32.xlu0 %v648, 32
        %v1090 = vpop.permute.xlu0 %1089
        %1091 = vrot.lane.b32.xlu0 %v652, 32
        %v1092 = vpop.permute.xlu0 %1091
        %1093 = vrot.lane.b32.xlu0 %v658, 32
        %v1094 = vpop.permute.xlu0 %1093
        %1095 = vrot.lane.b32.xlu0 %v662, 32
        %v1096 = vpop.permute.xlu0 %1095
        %v1113 = vpack.c.bf16 %v592, %v588
        %v1114 = vpack.c.bf16 %v602, %v598
        %v1115 = vpack.c.bf16 %v612, %v608
        %v1116 = vpack.c.bf16 %v622, %v618
        %v1117 = vpack.c.bf16 %v632, %v628
        %v1118 = vpack.c.bf16 %v642, %v638
        %v1119 = vpack.c.bf16 %v652, %v648
        %v1120 = vpack.c.bf16 %v662, %v658
        %v1121 = vpack.c.bf16 %v972, %v970
        %v1122 = vpack.c.bf16 %v976, %v974
        %v1123 = vpack.c.bf16 %v980, %v978
        %v1124 = vpack.c.bf16 %v984, %v982
        %v1125 = vpack.c.bf16 %v988, %v986
        %v1126 = vpack.c.bf16 %v992, %v990
        %v1127 = vpack.c.bf16 %v996, %v994
        %v1128 = vpack.c.bf16 %v1000, %v998
        %v1129 = vpack.c.bf16 %v1020, %v1018
        %v1130 = vpack.c.bf16 %v1024, %v1022
        %v1131 = vpack.c.bf16 %v1028, %v1026
        %v1132 = vpack.c.bf16 %v1032, %v1030
        %v1133 = vpack.c.bf16 %v1036, %v1034
        %v1134 = vpack.c.bf16 %v1040, %v1038
        %v1135 = vpack.c.bf16 %v1044, %v1042
        %v1136 = vpack.c.bf16 %v1048, %v1046
        %v1137 = vpack.c.bf16 %v1068, %v1066
        %v1138 = vpack.c.bf16 %v1072, %v1070
        %v1139 = vpack.c.bf16 %v1076, %v1074
        %v1140 = vpack.c.bf16 %v1080, %v1078
        %v1141 = vpack.c.bf16 %v1084, %v1082
        %v1142 = vpack.c.bf16 %v1088, %v1086
        %v1143 = vpack.c.bf16 %v1092, %v1090
        %v1144 = vpack.c.bf16 %v1096, %v1094
        %1161 = vrot.lane.b32.xlu0 %v699, 96
        %v1162 = vpop.permute.xlu0 %1161
        %1163 = vrot.lane.b32.xlu0 %v702, 96
        %v1164 = vpop.permute.xlu0 %1163
        %1165 = vrot.lane.b32.xlu0 %v707, 96
        %v1166 = vpop.permute.xlu0 %1165
        %1167 = vrot.lane.b32.xlu0 %v710, 96
        %v1168 = vpop.permute.xlu0 %1167
        %1169 = vrot.lane.b32.xlu0 %v715, 96
        %v1170 = vpop.permute.xlu0 %1169
        %1171 = vrot.lane.b32.xlu0 %v718, 96
        %v1172 = vpop.permute.xlu0 %1171
        %1173 = vrot.lane.b32.xlu0 %v723, 96
        %v1174 = vpop.permute.xlu0 %1173
        %1175 = vrot.lane.b32.xlu0 %v726, 96
        %v1176 = vpop.permute.xlu0 %1175
        %1177 = vrot.lane.b32.xlu0 %v731, 96
        %v1178 = vpop.permute.xlu0 %1177
        %1179 = vrot.lane.b32.xlu0 %v734, 96
        %v1180 = vpop.permute.xlu0 %1179
        %1181 = vrot.lane.b32.xlu0 %v739, 96
        %v1182 = vpop.permute.xlu0 %1181
        %1183 = vrot.lane.b32.xlu0 %v742, 96
        %v1184 = vpop.permute.xlu0 %1183
        %1185 = vrot.lane.b32.xlu0 %v747, 96
        %v1186 = vpop.permute.xlu0 %1185
        %1187 = vrot.lane.b32.xlu0 %v750, 96
        %v1188 = vpop.permute.xlu0 %1187
        %1189 = vrot.lane.b32.xlu0 %v755, 96
        %v1190 = vpop.permute.xlu0 %1189
        %1191 = vrot.lane.b32.xlu0 %v758, 96
        %v1192 = vpop.permute.xlu0 %1191
        %1209 = vrot.lane.b32.xlu0 %v699, 64
        %v1210 = vpop.permute.xlu0 %1209
        %1211 = vrot.lane.b32.xlu0 %v702, 64
        %v1212 = vpop.permute.xlu0 %1211
        %1213 = vrot.lane.b32.xlu0 %v707, 64
        %v1214 = vpop.permute.xlu0 %1213
        %1215 = vrot.lane.b32.xlu0 %v710, 64
        %v1216 = vpop.permute.xlu0 %1215
        %1217 = vrot.lane.b32.xlu0 %v715, 64
        %v1218 = vpop.permute.xlu0 %1217
        %1219 = vrot.lane.b32.xlu0 %v718, 64
        %v1220 = vpop.permute.xlu0 %1219
        %1221 = vrot.lane.b32.xlu0 %v723, 64
        %v1222 = vpop.permute.xlu0 %1221
        %1223 = vrot.lane.b32.xlu0 %v726, 64
        %v1224 = vpop.permute.xlu0 %1223
        %1225 = vrot.lane.b32.xlu0 %v731, 64
        %v1226 = vpop.permute.xlu0 %1225
        %1227 = vrot.lane.b32.xlu0 %v734, 64
        %v1228 = vpop.permute.xlu0 %1227
        %1229 = vrot.lane.b32.xlu0 %v739, 64
        %v1230 = vpop.permute.xlu0 %1229
        %1231 = vrot.lane.b32.xlu0 %v742, 64
        %v1232 = vpop.permute.xlu0 %1231
        %1233 = vrot.lane.b32.xlu0 %v747, 64
        %v1234 = vpop.permute.xlu0 %1233
        %1235 = vrot.lane.b32.xlu0 %v750, 64
        %v1236 = vpop.permute.xlu0 %1235
        %1237 = vrot.lane.b32.xlu0 %v755, 64
        %v1238 = vpop.permute.xlu0 %1237
        %1239 = vrot.lane.b32.xlu0 %v758, 64
        %v1240 = vpop.permute.xlu0 %1239
        %1257 = vrot.lane.b32.xlu0 %v699, 32
        %v1258 = vpop.permute.xlu0 %1257
        %1259 = vrot.lane.b32.xlu0 %v702, 32
        %v1260 = vpop.permute.xlu0 %1259
        %1261 = vrot.lane.b32.xlu0 %v707, 32
        %v1262 = vpop.permute.xlu0 %1261
        %1263 = vrot.lane.b32.xlu0 %v710, 32
        %v1264 = vpop.permute.xlu0 %1263
        %1265 = vrot.lane.b32.xlu0 %v715, 32
        %v1266 = vpop.permute.xlu0 %1265
        %1267 = vrot.lane.b32.xlu0 %v718, 32
        %v1268 = vpop.permute.xlu0 %1267
        %1269 = vrot.lane.b32.xlu0 %v723, 32
        %v1270 = vpop.permute.xlu0 %1269
        %1271 = vrot.lane.b32.xlu0 %v726, 32
        %v1272 = vpop.permute.xlu0 %1271
        %1273 = vrot.lane.b32.xlu0 %v731, 32
        %v1274 = vpop.permute.xlu0 %1273
        %1275 = vrot.lane.b32.xlu0 %v734, 32
        %v1276 = vpop.permute.xlu0 %1275
        %1277 = vrot.lane.b32.xlu0 %v739, 32
        %v1278 = vpop.permute.xlu0 %1277
        %1279 = vrot.lane.b32.xlu0 %v742, 32
        %v1280 = vpop.permute.xlu0 %1279
        %1281 = vrot.lane.b32.xlu0 %v747, 32
        %v1282 = vpop.permute.xlu0 %1281
        %1283 = vrot.lane.b32.xlu0 %v750, 32
        %v1284 = vpop.permute.xlu0 %1283
        %1285 = vrot.lane.b32.xlu0 %v755, 32
        %v1286 = vpop.permute.xlu0 %1285
        %1287 = vrot.lane.b32.xlu0 %v758, 32
        %v1288 = vpop.permute.xlu0 %1287
        %v1305 = vpack.c.bf16 %v702, %v699
        %v1306 = vpack.c.bf16 %v710, %v707
        %v1307 = vpack.c.bf16 %v718, %v715
        %v1308 = vpack.c.bf16 %v726, %v723
        %v1309 = vpack.c.bf16 %v734, %v731
        %v1310 = vpack.c.bf16 %v742, %v739
        %v1311 = vpack.c.bf16 %v750, %v747
        %v1312 = vpack.c.bf16 %v758, %v755
        %v1313 = vpack.c.bf16 %v1164, %v1162
        %v1314 = vpack.c.bf16 %v1168, %v1166
        %v1315 = vpack.c.bf16 %v1172, %v1170
        %v1316 = vpack.c.bf16 %v1176, %v1174
        %v1317 = vpack.c.bf16 %v1180, %v1178
        %v1318 = vpack.c.bf16 %v1184, %v1182
        %v1319 = vpack.c.bf16 %v1188, %v1186
        %v1320 = vpack.c.bf16 %v1192, %v1190
        %v1321 = vpack.c.bf16 %v1212, %v1210
        %v1322 = vpack.c.bf16 %v1216, %v1214
        %v1323 = vpack.c.bf16 %v1220, %v1218
        %v1324 = vpack.c.bf16 %v1224, %v1222
        %v1325 = vpack.c.bf16 %v1228, %v1226
        %v1326 = vpack.c.bf16 %v1232, %v1230
        %v1327 = vpack.c.bf16 %v1236, %v1234
        %v1328 = vpack.c.bf16 %v1240, %v1238
        %v1329 = vpack.c.bf16 %v1260, %v1258
        %v1330 = vpack.c.bf16 %v1264, %v1262
        %v1331 = vpack.c.bf16 %v1268, %v1266
        %v1332 = vpack.c.bf16 %v1272, %v1270
        %v1333 = vpack.c.bf16 %v1276, %v1274
        %v1334 = vpack.c.bf16 %v1280, %v1278
        %v1335 = vpack.c.bf16 %v1284, %v1282
        %v1336 = vpack.c.bf16 %v1288, %v1286
        %vm1337 = vcmask 261120
        %v1339 = vsel %vm1337, %v921, 0
        %v1342 = vsel %vm1337, %v922, 0
        %v1345 = vsel %vm1337, %v923, 0
        %v1348 = vsel %vm1337, %v924, 0
        %v1351 = vsel %vm1337, %v925, 0
        %v1354 = vsel %vm1337, %v926, 0
        %v1357 = vsel %vm1337, %v927, 0
        %v1360 = vsel %vm1337, %v928, 0
        %v1363 = vsel %vm1337, %v1113, 0
        %v1366 = vsel %vm1337, %v1114, 0
        %v1369 = vsel %vm1337, %v1115, 0
        %v1372 = vsel %vm1337, %v1116, 0
        %v1375 = vsel %vm1337, %v1117, 0
        %v1378 = vsel %vm1337, %v1118, 0
        %v1381 = vsel %vm1337, %v1119, 0
        %v1384 = vsel %vm1337, %v1120, 0
        %1386 = vmatprep.subr.bf16.mxu0 0
        %1387 = vmatpush1.bf16.xpose.msra.mxu0 %v1363
        %1388 = vmatprep.subr.bf16.mxu0 0
        %1389 = vmatpush1.bf16.xpose.msra.mxu0 %v1366
        %1390 = vmatprep.subr.bf16.mxu0 0
        %1391 = vmatpush1.bf16.xpose.msra.mxu0 %v1369
        %1392 = vmatprep.subr.bf16.mxu0 0
        %1393 = vmatpush1.bf16.xpose.msra.mxu0 %v1372
        %1394 = vmatprep.subr.bf16.mxu0 0
        %1395 = vmatpush1.bf16.xpose.msra.mxu0 %v1375
        %1396 = vmatprep.subr.bf16.mxu0 0
        %1397 = vmatpush1.bf16.xpose.msra.mxu0 %v1378
        %1398 = vmatprep.subr.bf16.mxu0 0
        %1399 = vmatpush1.bf16.xpose.msra.mxu0 %v1381
        %1400 = vmatprep.subr.bf16.mxu0 0
        %1401 = vmatpush1.bf16.xpose.msra.mxu0 %v1384
        %1402 = vmatprep.subr.bf16.mxu0 0
        %1403 = vmatpush1.bf16.xpose.msra.mxu0 0
        %1404 = vmatprep.subr.bf16.mxu0 0
        %1405 = vmatpush1.bf16.xpose.msra.mxu0 0
        %1406 = vmatprep.subr.bf16.mxu0 0
        %1407 = vmatpush1.bf16.xpose.msra.mxu0 0
        %1408 = vmatprep.subr.bf16.mxu0 0
        %1409 = vmatpush1.bf16.xpose.msra.mxu0 0
        %1410 = vmatprep.subr.bf16.mxu0 0
        %1411 = vmatpush1.bf16.xpose.msra.mxu0 0
        %1412 = vmatprep.subr.bf16.mxu0 0
        %1413 = vmatpush1.bf16.xpose.msra.mxu0 0
        %1414 = vmatprep.subr.bf16.mxu0 0
        %1415 = vmatpush1.bf16.xpose.msra.mxu0 0
        %1416 = vmatprep.subr.bf16.mxu0 0
        %1417 = vmatpush1.bf16.xpose.msra.mxu0 0
        %1418 = vmatprep.mubr.bf16.mxu0 0
        %1419 = vmatmul.mubr.bf16.gmra.mrb[0].mxu0 %v1339
        %v1420 = vpop.f32.mrb[0].mxu0
        %v1421 = vadd.f32 0.0, %v1420
        %v1422 = vpop.f32.mrb[0].mxu0
        %v1423 = vpop.f32.mrb[0].mxu0
        %v1424 = vadd.f32 0.0, %v1423
        %v1425 = vpop.f32.mrb[0].mxu0
        %1426 = vmatprep.mubr.bf16.mxu0 0
        %1427 = vmatmul.mubr.bf16.gmra.mrb[0].mxu0 %v1342
        %v1428 = vpop.f32.mrb[0].mxu0
        %v1429 = vadd.f32 0.0, %v1428
        %v1430 = vpop.f32.mrb[0].mxu0
        %v1431 = vpop.f32.mrb[0].mxu0
        %v1432 = vadd.f32 0.0, %v1431
        %v1433 = vpop.f32.mrb[0].mxu0
        %1434 = vmatprep.mubr.bf16.mxu0 0
        %1435 = vmatmul.mubr.bf16.gmra.mrb[0].mxu0 %v1345
        %v1436 = vpop.f32.mrb[0].mxu0
        %v1437 = vadd.f32 0.0, %v1436
        %v1438 = vpop.f32.mrb[0].mxu0
        %v1439 = vpop.f32.mrb[0].mxu0
        %v1440 = vadd.f32 0.0, %v1439
        %v1441 = vpop.f32.mrb[0].mxu0
        %1442 = vmatprep.mubr.bf16.mxu0 0
        %1443 = vmatmul.mubr.bf16.gmra.mrb[0].mxu0 %v1348
        %v1444 = vpop.f32.mrb[0].mxu0
        %v1445 = vadd.f32 0.0, %v1444
        %v1446 = vpop.f32.mrb[0].mxu0
        %v1447 = vpop.f32.mrb[0].mxu0
        %v1448 = vadd.f32 0.0, %v1447
        %v1449 = vpop.f32.mrb[0].mxu0
        %1450 = vmatprep.mubr.bf16.mxu0 0
        %1451 = vmatmul.mubr.bf16.gmra.mrb[0].mxu0 %v1351
        %v1452 = vpop.f32.mrb[0].mxu0
        %v1453 = vadd.f32 0.0, %v1452
        %v1454 = vpop.f32.mrb[0].mxu0
        %v1455 = vpop.f32.mrb[0].mxu0
        %v1456 = vadd.f32 0.0, %v1455
        %v1457 = vpop.f32.mrb[0].mxu0
        %1458 = vmatprep.mubr.bf16.mxu0 0
        %1459 = vmatmul.mubr.bf16.gmra.mrb[0].mxu0 %v1354
        %v1460 = vpop.f32.mrb[0].mxu0
        %v1461 = vadd.f32 0.0, %v1460
        %v1462 = vpop.f32.mrb[0].mxu0
        %v1463 = vpop.f32.mrb[0].mxu0
        %v1464 = vadd.f32 0.0, %v1463
        %v1465 = vpop.f32.mrb[0].mxu0
        %1466 = vmatprep.mubr.bf16.mxu0 0
        %1467 = vmatmul.mubr.bf16.gmra.mrb[0].mxu0 %v1357
        %v1468 = vpop.f32.mrb[0].mxu0
        %v1469 = vadd.f32 0.0, %v1468
        %v1470 = vpop.f32.mrb[0].mxu0
        %v1471 = vpop.f32.mrb[0].mxu0
        %v1472 = vadd.f32 0.0, %v1471
        %v1473 = vpop.f32.mrb[0].mxu0
        %1474 = vmatprep.mubr.bf16.mxu0 0
        %1475 = vmatmul.mubr.bf16.gmra.mrb[0].mxu0 %v1360
        %v1476 = vpop.f32.mrb[0].mxu0
        %v1477 = vadd.f32 0.0, %v1476
        %v1478 = vpop.f32.mrb[0].mxu0
        %v1479 = vpop.f32.mrb[0].mxu0
        %v1480 = vadd.f32 0.0, %v1479
        %v1481 = vpop.f32.mrb[0].mxu0
        %1482 = vdwg.mxu0
        %v1484 = vsel %vm1337, %v929, 0
        %v1487 = vsel %vm1337, %v930, 0
        %v1490 = vsel %vm1337, %v931, 0
        %v1493 = vsel %vm1337, %v932, 0
        %v1496 = vsel %vm1337, %v933, 0
        %v1499 = vsel %vm1337, %v934, 0
        %v1502 = vsel %vm1337, %v935, 0
        %v1505 = vsel %vm1337, %v936, 0
        %v1508 = vsel %vm1337, %v1121, 0
        %v1511 = vsel %vm1337, %v1122, 0
        %v1514 = vsel %vm1337, %v1123, 0
        %v1517 = vsel %vm1337, %v1124, 0
        %v1520 = vsel %vm1337, %v1125, 0
        %v1523 = vsel %vm1337, %v1126, 0
        %v1526 = vsel %vm1337, %v1127, 0
        %v1529 = vsel %vm1337, %v1128, 0
        %1531 = vmatprep.subr.bf16.mxu0 0
        %1532 = vmatpush1.bf16.xpose.msra.mxu0 %v1508
        %1533 = vmatprep.subr.bf16.mxu0 0
        %1534 = vmatpush1.bf16.xpose.msra.mxu0 %v1511
        %1535 = vmatprep.subr.bf16.mxu0 0
        %1536 = vmatpush1.bf16.xpose.msra.mxu0 %v1514
        %1537 = vmatprep.subr.bf16.mxu0 0
        %1538 = vmatpush1.bf16.xpose.msra.mxu0 %v1517
        %1539 = vmatprep.subr.bf16.mxu0 0
        %1540 = vmatpush1.bf16.xpose.msra.mxu0 %v1520
        %1541 = vmatprep.subr.bf16.mxu0 0
        %1542 = vmatpush1.bf16.xpose.msra.mxu0 %v1523
        %1543 = vmatprep.subr.bf16.mxu0 0
        %1544 = vmatpush1.bf16.xpose.msra.mxu0 %v1526
        %1545 = vmatprep.subr.bf16.mxu0 0
        %1546 = vmatpush1.bf16.xpose.msra.mxu0 %v1529
        %1547 = vmatprep.subr.bf16.mxu0 0
        %1548 = vmatpush1.bf16.xpose.msra.mxu0 0
        %1549 = vmatprep.subr.bf16.mxu0 0
        %1550 = vmatpush1.bf16.xpose.msra.mxu0 0
        %1551 = vmatprep.subr.bf16.mxu0 0
        %1552 = vmatpush1.bf16.xpose.msra.mxu0 0
        %1553 = vmatprep.subr.bf16.mxu0 0
        %1554 = vmatpush1.bf16.xpose.msra.mxu0 0
        %1555 = vmatprep.subr.bf16.mxu0 0
        %1556 = vmatpush1.bf16.xpose.msra.mxu0 0
        %1557 = vmatprep.subr.bf16.mxu0 0
        %1558 = vmatpush1.bf16.xpose.msra.mxu0 0
        %1559 = vmatprep.subr.bf16.mxu0 0
        %1560 = vmatpush1.bf16.xpose.msra.mxu0 0
        %1561 = vmatprep.subr.bf16.mxu0 0
        %1562 = vmatpush1.bf16.xpose.msra.mxu0 0
        %1563 = vmatprep.mubr.bf16.mxu0 0
        %1564 = vmatmul.mubr.bf16.gmra.mrb[0].mxu0 %v1484
        %v1565 = vpop.f32.mrb[0].mxu0
        %v1566 = vadd.f32 0.0, %v1565
        %v1567 = vpop.f32.mrb[0].mxu0
        %v1568 = vpop.f32.mrb[0].mxu0
        %v1569 = vadd.f32 0.0, %v1568
        %v1570 = vpop.f32.mrb[0].mxu0
        %1571 = vmatprep.mubr.bf16.mxu0 0
        %1572 = vmatmul.mubr.bf16.gmra.mrb[0].mxu0 %v1487
        %v1573 = vpop.f32.mrb[0].mxu0
        %v1574 = vadd.f32 0.0, %v1573
        %v1575 = vpop.f32.mrb[0].mxu0
        %v1576 = vpop.f32.mrb[0].mxu0
        %v1577 = vadd.f32 0.0, %v1576
        %v1578 = vpop.f32.mrb[0].mxu0
        %1579 = vmatprep.mubr.bf16.mxu0 0
        %1580 = vmatmul.mubr.bf16.gmra.mrb[0].mxu0 %v1490
        %v1581 = vpop.f32.mrb[0].mxu0
        %v1582 = vadd.f32 0.0, %v1581
        %v1583 = vpop.f32.mrb[0].mxu0
        %v1584 = vpop.f32.mrb[0].mxu0
        %v1585 = vadd.f32 0.0, %v1584
        %v1586 = vpop.f32.mrb[0].mxu0
        %1587 = vmatprep.mubr.bf16.mxu0 0
        %1588 = vmatmul.mubr.bf16.gmra.mrb[0].mxu0 %v1493
        %v1589 = vpop.f32.mrb[0].mxu0
        %v1590 = vadd.f32 0.0, %v1589
        %v1591 = vpop.f32.mrb[0].mxu0
        %v1592 = vpop.f32.mrb[0].mxu0
        %v1593 = vadd.f32 0.0, %v1592
        %v1594 = vpop.f32.mrb[0].mxu0
        %1595 = vmatprep.mubr.bf16.mxu0 0
        %1596 = vmatmul.mubr.bf16.gmra.mrb[0].mxu0 %v1496
        %v1597 = vpop.f32.mrb[0].mxu0
        %v1598 = vadd.f32 0.0, %v1597
        %v1599 = vpop.f32.mrb[0].mxu0
        %v1600 = vpop.f32.mrb[0].mxu0
        %v1601 = vadd.f32 0.0, %v1600
        %v1602 = vpop.f32.mrb[0].mxu0
        %1603 = vmatprep.mubr.bf16.mxu0 0
        %1604 = vmatmul.mubr.bf16.gmra.mrb[0].mxu0 %v1499
        %v1605 = vpop.f32.mrb[0].mxu0
        %v1606 = vadd.f32 0.0, %v1605
        %v1607 = vpop.f32.mrb[0].mxu0
        %v1608 = vpop.f32.mrb[0].mxu0
        %v1609 = vadd.f32 0.0, %v1608
        %v1610 = vpop.f32.mrb[0].mxu0
        %1611 = vmatprep.mubr.bf16.mxu0 0
        %1612 = vmatmul.mubr.bf16.gmra.mrb[0].mxu0 %v1502
        %v1613 = vpop.f32.mrb[0].mxu0
        %v1614 = vadd.f32 0.0, %v1613
        %v1615 = vpop.f32.mrb[0].mxu0
        %v1616 = vpop.f32.mrb[0].mxu0
        %v1617 = vadd.f32 0.0, %v1616
        %v1618 = vpop.f32.mrb[0].mxu0
        %1619 = vmatprep.mubr.bf16.mxu0 0
        %1620 = vmatmul.mubr.bf16.gmra.mrb[0].mxu0 %v1505
        %v1621 = vpop.f32.mrb[0].mxu0
        %v1622 = vadd.f32 0.0, %v1621
        %v1623 = vpop.f32.mrb[0].mxu0
        %v1624 = vpop.f32.mrb[0].mxu0
        %v1625 = vadd.f32 0.0, %v1624
        %v1626 = vpop.f32.mrb[0].mxu0
        %1627 = vdwg.mxu0
        %v1629 = vsel %vm1337, %v937, 0
        %v1632 = vsel %vm1337, %v938, 0
        %v1635 = vsel %vm1337, %v939, 0
        %v1638 = vsel %vm1337, %v940, 0
        %v1641 = vsel %vm1337, %v941, 0
        %v1644 = vsel %vm1337, %v942, 0
        %v1647 = vsel %vm1337, %v943, 0
        %v1650 = vsel %vm1337, %v944, 0
        %v1653 = vsel %vm1337, %v1129, 0
        %v1656 = vsel %vm1337, %v1130, 0
        %v1659 = vsel %vm1337, %v1131, 0
        %v1662 = vsel %vm1337, %v1132, 0
        %v1665 = vsel %vm1337, %v1133, 0
        %v1668 = vsel %vm1337, %v1134, 0
        %v1671 = vsel %vm1337, %v1135, 0
        %v1674 = vsel %vm1337, %v1136, 0
        %1676 = vmatprep.subr.bf16.mxu0 0
        %1677 = vmatpush1.bf16.xpose.msra.mxu0 %v1653
        %1678 = vmatprep.subr.bf16.mxu0 0
        %1679 = vmatpush1.bf16.xpose.msra.mxu0 %v1656
        %1680 = vmatprep.subr.bf16.mxu0 0
        %1681 = vmatpush1.bf16.xpose.msra.mxu0 %v1659
        %1682 = vmatprep.subr.bf16.mxu0 0
        %1683 = vmatpush1.bf16.xpose.msra.mxu0 %v1662
        %1684 = vmatprep.subr.bf16.mxu0 0
        %1685 = vmatpush1.bf16.xpose.msra.mxu0 %v1665
        %1686 = vmatprep.subr.bf16.mxu0 0
        %1687 = vmatpush1.bf16.xpose.msra.mxu0 %v1668
        %1688 = vmatprep.subr.bf16.mxu0 0
        %1689 = vmatpush1.bf16.xpose.msra.mxu0 %v1671
        %1690 = vmatprep.subr.bf16.mxu0 0
        %1691 = vmatpush1.bf16.xpose.msra.mxu0 %v1674
        %1692 = vmatprep.subr.bf16.mxu0 0
        %1693 = vmatpush1.bf16.xpose.msra.mxu0 0
        %1694 = vmatprep.subr.bf16.mxu0 0
        %1695 = vmatpush1.bf16.xpose.msra.mxu0 0
        %1696 = vmatprep.subr.bf16.mxu0 0
        %1697 = vmatpush1.bf16.xpose.msra.mxu0 0
        %1698 = vmatprep.subr.bf16.mxu0 0
        %1699 = vmatpush1.bf16.xpose.msra.mxu0 0
        %1700 = vmatprep.subr.bf16.mxu0 0
        %1701 = vmatpush1.bf16.xpose.msra.mxu0 0
        %1702 = vmatprep.subr.bf16.mxu0 0
        %1703 = vmatpush1.bf16.xpose.msra.mxu0 0
        %1704 = vmatprep.subr.bf16.mxu0 0
        %1705 = vmatpush1.bf16.xpose.msra.mxu0 0
        %1706 = vmatprep.subr.bf16.mxu0 0
        %1707 = vmatpush1.bf16.xpose.msra.mxu0 0
        %1708 = vmatprep.mubr.bf16.mxu0 0
        %1709 = vmatmul.mubr.bf16.gmra.mrb[0].mxu0 %v1629
        %v1710 = vpop.f32.mrb[0].mxu0
        %v1711 = vadd.f32 0.0, %v1710
        %v1712 = vpop.f32.mrb[0].mxu0
        %v1713 = vpop.f32.mrb[0].mxu0
        %v1714 = vadd.f32 0.0, %v1713
        %v1715 = vpop.f32.mrb[0].mxu0
        %1716 = vmatprep.mubr.bf16.mxu0 0
        %1717 = vmatmul.mubr.bf16.gmra.mrb[0].mxu0 %v1632
        %v1718 = vpop.f32.mrb[0].mxu0
        %v1719 = vadd.f32 0.0, %v1718
        %v1720 = vpop.f32.mrb[0].mxu0
        %v1721 = vpop.f32.mrb[0].mxu0
        %v1722 = vadd.f32 0.0, %v1721
        %v1723 = vpop.f32.mrb[0].mxu0
        %1724 = vmatprep.mubr.bf16.mxu0 0
        %1725 = vmatmul.mubr.bf16.gmra.mrb[0].mxu0 %v1635
        %v1726 = vpop.f32.mrb[0].mxu0
        %v1727 = vadd.f32 0.0, %v1726
        %v1728 = vpop.f32.mrb[0].mxu0
        %v1729 = vpop.f32.mrb[0].mxu0
        %v1730 = vadd.f32 0.0, %v1729
        %v1731 = vpop.f32.mrb[0].mxu0
        %1732 = vmatprep.mubr.bf16.mxu0 0
        %1733 = vmatmul.mubr.bf16.gmra.mrb[0].mxu0 %v1638
        %v1734 = vpop.f32.mrb[0].mxu0
        %v1735 = vadd.f32 0.0, %v1734
        %v1736 = vpop.f32.mrb[0].mxu0
        %v1737 = vpop.f32.mrb[0].mxu0
        %v1738 = vadd.f32 0.0, %v1737
        %v1739 = vpop.f32.mrb[0].mxu0
        %1740 = vmatprep.mubr.bf16.mxu0 0
        %1741 = vmatmul.mubr.bf16.gmra.mrb[0].mxu0 %v1641
        %v1742 = vpop.f32.mrb[0].mxu0
        %v1743 = vadd.f32 0.0, %v1742
        %v1744 = vpop.f32.mrb[0].mxu0
        %v1745 = vpop.f32.mrb[0].mxu0
        %v1746 = vadd.f32 0.0, %v1745
        %v1747 = vpop.f32.mrb[0].mxu0
        %1748 = vmatprep.mubr.bf16.mxu0 0
        %1749 = vmatmul.mubr.bf16.gmra.mrb[0].mxu0 %v1644
        %v1750 = vpop.f32.mrb[0].mxu0
        %v1751 = vadd.f32 0.0, %v1750
        %v1752 = vpop.f32.mrb[0].mxu0
        %v1753 = vpop.f32.mrb[0].mxu0
        %v1754 = vadd.f32 0.0, %v1753
        %v1755 = vpop.f32.mrb[0].mxu0
        %1756 = vmatprep.mubr.bf16.mxu0 0
        %1757 = vmatmul.mubr.bf16.gmra.mrb[0].mxu0 %v1647
        %v1758 = vpop.f32.mrb[0].mxu0
        %v1759 = vadd.f32 0.0, %v1758
        %v1760 = vpop.f32.mrb[0].mxu0
        %v1761 = vpop.f32.mrb[0].mxu0
        %v1762 = vadd.f32 0.0, %v1761
        %v1763 = vpop.f32.mrb[0].mxu0
        %1764 = vmatprep.mubr.bf16.mxu0 0
        %1765 = vmatmul.mubr.bf16.gmra.mrb[0].mxu0 %v1650
        %v1766 = vpop.f32.mrb[0].mxu0
        %v1767 = vadd.f32 0.0, %v1766
        %v1768 = vpop.f32.mrb[0].mxu0
        %v1769 = vpop.f32.mrb[0].mxu0
        %v1770 = vadd.f32 0.0, %v1769
        %v1771 = vpop.f32.mrb[0].mxu0
        %1772 = vdwg.mxu0
        %v1774 = vsel %vm1337, %v945, 0
        %v1777 = vsel %vm1337, %v946, 0
        %v1780 = vsel %vm1337, %v947, 0
        %v1783 = vsel %vm1337, %v948, 0
        %v1786 = vsel %vm1337, %v949, 0
        %v1789 = vsel %vm1337, %v950, 0
        %v1792 = vsel %vm1337, %v951, 0
        %v1795 = vsel %vm1337, %v952, 0
        %v1798 = vsel %vm1337, %v1137, 0
        %v1801 = vsel %vm1337, %v1138, 0
        %v1804 = vsel %vm1337, %v1139, 0
        %v1807 = vsel %vm1337, %v1140, 0
        %v1810 = vsel %vm1337, %v1141, 0
        %v1813 = vsel %vm1337, %v1142, 0
        %v1816 = vsel %vm1337, %v1143, 0
        %v1819 = vsel %vm1337, %v1144, 0
        %1821 = vmatprep.subr.bf16.mxu0 0
        %1822 = vmatpush1.bf16.xpose.msra.mxu0 %v1798
        %1823 = vmatprep.subr.bf16.mxu0 0
        %1824 = vmatpush1.bf16.xpose.msra.mxu0 %v1801
        %1825 = vmatprep.subr.bf16.mxu0 0
        %1826 = vmatpush1.bf16.xpose.msra.mxu0 %v1804
        %1827 = vmatprep.subr.bf16.mxu0 0
        %1828 = vmatpush1.bf16.xpose.msra.mxu0 %v1807
        %1829 = vmatprep.subr.bf16.mxu0 0
        %1830 = vmatpush1.bf16.xpose.msra.mxu0 %v1810
        %1831 = vmatprep.subr.bf16.mxu0 0
        %1832 = vmatpush1.bf16.xpose.msra.mxu0 %v1813
        %1833 = vmatprep.subr.bf16.mxu0 0
        %1834 = vmatpush1.bf16.xpose.msra.mxu0 %v1816
        %1835 = vmatprep.subr.bf16.mxu0 0
        %1836 = vmatpush1.bf16.xpose.msra.mxu0 %v1819
        %1837 = vmatprep.subr.bf16.mxu0 0
        %1838 = vmatpush1.bf16.xpose.msra.mxu0 0
        %1839 = vmatprep.subr.bf16.mxu0 0
        %1840 = vmatpush1.bf16.xpose.msra.mxu0 0
        %1841 = vmatprep.subr.bf16.mxu0 0
        %1842 = vmatpush1.bf16.xpose.msra.mxu0 0
        %1843 = vmatprep.subr.bf16.mxu0 0
        %1844 = vmatpush1.bf16.xpose.msra.mxu0 0
        %1845 = vmatprep.subr.bf16.mxu0 0
        %1846 = vmatpush1.bf16.xpose.msra.mxu0 0
        %1847 = vmatprep.subr.bf16.mxu0 0
        %1848 = vmatpush1.bf16.xpose.msra.mxu0 0
        %1849 = vmatprep.subr.bf16.mxu0 0
        %1850 = vmatpush1.bf16.xpose.msra.mxu0 0
        %1851 = vmatprep.subr.bf16.mxu0 0
        %1852 = vmatpush1.bf16.xpose.msra.mxu0 0
        %1853 = vmatprep.mubr.bf16.mxu0 0
        %1854 = vmatmul.mubr.bf16.gmra.mrb[0].mxu0 %v1774
        %v1855 = vpop.f32.mrb[0].mxu0
        %v1856 = vadd.f32 0.0, %v1855
        %v1857 = vpop.f32.mrb[0].mxu0
        %v1858 = vpop.f32.mrb[0].mxu0
        %v1859 = vadd.f32 0.0, %v1858
        %v1860 = vpop.f32.mrb[0].mxu0
        %1861 = vmatprep.mubr.bf16.mxu0 0
        %1862 = vmatmul.mubr.bf16.gmra.mrb[0].mxu0 %v1777
        %v1863 = vpop.f32.mrb[0].mxu0
        %v1864 = vadd.f32 0.0, %v1863
        %v1865 = vpop.f32.mrb[0].mxu0
        %v1866 = vpop.f32.mrb[0].mxu0
        %v1867 = vadd.f32 0.0, %v1866
        %v1868 = vpop.f32.mrb[0].mxu0
        %1869 = vmatprep.mubr.bf16.mxu0 0
        %1870 = vmatmul.mubr.bf16.gmra.mrb[0].mxu0 %v1780
        %v1871 = vpop.f32.mrb[0].mxu0
        %v1872 = vadd.f32 0.0, %v1871
        %v1873 = vpop.f32.mrb[0].mxu0
        %v1874 = vpop.f32.mrb[0].mxu0
        %v1875 = vadd.f32 0.0, %v1874
        %v1876 = vpop.f32.mrb[0].mxu0
        %1877 = vmatprep.mubr.bf16.mxu0 0
        %1878 = vmatmul.mubr.bf16.gmra.mrb[0].mxu0 %v1783
        %v1879 = vpop.f32.mrb[0].mxu0
        %v1880 = vadd.f32 0.0, %v1879
        %v1881 = vpop.f32.mrb[0].mxu0
        %v1882 = vpop.f32.mrb[0].mxu0
        %v1883 = vadd.f32 0.0, %v1882
        %v1884 = vpop.f32.mrb[0].mxu0
        %1885 = vmatprep.mubr.bf16.mxu0 0
        %1886 = vmatmul.mubr.bf16.gmra.mrb[0].mxu0 %v1786
        %v1887 = vpop.f32.mrb[0].mxu0
        %v1888 = vadd.f32 0.0, %v1887
        %v1889 = vpop.f32.mrb[0].mxu0
        %v1890 = vpop.f32.mrb[0].mxu0
        %v1891 = vadd.f32 0.0, %v1890
        %v1892 = vpop.f32.mrb[0].mxu0
        %1893 = vmatprep.mubr.bf16.mxu0 0
        %1894 = vmatmul.mubr.bf16.gmra.mrb[0].mxu0 %v1789
        %v1895 = vpop.f32.mrb[0].mxu0
        %v1896 = vadd.f32 0.0, %v1895
        %v1897 = vpop.f32.mrb[0].mxu0
        %v1898 = vpop.f32.mrb[0].mxu0
        %v1899 = vadd.f32 0.0, %v1898
        %v1900 = vpop.f32.mrb[0].mxu0
        %1901 = vmatprep.mubr.bf16.mxu0 0
        %1902 = vmatmul.mubr.bf16.gmra.mrb[0].mxu0 %v1792
        %v1903 = vpop.f32.mrb[0].mxu0
        %v1904 = vadd.f32 0.0, %v1903
        %v1905 = vpop.f32.mrb[0].mxu0
        %v1906 = vpop.f32.mrb[0].mxu0
        %v1907 = vadd.f32 0.0, %v1906
        %v1908 = vpop.f32.mrb[0].mxu0
        %1909 = vmatprep.mubr.bf16.mxu0 0
        %1910 = vmatmul.mubr.bf16.gmra.mrb[0].mxu0 %v1795
        %v1911 = vpop.f32.mrb[0].mxu0
        %v1912 = vadd.f32 0.0, %v1911
        %v1913 = vpop.f32.mrb[0].mxu0
        %v1914 = vpop.f32.mrb[0].mxu0
        %v1915 = vadd.f32 0.0, %v1914
        %v1916 = vpop.f32.mrb[0].mxu0
        %1917 = vdwg.mxu0
        %1918 = vmax.xlane.f32.xlu0 %v1421
        %v1919 = vpop.xlane.xlu0 %1918
        %1920 = vmax.xlane.f32.xlu0 %v1424
        %v1921 = vpop.xlane.xlu0 %1920
        %1922 = vmax.xlane.f32.xlu0 %v1429
        %v1923 = vpop.xlane.xlu0 %1922
        %1924 = vmax.xlane.f32.xlu0 %v1432
        %v1925 = vpop.xlane.xlu0 %1924
        %1926 = vmax.xlane.f32.xlu0 %v1437
        %v1927 = vpop.xlane.xlu0 %1926
        %1928 = vmax.xlane.f32.xlu0 %v1440
        %v1929 = vpop.xlane.xlu0 %1928
        %1930 = vmax.xlane.f32.xlu0 %v1445
        %v1931 = vpop.xlane.xlu0 %1930
        %1932 = vmax.xlane.f32.xlu0 %v1448
        %v1933 = vpop.xlane.xlu0 %1932
        %1934 = vmax.xlane.f32.xlu0 %v1453
        %v1935 = vpop.xlane.xlu0 %1934
        %1936 = vmax.xlane.f32.xlu0 %v1456
        %v1937 = vpop.xlane.xlu0 %1936
        %1938 = vmax.xlane.f32.xlu0 %v1461
        %v1939 = vpop.xlane.xlu0 %1938
        %1940 = vmax.xlane.f32.xlu0 %v1464
        %v1941 = vpop.xlane.xlu0 %1940
        %1942 = vmax.xlane.f32.xlu0 %v1469
        %v1943 = vpop.xlane.xlu0 %1942
        %1944 = vmax.xlane.f32.xlu0 %v1472
        %v1945 = vpop.xlane.xlu0 %1944
        %1946 = vmax.xlane.f32.xlu0 %v1477
        %v1947 = vpop.xlane.xlu0 %1946
        %1948 = vmax.xlane.f32.xlu0 %v1480
        %v1949 = vpop.xlane.xlu0 %1948
        %1950 = vmax.xlane.f32.xlu0 %v1566
        %v1951 = vpop.xlane.xlu0 %1950
        %1952 = vmax.xlane.f32.xlu0 %v1569
        %v1953 = vpop.xlane.xlu0 %1952
        %1954 = vmax.xlane.f32.xlu0 %v1574
        %v1955 = vpop.xlane.xlu0 %1954
        %1956 = vmax.xlane.f32.xlu0 %v1577
        %v1957 = vpop.xlane.xlu0 %1956
        %1958 = vmax.xlane.f32.xlu0 %v1582
        %v1959 = vpop.xlane.xlu0 %1958
        %1960 = vmax.xlane.f32.xlu0 %v1585
        %v1961 = vpop.xlane.xlu0 %1960
        %1962 = vmax.xlane.f32.xlu0 %v1590
        %v1963 = vpop.xlane.xlu0 %1962
        %1964 = vmax.xlane.f32.xlu0 %v1593
        %v1965 = vpop.xlane.xlu0 %1964
        %1966 = vmax.xlane.f32.xlu0 %v1598
        %v1967 = vpop.xlane.xlu0 %1966
        %1968 = vmax.xlane.f32.xlu0 %v1601
        %v1969 = vpop.xlane.xlu0 %1968
        %1970 = vmax.xlane.f32.xlu0 %v1606
        %v1971 = vpop.xlane.xlu0 %1970
        %1972 = vmax.xlane.f32.xlu0 %v1609
        %v1973 = vpop.xlane.xlu0 %1972
        %1974 = vmax.xlane.f32.xlu0 %v1614
        %v1975 = vpop.xlane.xlu0 %1974
        %1976 = vmax.xlane.f32.xlu0 %v1617
        %v1977 = vpop.xlane.xlu0 %1976
        %1978 = vmax.xlane.f32.xlu0 %v1622
        %v1979 = vpop.xlane.xlu0 %1978
        %1980 = vmax.xlane.f32.xlu0 %v1625
        %v1981 = vpop.xlane.xlu0 %1980
        %1982 = vmax.xlane.f32.xlu0 %v1711
        %v1983 = vpop.xlane.xlu0 %1982
        %1984 = vmax.xlane.f32.xlu0 %v1714
        %v1985 = vpop.xlane.xlu0 %1984
        %1986 = vmax.xlane.f32.xlu0 %v1719
        %v1987 = vpop.xlane.xlu0 %1986
        %1988 = vmax.xlane.f32.xlu0 %v1722
        %v1989 = vpop.xlane.xlu0 %1988
        %1990 = vmax.xlane.f32.xlu0 %v1727
        %v1991 = vpop.xlane.xlu0 %1990
        %1992 = vmax.xlane.f32.xlu0 %v1730
        %v1993 = vpop.xlane.xlu0 %1992
        %1994 = vmax.xlane.f32.xlu0 %v1735
        %v1995 = vpop.xlane.xlu0 %1994
        %1996 = vmax.xlane.f32.xlu0 %v1738
        %v1997 = vpop.xlane.xlu0 %1996
        %1998 = vmax.xlane.f32.xlu0 %v1743
        %v1999 = vpop.xlane.xlu0 %1998
        %2000 = vmax.xlane.f32.xlu0 %v1746
        %v2001 = vpop.xlane.xlu0 %2000
        %2002 = vmax.xlane.f32.xlu0 %v1751
        %v2003 = vpop.xlane.xlu0 %2002
        %2004 = vmax.xlane.f32.xlu0 %v1754
        %v2005 = vpop.xlane.xlu0 %2004
        %2006 = vmax.xlane.f32.xlu0 %v1759
        %v2007 = vpop.xlane.xlu0 %2006
        %2008 = vmax.xlane.f32.xlu0 %v1762
        %v2009 = vpop.xlane.xlu0 %2008
        %2010 = vmax.xlane.f32.xlu0 %v1767
        %v2011 = vpop.xlane.xlu0 %2010
        %2012 = vmax.xlane.f32.xlu0 %v1770
        %v2013 = vpop.xlane.xlu0 %2012
        %2014 = vmax.xlane.f32.xlu0 %v1856
        %v2015 = vpop.xlane.xlu0 %2014
        %2016 = vmax.xlane.f32.xlu0 %v1859
        %v2017 = vpop.xlane.xlu0 %2016
        %2018 = vmax.xlane.f32.xlu0 %v1864
        %v2019 = vpop.xlane.xlu0 %2018
        %2020 = vmax.xlane.f32.xlu0 %v1867
        %v2021 = vpop.xlane.xlu0 %2020
        %2022 = vmax.xlane.f32.xlu0 %v1872
        %v2023 = vpop.xlane.xlu0 %2022
        %2024 = vmax.xlane.f32.xlu0 %v1875
        %v2025 = vpop.xlane.xlu0 %2024
        %2026 = vmax.xlane.f32.xlu0 %v1880
        %v2027 = vpop.xlane.xlu0 %2026
        %2028 = vmax.xlane.f32.xlu0 %v1883
        %v2029 = vpop.xlane.xlu0 %2028
        %2030 = vmax.xlane.f32.xlu0 %v1888
        %v2031 = vpop.xlane.xlu0 %2030
        %2032 = vmax.xlane.f32.xlu0 %v1891
        %v2033 = vpop.xlane.xlu0 %2032
        %2034 = vmax.xlane.f32.xlu0 %v1896
        %v2035 = vpop.xlane.xlu0 %2034
        %2036 = vmax.xlane.f32.xlu0 %v1899
        %v2037 = vpop.xlane.xlu0 %2036
        %2038 = vmax.xlane.f32.xlu0 %v1904
        %v2039 = vpop.xlane.xlu0 %2038
        %2040 = vmax.xlane.f32.xlu0 %v1907
        %v2041 = vpop.xlane.xlu0 %2040
        %2042 = vmax.xlane.f32.xlu0 %v1912
        %v2043 = vpop.xlane.xlu0 %2042
        %2044 = vmax.xlane.f32.xlu0 %v1915
        %v2045 = vpop.xlane.xlu0 %2044
        %v2046 = vsub.f32 %v1421, %v1919
        %v2047 = vsub.f32 %v1424, %v1921
        %v2048 = vsub.f32 %v1429, %v1923
        %v2049 = vsub.f32 %v1432, %v1925
        %v2050 = vsub.f32 %v1437, %v1927
        %v2051 = vsub.f32 %v1440, %v1929
        %v2052 = vsub.f32 %v1445, %v1931
        %v2053 = vsub.f32 %v1448, %v1933
        %v2054 = vsub.f32 %v1453, %v1935
        %v2055 = vsub.f32 %v1456, %v1937
        %v2056 = vsub.f32 %v1461, %v1939
        %v2057 = vsub.f32 %v1464, %v1941
        %v2058 = vsub.f32 %v1469, %v1943
        %v2059 = vsub.f32 %v1472, %v1945
        %v2060 = vsub.f32 %v1477, %v1947
        %v2061 = vsub.f32 %v1480, %v1949
        %v2062 = vsub.f32 %v1566, %v1951
        %v2063 = vsub.f32 %v1569, %v1953
        %v2064 = vsub.f32 %v1574, %v1955
        %v2065 = vsub.f32 %v1577, %v1957
        %v2066 = vsub.f32 %v1582, %v1959
        %v2067 = vsub.f32 %v1585, %v1961
        %v2068 = vsub.f32 %v1590, %v1963
        %v2069 = vsub.f32 %v1593, %v1965
        %v2070 = vsub.f32 %v1598, %v1967
        %v2071 = vsub.f32 %v1601, %v1969
        %v2072 = vsub.f32 %v1606, %v1971
        %v2073 = vsub.f32 %v1609, %v1973
        %v2074 = vsub.f32 %v1614, %v1975
        %v2075 = vsub.f32 %v1617, %v1977
        %v2076 = vsub.f32 %v1622, %v1979
        %v2077 = vsub.f32 %v1625, %v1981
        %v2078 = vsub.f32 %v1711, %v1983
        %v2079 = vsub.f32 %v1714, %v1985
        %v2080 = vsub.f32 %v1719, %v1987
        %v2081 = vsub.f32 %v1722, %v1989
        %v2082 = vsub.f32 %v1727, %v1991
        %v2083 = vsub.f32 %v1730, %v1993
        %v2084 = vsub.f32 %v1735, %v1995
        %v2085 = vsub.f32 %v1738, %v1997
        %v2086 = vsub.f32 %v1743, %v1999
        %v2087 = vsub.f32 %v1746, %v2001
        %v2088 = vsub.f32 %v1751, %v2003
        %v2089 = vsub.f32 %v1754, %v2005
        %v2090 = vsub.f32 %v1759, %v2007
        %v2091 = vsub.f32 %v1762, %v2009
        %v2092 = vsub.f32 %v1767, %v2011
        %v2093 = vsub.f32 %v1770, %v2013
        %v2094 = vsub.f32 %v1856, %v2015
        %v2095 = vsub.f32 %v1859, %v2017
        %v2096 = vsub.f32 %v1864, %v2019
        %v2097 = vsub.f32 %v1867, %v2021
        %v2098 = vsub.f32 %v1872, %v2023
        %v2099 = vsub.f32 %v1875, %v2025
        %v2100 = vsub.f32 %v1880, %v2027
        %v2101 = vsub.f32 %v1883, %v2029
        %v2102 = vsub.f32 %v1888, %v2031
        %v2103 = vsub.f32 %v1891, %v2033
        %v2104 = vsub.f32 %v1896, %v2035
        %v2105 = vsub.f32 %v1899, %v2037
        %v2106 = vsub.f32 %v1904, %v2039
        %v2107 = vsub.f32 %v1907, %v2041
        %v2108 = vsub.f32 %v1912, %v2043
        %v2109 = vsub.f32 %v1915, %v2045
        %v2110 = vmul.f32 %v2046, 1.442695
        %v2111 = vpow.pop %v2110
        %v2112 = vmul.f32 %v2047, 1.442695
        %v2113 = vpow.pop %v2112
        %v2114 = vmul.f32 %v2048, 1.442695
        %v2115 = vpow.pop %v2114
        %v2116 = vmul.f32 %v2049, 1.442695
        %v2117 = vpow.pop %v2116
        %v2118 = vmul.f32 %v2050, 1.442695
        %v2119 = vpow.pop %v2118
        %v2120 = vmul.f32 %v2051, 1.442695
        %v2121 = vpow.pop %v2120
        %v2122 = vmul.f32 %v2052, 1.442695
        %v2123 = vpow.pop %v2122
        %v2124 = vmul.f32 %v2053, 1.442695
        %v2125 = vpow.pop %v2124
        %v2126 = vmul.f32 %v2054, 1.442695
        %v2127 = vpow.pop %v2126
        %v2128 = vmul.f32 %v2055, 1.442695
        %v2129 = vpow.pop %v2128
        %v2130 = vmul.f32 %v2056, 1.442695
        %v2131 = vpow.pop %v2130
        %v2132 = vmul.f32 %v2057, 1.442695
        %v2133 = vpow.pop %v2132
        %v2134 = vmul.f32 %v2058, 1.442695
        %v2135 = vpow.pop %v2134
        %v2136 = vmul.f32 %v2059, 1.442695
        %v2137 = vpow.pop %v2136
        %v2138 = vmul.f32 %v2060, 1.442695
        %v2139 = vpow.pop %v2138
        %v2140 = vmul.f32 %v2061, 1.442695
        %v2141 = vpow.pop %v2140
        %v2142 = vmul.f32 %v2062, 1.442695
        %v2143 = vpow.pop %v2142
        %v2144 = vmul.f32 %v2063, 1.442695
        %v2145 = vpow.pop %v2144
        %v2146 = vmul.f32 %v2064, 1.442695
        %v2147 = vpow.pop %v2146
        %v2148 = vmul.f32 %v2065, 1.442695
        %v2149 = vpow.pop %v2148
        %v2150 = vmul.f32 %v2066, 1.442695
        %v2151 = vpow.pop %v2150
        %v2152 = vmul.f32 %v2067, 1.442695
        %v2153 = vpow.pop %v2152
        %v2154 = vmul.f32 %v2068, 1.442695
        %v2155 = vpow.pop %v2154
        %v2156 = vmul.f32 %v2069, 1.442695
        %v2157 = vpow.pop %v2156
        %v2158 = vmul.f32 %v2070, 1.442695
        %v2159 = vpow.pop %v2158
        %v2160 = vmul.f32 %v2071, 1.442695
        %v2161 = vpow.pop %v2160
        %v2162 = vmul.f32 %v2072, 1.442695
        %v2163 = vpow.pop %v2162
        %v2164 = vmul.f32 %v2073, 1.442695
        %v2165 = vpow.pop %v2164
        %v2166 = vmul.f32 %v2074, 1.442695
        %v2167 = vpow.pop %v2166
        %v2168 = vmul.f32 %v2075, 1.442695
        %v2169 = vpow.pop %v2168
        %v2170 = vmul.f32 %v2076, 1.442695
        %v2171 = vpow.pop %v2170
        %v2172 = vmul.f32 %v2077, 1.442695
        %v2173 = vpow.pop %v2172
        %v2174 = vmul.f32 %v2078, 1.442695
        %v2175 = vpow.pop %v2174
        %v2176 = vmul.f32 %v2079, 1.442695
        %v2177 = vpow.pop %v2176
        %v2178 = vmul.f32 %v2080, 1.442695
        %v2179 = vpow.pop %v2178
        %v2180 = vmul.f32 %v2081, 1.442695
        %v2181 = vpow.pop %v2180
        %v2182 = vmul.f32 %v2082, 1.442695
        %v2183 = vpow.pop %v2182
        %v2184 = vmul.f32 %v2083, 1.442695
        %v2185 = vpow.pop %v2184
        %v2186 = vmul.f32 %v2084, 1.442695
        %v2187 = vpow.pop %v2186
        %v2188 = vmul.f32 %v2085, 1.442695
        %v2189 = vpow.pop %v2188
        %v2190 = vmul.f32 %v2086, 1.442695
        %v2191 = vpow.pop %v2190
        %v2192 = vmul.f32 %v2087, 1.442695
        %v2193 = vpow.pop %v2192
        %v2194 = vmul.f32 %v2088, 1.442695
        %v2195 = vpow.pop %v2194
        %v2196 = vmul.f32 %v2089, 1.442695
        %v2197 = vpow.pop %v2196
        %v2198 = vmul.f32 %v2090, 1.442695
        %v2199 = vpow.pop %v2198
        %v2200 = vmul.f32 %v2091, 1.442695
        %v2201 = vpow.pop %v2200
        %v2202 = vmul.f32 %v2092, 1.442695
        %v2203 = vpow.pop %v2202
        %v2204 = vmul.f32 %v2093, 1.442695
        %v2205 = vpow.pop %v2204
        %v2206 = vmul.f32 %v2094, 1.442695
        %v2207 = vpow.pop %v2206
        %v2208 = vmul.f32 %v2095, 1.442695
        %v2209 = vpow.pop %v2208
        %v2210 = vmul.f32 %v2096, 1.442695
        %v2211 = vpow.pop %v2210
        %v2212 = vmul.f32 %v2097, 1.442695
        %v2213 = vpow.pop %v2212
        %v2214 = vmul.f32 %v2098, 1.442695
        %v2215 = vpow.pop %v2214
        %v2216 = vmul.f32 %v2099, 1.442695
        %v2217 = vpow.pop %v2216
        %v2218 = vmul.f32 %v2100, 1.442695
        %v2219 = vpow.pop %v2218
        %v2220 = vmul.f32 %v2101, 1.442695
        %v2221 = vpow.pop %v2220
        %v2222 = vmul.f32 %v2102, 1.442695
        %v2223 = vpow.pop %v2222
        %v2224 = vmul.f32 %v2103, 1.442695
        %v2225 = vpow.pop %v2224
        %v2226 = vmul.f32 %v2104, 1.442695
        %v2227 = vpow.pop %v2226
        %v2228 = vmul.f32 %v2105, 1.442695
        %v2229 = vpow.pop %v2228
        %v2230 = vmul.f32 %v2106, 1.442695
        %v2231 = vpow.pop %v2230
        %v2232 = vmul.f32 %v2107, 1.442695
        %v2233 = vpow.pop %v2232
        %v2234 = vmul.f32 %v2108, 1.442695
        %v2235 = vpow.pop %v2234
        %v2236 = vmul.f32 %v2109, 1.442695
        %v2237 = vpow.pop %v2236
        %2238 = vadd.xlane.f32.xlu0 %v2111
        %v2239 = vpop.xlane.xlu0 %2238
        %2240 = vadd.xlane.f32.xlu0 %v2113
        %v2241 = vpop.xlane.xlu0 %2240
        %2242 = vadd.xlane.f32.xlu0 %v2115
        %v2243 = vpop.xlane.xlu0 %2242
        %2244 = vadd.xlane.f32.xlu0 %v2117
        %v2245 = vpop.xlane.xlu0 %2244
        %2246 = vadd.xlane.f32.xlu0 %v2119
        %v2247 = vpop.xlane.xlu0 %2246
        %2248 = vadd.xlane.f32.xlu0 %v2121
        %v2249 = vpop.xlane.xlu0 %2248
        %2250 = vadd.xlane.f32.xlu0 %v2123
        %v2251 = vpop.xlane.xlu0 %2250
        %2252 = vadd.xlane.f32.xlu0 %v2125
        %v2253 = vpop.xlane.xlu0 %2252
        %2254 = vadd.xlane.f32.xlu0 %v2127
        %v2255 = vpop.xlane.xlu0 %2254
        %2256 = vadd.xlane.f32.xlu0 %v2129
        %v2257 = vpop.xlane.xlu0 %2256
        %2258 = vadd.xlane.f32.xlu0 %v2131
        %v2259 = vpop.xlane.xlu0 %2258
        %2260 = vadd.xlane.f32.xlu0 %v2133
        %v2261 = vpop.xlane.xlu0 %2260
        %2262 = vadd.xlane.f32.xlu0 %v2135
        %v2263 = vpop.xlane.xlu0 %2262
        %2264 = vadd.xlane.f32.xlu0 %v2137
        %v2265 = vpop.xlane.xlu0 %2264
        %2266 = vadd.xlane.f32.xlu0 %v2139
        %v2267 = vpop.xlane.xlu0 %2266
        %2268 = vadd.xlane.f32.xlu0 %v2141
        %v2269 = vpop.xlane.xlu0 %2268
        %2270 = vadd.xlane.f32.xlu0 %v2143
        %v2271 = vpop.xlane.xlu0 %2270
        %2272 = vadd.xlane.f32.xlu0 %v2145
        %v2273 = vpop.xlane.xlu0 %2272
        %2274 = vadd.xlane.f32.xlu0 %v2147
        %v2275 = vpop.xlane.xlu0 %2274
        %2276 = vadd.xlane.f32.xlu0 %v2149
        %v2277 = vpop.xlane.xlu0 %2276
        %2278 = vadd.xlane.f32.xlu0 %v2151
        %v2279 = vpop.xlane.xlu0 %2278
        %2280 = vadd.xlane.f32.xlu0 %v2153
        %v2281 = vpop.xlane.xlu0 %2280
        %2282 = vadd.xlane.f32.xlu0 %v2155
        %v2283 = vpop.xlane.xlu0 %2282
        %2284 = vadd.xlane.f32.xlu0 %v2157
        %v2285 = vpop.xlane.xlu0 %2284
        %2286 = vadd.xlane.f32.xlu0 %v2159
        %v2287 = vpop.xlane.xlu0 %2286
        %2288 = vadd.xlane.f32.xlu0 %v2161
        %v2289 = vpop.xlane.xlu0 %2288
        %2290 = vadd.xlane.f32.xlu0 %v2163
        %v2291 = vpop.xlane.xlu0 %2290
        %2292 = vadd.xlane.f32.xlu0 %v2165
        %v2293 = vpop.xlane.xlu0 %2292
        %2294 = vadd.xlane.f32.xlu0 %v2167
        %v2295 = vpop.xlane.xlu0 %2294
        %2296 = vadd.xlane.f32.xlu0 %v2169
        %v2297 = vpop.xlane.xlu0 %2296
        %2298 = vadd.xlane.f32.xlu0 %v2171
        %v2299 = vpop.xlane.xlu0 %2298
        %2300 = vadd.xlane.f32.xlu0 %v2173
        %v2301 = vpop.xlane.xlu0 %2300
        %2302 = vadd.xlane.f32.xlu0 %v2175
        %v2303 = vpop.xlane.xlu0 %2302
        %2304 = vadd.xlane.f32.xlu0 %v2177
        %v2305 = vpop.xlane.xlu0 %2304
        %2306 = vadd.xlane.f32.xlu0 %v2179
        %v2307 = vpop.xlane.xlu0 %2306
        %2308 = vadd.xlane.f32.xlu0 %v2181
        %v2309 = vpop.xlane.xlu0 %2308
        %2310 = vadd.xlane.f32.xlu0 %v2183
        %v2311 = vpop.xlane.xlu0 %2310
        %2312 = vadd.xlane.f32.xlu0 %v2185
        %v2313 = vpop.xlane.xlu0 %2312
        %2314 = vadd.xlane.f32.xlu0 %v2187
        %v2315 = vpop.xlane.xlu0 %2314
        %2316 = vadd.xlane.f32.xlu0 %v2189
        %v2317 = vpop.xlane.xlu0 %2316
        %2318 = vadd.xlane.f32.xlu0 %v2191
        %v2319 = vpop.xlane.xlu0 %2318
        %2320 = vadd.xlane.f32.xlu0 %v2193
        %v2321 = vpop.xlane.xlu0 %2320
        %2322 = vadd.xlane.f32.xlu0 %v2195
        %v2323 = vpop.xlane.xlu0 %2322
        %2324 = vadd.xlane.f32.xlu0 %v2197
        %v2325 = vpop.xlane.xlu0 %2324
        %2326 = vadd.xlane.f32.xlu0 %v2199
        %v2327 = vpop.xlane.xlu0 %2326
        %2328 = vadd.xlane.f32.xlu0 %v2201
        %v2329 = vpop.xlane.xlu0 %2328
        %2330 = vadd.xlane.f32.xlu0 %v2203
        %v2331 = vpop.xlane.xlu0 %2330
        %2332 = vadd.xlane.f32.xlu0 %v2205
        %v2333 = vpop.xlane.xlu0 %2332
        %2334 = vadd.xlane.f32.xlu0 %v2207
        %v2335 = vpop.xlane.xlu0 %2334
        %2336 = vadd.xlane.f32.xlu0 %v2209
        %v2337 = vpop.xlane.xlu0 %2336
        %2338 = vadd.xlane.f32.xlu0 %v2211
        %v2339 = vpop.xlane.xlu0 %2338
        %2340 = vadd.xlane.f32.xlu0 %v2213
        %v2341 = vpop.xlane.xlu0 %2340
        %2342 = vadd.xlane.f32.xlu0 %v2215
        %v2343 = vpop.xlane.xlu0 %2342
        %2344 = vadd.xlane.f32.xlu0 %v2217
        %v2345 = vpop.xlane.xlu0 %2344
        %2346 = vadd.xlane.f32.xlu0 %v2219
        %v2347 = vpop.xlane.xlu0 %2346
        %2348 = vadd.xlane.f32.xlu0 %v2221
        %v2349 = vpop.xlane.xlu0 %2348
        %2350 = vadd.xlane.f32.xlu0 %v2223
        %v2351 = vpop.xlane.xlu0 %2350
        %2352 = vadd.xlane.f32.xlu0 %v2225
        %v2353 = vpop.xlane.xlu0 %2352
        %2354 = vadd.xlane.f32.xlu0 %v2227
        %v2355 = vpop.xlane.xlu0 %2354
        %2356 = vadd.xlane.f32.xlu0 %v2229
        %v2357 = vpop.xlane.xlu0 %2356
        %2358 = vadd.xlane.f32.xlu0 %v2231
        %v2359 = vpop.xlane.xlu0 %2358
        %2360 = vadd.xlane.f32.xlu0 %v2233
        %v2361 = vpop.xlane.xlu0 %2360
        %2362 = vadd.xlane.f32.xlu0 %v2235
        %v2363 = vpop.xlane.xlu0 %2362
        %2364 = vadd.xlane.f32.xlu0 %v2237
        %v2365 = vpop.xlane.xlu0 %2364
        %v2366 = vrcp.pop %v2239
        %v2367 = vrcp.pop %v2241
        %v2368 = vrcp.pop %v2243
        %v2369 = vrcp.pop %v2245
        %v2370 = vrcp.pop %v2247
        %v2371 = vrcp.pop %v2249
        %v2372 = vrcp.pop %v2251
        %v2373 = vrcp.pop %v2253
        %v2374 = vrcp.pop %v2255
        %v2375 = vrcp.pop %v2257
        %v2376 = vrcp.pop %v2259
        %v2377 = vrcp.pop %v2261
        %v2378 = vrcp.pop %v2263
        %v2379 = vrcp.pop %v2265
        %v2380 = vrcp.pop %v2267
        %v2381 = vrcp.pop %v2269
        %v2382 = vrcp.pop %v2271
        %v2383 = vrcp.pop %v2273
        %v2384 = vrcp.pop %v2275
        %v2385 = vrcp.pop %v2277
        %v2386 = vrcp.pop %v2279
        %v2387 = vrcp.pop %v2281
        %v2388 = vrcp.pop %v2283
        %v2389 = vrcp.pop %v2285
        %v2390 = vrcp.pop %v2287
        %v2391 = vrcp.pop %v2289
        %v2392 = vrcp.pop %v2291
        %v2393 = vrcp.pop %v2293
        %v2394 = vrcp.pop %v2295
        %v2395 = vrcp.pop %v2297
        %v2396 = vrcp.pop %v2299
        %v2397 = vrcp.pop %v2301
        %v2398 = vrcp.pop %v2303
        %v2399 = vrcp.pop %v2305
        %v2400 = vrcp.pop %v2307
        %v2401 = vrcp.pop %v2309
        %v2402 = vrcp.pop %v2311
        %v2403 = vrcp.pop %v2313
        %v2404 = vrcp.pop %v2315
        %v2405 = vrcp.pop %v2317
        %v2406 = vrcp.pop %v2319
        %v2407 = vrcp.pop %v2321
        %v2408 = vrcp.pop %v2323
        %v2409 = vrcp.pop %v2325
        %v2410 = vrcp.pop %v2327
        %v2411 = vrcp.pop %v2329
        %v2412 = vrcp.pop %v2331
        %v2413 = vrcp.pop %v2333
        %v2414 = vrcp.pop %v2335
        %v2415 = vrcp.pop %v2337
        %v2416 = vrcp.pop %v2339
        %v2417 = vrcp.pop %v2341
        %v2418 = vrcp.pop %v2343
        %v2419 = vrcp.pop %v2345
        %v2420 = vrcp.pop %v2347
        %v2421 = vrcp.pop %v2349
        %v2422 = vrcp.pop %v2351
        %v2423 = vrcp.pop %v2353
        %v2424 = vrcp.pop %v2355
        %v2425 = vrcp.pop %v2357
        %v2426 = vrcp.pop %v2359
        %v2427 = vrcp.pop %v2361
        %v2428 = vrcp.pop %v2363
        %v2429 = vrcp.pop %v2365
        %v2430 = vmul.f32 %v2111, %v2366
        %v2431 = vmul.f32 %v2113, %v2367
        %v2432 = vmul.f32 %v2115, %v2368
        %v2433 = vmul.f32 %v2117, %v2369
        %v2434 = vmul.f32 %v2119, %v2370
        %v2435 = vmul.f32 %v2121, %v2371
        %v2436 = vmul.f32 %v2123, %v2372
        %v2437 = vmul.f32 %v2125, %v2373
        %v2438 = vmul.f32 %v2127, %v2374
        %v2439 = vmul.f32 %v2129, %v2375
        %v2440 = vmul.f32 %v2131, %v2376
        %v2441 = vmul.f32 %v2133, %v2377
        %v2442 = vmul.f32 %v2135, %v2378
        %v2443 = vmul.f32 %v2137, %v2379
        %v2444 = vmul.f32 %v2139, %v2380
        %v2445 = vmul.f32 %v2141, %v2381
        %v2446 = vmul.f32 %v2143, %v2382
        %v2447 = vmul.f32 %v2145, %v2383
        %v2448 = vmul.f32 %v2147, %v2384
        %v2449 = vmul.f32 %v2149, %v2385
        %v2450 = vmul.f32 %v2151, %v2386
        %v2451 = vmul.f32 %v2153, %v2387
        %v2452 = vmul.f32 %v2155, %v2388
        %v2453 = vmul.f32 %v2157, %v2389
        %v2454 = vmul.f32 %v2159, %v2390
        %v2455 = vmul.f32 %v2161, %v2391
        %v2456 = vmul.f32 %v2163, %v2392
        %v2457 = vmul.f32 %v2165, %v2393
        %v2458 = vmul.f32 %v2167, %v2394
        %v2459 = vmul.f32 %v2169, %v2395
        %v2460 = vmul.f32 %v2171, %v2396
        %v2461 = vmul.f32 %v2173, %v2397
        %v2462 = vmul.f32 %v2175, %v2398
        %v2463 = vmul.f32 %v2177, %v2399
        %v2464 = vmul.f32 %v2179, %v2400
        %v2465 = vmul.f32 %v2181, %v2401
        %v2466 = vmul.f32 %v2183, %v2402
        %v2467 = vmul.f32 %v2185, %v2403
        %v2468 = vmul.f32 %v2187, %v2404
        %v2469 = vmul.f32 %v2189, %v2405
        %v2470 = vmul.f32 %v2191, %v2406
        %v2471 = vmul.f32 %v2193, %v2407
        %v2472 = vmul.f32 %v2195, %v2408
        %v2473 = vmul.f32 %v2197, %v2409
        %v2474 = vmul.f32 %v2199, %v2410
        %v2475 = vmul.f32 %v2201, %v2411
        %v2476 = vmul.f32 %v2203, %v2412
        %v2477 = vmul.f32 %v2205, %v2413
        %v2478 = vmul.f32 %v2207, %v2414
        %v2479 = vmul.f32 %v2209, %v2415
        %v2480 = vmul.f32 %v2211, %v2416
        %v2481 = vmul.f32 %v2213, %v2417
        %v2482 = vmul.f32 %v2215, %v2418
        %v2483 = vmul.f32 %v2217, %v2419
        %v2484 = vmul.f32 %v2219, %v2420
        %v2485 = vmul.f32 %v2221, %v2421
        %v2486 = vmul.f32 %v2223, %v2422
        %v2487 = vmul.f32 %v2225, %v2423
        %v2488 = vmul.f32 %v2227, %v2424
        %v2489 = vmul.f32 %v2229, %v2425
        %v2490 = vmul.f32 %v2231, %v2426
        %v2491 = vmul.f32 %v2233, %v2427
        %v2492 = vmul.f32 %v2235, %v2428
        %v2493 = vmul.f32 %v2237, %v2429
        %v2494 = vpack.c.bf16 %v2431, %v2430
        %v2495 = vpack.c.bf16 %v2433, %v2432
        %v2496 = vpack.c.bf16 %v2435, %v2434
        %v2497 = vpack.c.bf16 %v2437, %v2436
        %v2498 = vpack.c.bf16 %v2439, %v2438
        %v2499 = vpack.c.bf16 %v2441, %v2440
        %v2500 = vpack.c.bf16 %v2443, %v2442
        %v2501 = vpack.c.bf16 %v2445, %v2444
        %v2502 = vpack.c.bf16 %v2447, %v2446
        %v2503 = vpack.c.bf16 %v2449, %v2448
        %v2504 = vpack.c.bf16 %v2451, %v2450
        %v2505 = vpack.c.bf16 %v2453, %v2452
        %v2506 = vpack.c.bf16 %v2455, %v2454
        %v2507 = vpack.c.bf16 %v2457, %v2456
        %v2508 = vpack.c.bf16 %v2459, %v2458
        %v2509 = vpack.c.bf16 %v2461, %v2460
        %v2510 = vpack.c.bf16 %v2463, %v2462
        %v2511 = vpack.c.bf16 %v2465, %v2464
        %v2512 = vpack.c.bf16 %v2467, %v2466
        %v2513 = vpack.c.bf16 %v2469, %v2468
        %v2514 = vpack.c.bf16 %v2471, %v2470
        %v2515 = vpack.c.bf16 %v2473, %v2472
        %v2516 = vpack.c.bf16 %v2475, %v2474
        %v2517 = vpack.c.bf16 %v2477, %v2476
        %v2518 = vpack.c.bf16 %v2479, %v2478
        %v2519 = vpack.c.bf16 %v2481, %v2480
        %v2520 = vpack.c.bf16 %v2483, %v2482
        %v2521 = vpack.c.bf16 %v2485, %v2484
        %v2522 = vpack.c.bf16 %v2487, %v2486
        %v2523 = vpack.c.bf16 %v2489, %v2488
        %v2524 = vpack.c.bf16 %v2491, %v2490
        %v2525 = vpack.c.bf16 %v2493, %v2492
        %2526 = vmatprep.subr.bf16.mxu0 0
        %2527 = vmatpush1.bf16.msra.mxu0 %v1305
        %2528 = vmatprep.subr.bf16.mxu0 0
        %2529 = vmatpush1.bf16.msra.mxu0 %v1306
        %2530 = vmatprep.subr.bf16.mxu0 0
        %2531 = vmatpush1.bf16.msra.mxu0 %v1307
        %2532 = vmatprep.subr.bf16.mxu0 0
        %2533 = vmatpush1.bf16.msra.mxu0 %v1308
        %2534 = vmatprep.subr.bf16.mxu0 0
        %2535 = vmatpush1.bf16.msra.mxu0 %v1309
        %2536 = vmatprep.subr.bf16.mxu0 0
        %2537 = vmatpush1.bf16.msra.mxu0 %v1310
        %2538 = vmatprep.subr.bf16.mxu0 0
        %2539 = vmatpush1.bf16.msra.mxu0 %v1311
        %2540 = vmatprep.subr.bf16.mxu0 0
        %2541 = vmatpush1.bf16.msra.mxu0 %v1312
        %2542 = vmatprep.subr.bf16.mxu0 0
        %2543 = vmatpush1.bf16.msra.mxu0 0
        %2544 = vmatprep.subr.bf16.mxu0 0
        %2545 = vmatpush1.bf16.msra.mxu0 0
        %2546 = vmatprep.subr.bf16.mxu0 0
        %2547 = vmatpush1.bf16.msra.mxu0 0
        %2548 = vmatprep.subr.bf16.mxu0 0
        %2549 = vmatpush1.bf16.msra.mxu0 0
        %2550 = vmatprep.subr.bf16.mxu0 0
        %2551 = vmatpush1.bf16.msra.mxu0 0
        %2552 = vmatprep.subr.bf16.mxu0 0
        %2553 = vmatpush1.bf16.msra.mxu0 0
        %2554 = vmatprep.subr.bf16.mxu0 0
        %2555 = vmatpush1.bf16.msra.mxu0 0
        %2556 = vmatprep.subr.bf16.mxu0 0
        %2557 = vmatpush1.bf16.msra.mxu0 0
        %2558 = vmatprep.mubr.bf16.mxu0 0
        %2559 = vmatmul.mubr.bf16.gmra.mrb[0].mxu0 %v2494
        %v2560 = vpop.f32.mrb[0].mxu0
        %v2561 = vadd.f32 0.0, %v2560
        %v2562 = vpop.f32.mrb[0].mxu0
        %v2563 = vpop.f32.mrb[0].mxu0
        %v2564 = vadd.f32 0.0, %v2563
        %v2565 = vpop.f32.mrb[0].mxu0
        %2566 = vmatprep.mubr.bf16.mxu0 0
        %2567 = vmatmul.mubr.bf16.gmra.mrb[0].mxu0 %v2495
        %v2568 = vpop.f32.mrb[0].mxu0
        %v2569 = vadd.f32 0.0, %v2568
        %v2570 = vpop.f32.mrb[0].mxu0
        %v2571 = vpop.f32.mrb[0].mxu0
        %v2572 = vadd.f32 0.0, %v2571
        %v2573 = vpop.f32.mrb[0].mxu0
        %2574 = vmatprep.mubr.bf16.mxu0 0
        %2575 = vmatmul.mubr.bf16.gmra.mrb[0].mxu0 %v2496
        %v2576 = vpop.f32.mrb[0].mxu0
        %v2577 = vadd.f32 0.0, %v2576
        %v2578 = vpop.f32.mrb[0].mxu0
        %v2579 = vpop.f32.mrb[0].mxu0
        %v2580 = vadd.f32 0.0, %v2579
        %v2581 = vpop.f32.mrb[0].mxu0
        %2582 = vmatprep.mubr.bf16.mxu0 0
        %2583 = vmatmul.mubr.bf16.gmra.mrb[0].mxu0 %v2497
        %v2584 = vpop.f32.mrb[0].mxu0
        %v2585 = vadd.f32 0.0, %v2584
        %v2586 = vpop.f32.mrb[0].mxu0
        %v2587 = vpop.f32.mrb[0].mxu0
        %v2588 = vadd.f32 0.0, %v2587
        %v2589 = vpop.f32.mrb[0].mxu0
        %2590 = vmatprep.mubr.bf16.mxu0 0
        %2591 = vmatmul.mubr.bf16.gmra.mrb[0].mxu0 %v2498
        %v2592 = vpop.f32.mrb[0].mxu0
        %v2593 = vadd.f32 0.0, %v2592
        %v2594 = vpop.f32.mrb[0].mxu0
        %v2595 = vpop.f32.mrb[0].mxu0
        %v2596 = vadd.f32 0.0, %v2595
        %v2597 = vpop.f32.mrb[0].mxu0
        %2598 = vmatprep.mubr.bf16.mxu0 0
        %2599 = vmatmul.mubr.bf16.gmra.mrb[0].mxu0 %v2499
        %v2600 = vpop.f32.mrb[0].mxu0
        %v2601 = vadd.f32 0.0, %v2600
        %v2602 = vpop.f32.mrb[0].mxu0
        %v2603 = vpop.f32.mrb[0].mxu0
        %v2604 = vadd.f32 0.0, %v2603
        %v2605 = vpop.f32.mrb[0].mxu0
        %2606 = vmatprep.mubr.bf16.mxu0 0
        %2607 = vmatmul.mubr.bf16.gmra.mrb[0].mxu0 %v2500
        %v2608 = vpop.f32.mrb[0].mxu0
        %v2609 = vadd.f32 0.0, %v2608
        %v2610 = vpop.f32.mrb[0].mxu0
        %v2611 = vpop.f32.mrb[0].mxu0
        %v2612 = vadd.f32 0.0, %v2611
        %v2613 = vpop.f32.mrb[0].mxu0
        %2614 = vmatprep.mubr.bf16.mxu0 0
        %2615 = vmatmul.mubr.bf16.gmra.mrb[0].mxu0 %v2501
        %v2616 = vpop.f32.mrb[0].mxu0
        %v2617 = vadd.f32 0.0, %v2616
        %v2618 = vpop.f32.mrb[0].mxu0
        %v2619 = vpop.f32.mrb[0].mxu0
        %v2620 = vadd.f32 0.0, %v2619
        %v2621 = vpop.f32.mrb[0].mxu0
        %2622 = vdwg.mxu0
        %2623 = vmatprep.subr.bf16.mxu0 0
        %2624 = vmatpush1.bf16.msra.mxu0 %v1313
        %2625 = vmatprep.subr.bf16.mxu0 0
        %2626 = vmatpush1.bf16.msra.mxu0 %v1314
        %2627 = vmatprep.subr.bf16.mxu0 0
        %2628 = vmatpush1.bf16.msra.mxu0 %v1315
        %2629 = vmatprep.subr.bf16.mxu0 0
        %2630 = vmatpush1.bf16.msra.mxu0 %v1316
        %2631 = vmatprep.subr.bf16.mxu0 0
        %2632 = vmatpush1.bf16.msra.mxu0 %v1317
        %2633 = vmatprep.subr.bf16.mxu0 0
        %2634 = vmatpush1.bf16.msra.mxu0 %v1318
        %2635 = vmatprep.subr.bf16.mxu0 0
        %2636 = vmatpush1.bf16.msra.mxu0 %v1319
        %2637 = vmatprep.subr.bf16.mxu0 0
        %2638 = vmatpush1.bf16.msra.mxu0 %v1320
        %2639 = vmatprep.subr.bf16.mxu0 0
        %2640 = vmatpush1.bf16.msra.mxu0 0
        %2641 = vmatprep.subr.bf16.mxu0 0
        %2642 = vmatpush1.bf16.msra.mxu0 0
        %2643 = vmatprep.subr.bf16.mxu0 0
        %2644 = vmatpush1.bf16.msra.mxu0 0
        %2645 = vmatprep.subr.bf16.mxu0 0
        %2646 = vmatpush1.bf16.msra.mxu0 0
        %2647 = vmatprep.subr.bf16.mxu0 0
        %2648 = vmatpush1.bf16.msra.mxu0 0
        %2649 = vmatprep.subr.bf16.mxu0 0
        %2650 = vmatpush1.bf16.msra.mxu0 0
        %2651 = vmatprep.subr.bf16.mxu0 0
        %2652 = vmatpush1.bf16.msra.mxu0 0
        %2653 = vmatprep.subr.bf16.mxu0 0
        %2654 = vmatpush1.bf16.msra.mxu0 0
        %2655 = vmatprep.mubr.bf16.mxu0 0
        %2656 = vmatmul.mubr.bf16.gmra.mrb[0].mxu0 %v2502
        %v2657 = vpop.f32.mrb[0].mxu0
        %v2658 = vadd.f32 0.0, %v2657
        %v2659 = vpop.f32.mrb[0].mxu0
        %v2660 = vpop.f32.mrb[0].mxu0
        %v2661 = vadd.f32 0.0, %v2660
        %v2662 = vpop.f32.mrb[0].mxu0
        %2663 = vmatprep.mubr.bf16.mxu0 0
        %2664 = vmatmul.mubr.bf16.gmra.mrb[0].mxu0 %v2503
        %v2665 = vpop.f32.mrb[0].mxu0
        %v2666 = vadd.f32 0.0, %v2665
        %v2667 = vpop.f32.mrb[0].mxu0
        %v2668 = vpop.f32.mrb[0].mxu0
        %v2669 = vadd.f32 0.0, %v2668
        %v2670 = vpop.f32.mrb[0].mxu0
        %2671 = vmatprep.mubr.bf16.mxu0 0
        %2672 = vmatmul.mubr.bf16.gmra.mrb[0].mxu0 %v2504
        %v2673 = vpop.f32.mrb[0].mxu0
        %v2674 = vadd.f32 0.0, %v2673
        %v2675 = vpop.f32.mrb[0].mxu0
        %v2676 = vpop.f32.mrb[0].mxu0
        %v2677 = vadd.f32 0.0, %v2676
        %v2678 = vpop.f32.mrb[0].mxu0
        %2679 = vmatprep.mubr.bf16.mxu0 0
        %2680 = vmatmul.mubr.bf16.gmra.mrb[0].mxu0 %v2505
        %v2681 = vpop.f32.mrb[0].mxu0
        %v2682 = vadd.f32 0.0, %v2681
        %v2683 = vpop.f32.mrb[0].mxu0
        %v2684 = vpop.f32.mrb[0].mxu0
        %v2685 = vadd.f32 0.0, %v2684
        %v2686 = vpop.f32.mrb[0].mxu0
        %2687 = vmatprep.mubr.bf16.mxu0 0
        %2688 = vmatmul.mubr.bf16.gmra.mrb[0].mxu0 %v2506
        %v2689 = vpop.f32.mrb[0].mxu0
        %v2690 = vadd.f32 0.0, %v2689
        %v2691 = vpop.f32.mrb[0].mxu0
        %v2692 = vpop.f32.mrb[0].mxu0
        %v2693 = vadd.f32 0.0, %v2692
        %v2694 = vpop.f32.mrb[0].mxu0
        %2695 = vmatprep.mubr.bf16.mxu0 0
        %2696 = vmatmul.mubr.bf16.gmra.mrb[0].mxu0 %v2507
        %v2697 = vpop.f32.mrb[0].mxu0
        %v2698 = vadd.f32 0.0, %v2697
        %v2699 = vpop.f32.mrb[0].mxu0
        %v2700 = vpop.f32.mrb[0].mxu0
        %v2701 = vadd.f32 0.0, %v2700
        %v2702 = vpop.f32.mrb[0].mxu0
        %2703 = vmatprep.mubr.bf16.mxu0 0
        %2704 = vmatmul.mubr.bf16.gmra.mrb[0].mxu0 %v2508
        %v2705 = vpop.f32.mrb[0].mxu0
        %v2706 = vadd.f32 0.0, %v2705
        %v2707 = vpop.f32.mrb[0].mxu0
        %v2708 = vpop.f32.mrb[0].mxu0
        %v2709 = vadd.f32 0.0, %v2708
        %v2710 = vpop.f32.mrb[0].mxu0
        %2711 = vmatprep.mubr.bf16.mxu0 0
        %2712 = vmatmul.mubr.bf16.gmra.mrb[0].mxu0 %v2509
        %v2713 = vpop.f32.mrb[0].mxu0
        %v2714 = vadd.f32 0.0, %v2713
        %v2715 = vpop.f32.mrb[0].mxu0
        %v2716 = vpop.f32.mrb[0].mxu0
        %v2717 = vadd.f32 0.0, %v2716
        %v2718 = vpop.f32.mrb[0].mxu0
        %2719 = vdwg.mxu0
        %2720 = vmatprep.subr.bf16.mxu0 0
        %2721 = vmatpush1.bf16.msra.mxu0 %v1321
        %2722 = vmatprep.subr.bf16.mxu0 0
        %2723 = vmatpush1.bf16.msra.mxu0 %v1322
        %2724 = vmatprep.subr.bf16.mxu0 0
        %2725 = vmatpush1.bf16.msra.mxu0 %v1323
        %2726 = vmatprep.subr.bf16.mxu0 0
        %2727 = vmatpush1.bf16.msra.mxu0 %v1324
        %2728 = vmatprep.subr.bf16.mxu0 0
        %2729 = vmatpush1.bf16.msra.mxu0 %v1325
        %2730 = vmatprep.subr.bf16.mxu0 0
        %2731 = vmatpush1.bf16.msra.mxu0 %v1326
        %2732 = vmatprep.subr.bf16.mxu0 0
        %2733 = vmatpush1.bf16.msra.mxu0 %v1327
        %2734 = vmatprep.subr.bf16.mxu0 0
        %2735 = vmatpush1.bf16.msra.mxu0 %v1328
        %2736 = vmatprep.subr.bf16.mxu0 0
        %2737 = vmatpush1.bf16.msra.mxu0 0
        %2738 = vmatprep.subr.bf16.mxu0 0
        %2739 = vmatpush1.bf16.msra.mxu0 0
        %2740 = vmatprep.subr.bf16.mxu0 0
        %2741 = vmatpush1.bf16.msra.mxu0 0
        %2742 = vmatprep.subr.bf16.mxu0 0
        %2743 = vmatpush1.bf16.msra.mxu0 0
        %2744 = vmatprep.subr.bf16.mxu0 0
        %2745 = vmatpush1.bf16.msra.mxu0 0
        %2746 = vmatprep.subr.bf16.mxu0 0
        %2747 = vmatpush1.bf16.msra.mxu0 0
        %2748 = vmatprep.subr.bf16.mxu0 0
        %2749 = vmatpush1.bf16.msra.mxu0 0
        %2750 = vmatprep.subr.bf16.mxu0 0
        %2751 = vmatpush1.bf16.msra.mxu0 0
        %2752 = vmatprep.mubr.bf16.mxu0 0
        %2753 = vmatmul.mubr.bf16.gmra.mrb[0].mxu0 %v2510
        %v2754 = vpop.f32.mrb[0].mxu0
        %v2755 = vadd.f32 0.0, %v2754
        %v2756 = vpop.f32.mrb[0].mxu0
        %v2757 = vpop.f32.mrb[0].mxu0
        %v2758 = vadd.f32 0.0, %v2757
        %v2759 = vpop.f32.mrb[0].mxu0
        %2760 = vmatprep.mubr.bf16.mxu0 0
        %2761 = vmatmul.mubr.bf16.gmra.mrb[0].mxu0 %v2511
        %v2762 = vpop.f32.mrb[0].mxu0
        %v2763 = vadd.f32 0.0, %v2762
        %v2764 = vpop.f32.mrb[0].mxu0
        %v2765 = vpop.f32.mrb[0].mxu0
        %v2766 = vadd.f32 0.0, %v2765
        %v2767 = vpop.f32.mrb[0].mxu0
        %2768 = vmatprep.mubr.bf16.mxu0 0
        %2769 = vmatmul.mubr.bf16.gmra.mrb[0].mxu0 %v2512
        %v2770 = vpop.f32.mrb[0].mxu0
        %v2771 = vadd.f32 0.0, %v2770
        %v2772 = vpop.f32.mrb[0].mxu0
        %v2773 = vpop.f32.mrb[0].mxu0
        %v2774 = vadd.f32 0.0, %v2773
        %v2775 = vpop.f32.mrb[0].mxu0
        %2776 = vmatprep.mubr.bf16.mxu0 0
        %2777 = vmatmul.mubr.bf16.gmra.mrb[0].mxu0 %v2513
        %v2778 = vpop.f32.mrb[0].mxu0
        %v2779 = vadd.f32 0.0, %v2778
        %v2780 = vpop.f32.mrb[0].mxu0
        %v2781 = vpop.f32.mrb[0].mxu0
        %v2782 = vadd.f32 0.0, %v2781
        %v2783 = vpop.f32.mrb[0].mxu0
        %2784 = vmatprep.mubr.bf16.mxu0 0
        %2785 = vmatmul.mubr.bf16.gmra.mrb[0].mxu0 %v2514
        %v2786 = vpop.f32.mrb[0].mxu0
        %v2787 = vadd.f32 0.0, %v2786
        %v2788 = vpop.f32.mrb[0].mxu0
        %v2789 = vpop.f32.mrb[0].mxu0
        %v2790 = vadd.f32 0.0, %v2789
        %v2791 = vpop.f32.mrb[0].mxu0
        %2792 = vmatprep.mubr.bf16.mxu0 0
        %2793 = vmatmul.mubr.bf16.gmra.mrb[0].mxu0 %v2515
        %v2794 = vpop.f32.mrb[0].mxu0
        %v2795 = vadd.f32 0.0, %v2794
        %v2796 = vpop.f32.mrb[0].mxu0
        %v2797 = vpop.f32.mrb[0].mxu0
        %v2798 = vadd.f32 0.0, %v2797
        %v2799 = vpop.f32.mrb[0].mxu0
        %2800 = vmatprep.mubr.bf16.mxu0 0
        %2801 = vmatmul.mubr.bf16.gmra.mrb[0].mxu0 %v2516
        %v2802 = vpop.f32.mrb[0].mxu0
        %v2803 = vadd.f32 0.0, %v2802
        %v2804 = vpop.f32.mrb[0].mxu0
        %v2805 = vpop.f32.mrb[0].mxu0
        %v2806 = vadd.f32 0.0, %v2805
        %v2807 = vpop.f32.mrb[0].mxu0
        %2808 = vmatprep.mubr.bf16.mxu0 0
        %2809 = vmatmul.mubr.bf16.gmra.mrb[0].mxu0 %v2517
        %v2810 = vpop.f32.mrb[0].mxu0
        %v2811 = vadd.f32 0.0, %v2810
        %v2812 = vpop.f32.mrb[0].mxu0
        %v2813 = vpop.f32.mrb[0].mxu0
        %v2814 = vadd.f32 0.0, %v2813
        %v2815 = vpop.f32.mrb[0].mxu0
        %2816 = vdwg.mxu0
        %2817 = vmatprep.subr.bf16.mxu0 0
        %2818 = vmatpush1.bf16.msra.mxu0 %v1329
        %2819 = vmatprep.subr.bf16.mxu0 0
        %2820 = vmatpush1.bf16.msra.mxu0 %v1330
        %2821 = vmatprep.subr.bf16.mxu0 0
        %2822 = vmatpush1.bf16.msra.mxu0 %v1331
        %2823 = vmatprep.subr.bf16.mxu0 0
        %2824 = vmatpush1.bf16.msra.mxu0 %v1332
        %2825 = vmatprep.subr.bf16.mxu0 0
        %2826 = vmatpush1.bf16.msra.mxu0 %v1333
        %2827 = vmatprep.subr.bf16.mxu0 0
        %2828 = vmatpush1.bf16.msra.mxu0 %v1334
        %2829 = vmatprep.subr.bf16.mxu0 0
        %2830 = vmatpush1.bf16.msra.mxu0 %v1335
        %2831 = vmatprep.subr.bf16.mxu0 0
        %2832 = vmatpush1.bf16.msra.mxu0 %v1336
        %2833 = vmatprep.subr.bf16.mxu0 0
        %2834 = vmatpush1.bf16.msra.mxu0 0
        %2835 = vmatprep.subr.bf16.mxu0 0
        %2836 = vmatpush1.bf16.msra.mxu0 0
        %2837 = vmatprep.subr.bf16.mxu0 0
        %2838 = vmatpush1.bf16.msra.mxu0 0
        %2839 = vmatprep.subr.bf16.mxu0 0
        %2840 = vmatpush1.bf16.msra.mxu0 0
        %2841 = vmatprep.subr.bf16.mxu0 0
        %2842 = vmatpush1.bf16.msra.mxu0 0
        %2843 = vmatprep.subr.bf16.mxu0 0
        %2844 = vmatpush1.bf16.msra.mxu0 0
        %2845 = vmatprep.subr.bf16.mxu0 0
        %2846 = vmatpush1.bf16.msra.mxu0 0
        %2847 = vmatprep.subr.bf16.mxu0 0
        %2848 = vmatpush1.bf16.msra.mxu0 0
        %2849 = vmatprep.mubr.bf16.mxu0 0
        %2850 = vmatmul.mubr.bf16.gmra.mrb[0].mxu0 %v2518
        %v2851 = vpop.f32.mrb[0].mxu0
        %v2852 = vadd.f32 0.0, %v2851
        %v2853 = vpop.f32.mrb[0].mxu0
        %v2854 = vpop.f32.mrb[0].mxu0
        %v2855 = vadd.f32 0.0, %v2854
        %v2856 = vpop.f32.mrb[0].mxu0
        %2857 = vmatprep.mubr.bf16.mxu0 0
        %2858 = vmatmul.mubr.bf16.gmra.mrb[0].mxu0 %v2519
        %v2859 = vpop.f32.mrb[0].mxu0
        %v2860 = vadd.f32 0.0, %v2859
        %v2861 = vpop.f32.mrb[0].mxu0
        %v2862 = vpop.f32.mrb[0].mxu0
        %v2863 = vadd.f32 0.0, %v2862
        %v2864 = vpop.f32.mrb[0].mxu0
        %2865 = vmatprep.mubr.bf16.mxu0 0
        %2866 = vmatmul.mubr.bf16.gmra.mrb[0].mxu0 %v2520
        %v2867 = vpop.f32.mrb[0].mxu0
        %v2868 = vadd.f32 0.0, %v2867
        %v2869 = vpop.f32.mrb[0].mxu0
        %v2870 = vpop.f32.mrb[0].mxu0
        %v2871 = vadd.f32 0.0, %v2870
        %v2872 = vpop.f32.mrb[0].mxu0
        %2873 = vmatprep.mubr.bf16.mxu0 0
        %2874 = vmatmul.mubr.bf16.gmra.mrb[0].mxu0 %v2521
        %v2875 = vpop.f32.mrb[0].mxu0
        %v2876 = vadd.f32 0.0, %v2875
        %v2877 = vpop.f32.mrb[0].mxu0
        %v2878 = vpop.f32.mrb[0].mxu0
        %v2879 = vadd.f32 0.0, %v2878
        %v2880 = vpop.f32.mrb[0].mxu0
        %2881 = vmatprep.mubr.bf16.mxu0 0
        %2882 = vmatmul.mubr.bf16.gmra.mrb[0].mxu0 %v2522
        %v2883 = vpop.f32.mrb[0].mxu0
        %v2884 = vadd.f32 0.0, %v2883
        %v2885 = vpop.f32.mrb[0].mxu0
        %v2886 = vpop.f32.mrb[0].mxu0
        %v2887 = vadd.f32 0.0, %v2886
        %v2888 = vpop.f32.mrb[0].mxu0
        %2889 = vmatprep.mubr.bf16.mxu0 0
        %2890 = vmatmul.mubr.bf16.gmra.mrb[0].mxu0 %v2523
        %v2891 = vpop.f32.mrb[0].mxu0
        %v2892 = vadd.f32 0.0, %v2891
        %v2893 = vpop.f32.mrb[0].mxu0
        %v2894 = vpop.f32.mrb[0].mxu0
        %v2895 = vadd.f32 0.0, %v2894
        %v2896 = vpop.f32.mrb[0].mxu0
        %2897 = vmatprep.mubr.bf16.mxu0 0
        %2898 = vmatmul.mubr.bf16.gmra.mrb[0].mxu0 %v2524
        %v2899 = vpop.f32.mrb[0].mxu0
        %v2900 = vadd.f32 0.0, %v2899
        %v2901 = vpop.f32.mrb[0].mxu0
        %v2902 = vpop.f32.mrb[0].mxu0
        %v2903 = vadd.f32 0.0, %v2902
        %v2904 = vpop.f32.mrb[0].mxu0
        %2905 = vmatprep.mubr.bf16.mxu0 0
        %2906 = vmatmul.mubr.bf16.gmra.mrb[0].mxu0 %v2525
        %v2907 = vpop.f32.mrb[0].mxu0
        %v2908 = vadd.f32 0.0, %v2907
        %v2909 = vpop.f32.mrb[0].mxu0
        %v2910 = vpop.f32.mrb[0].mxu0
        %v2911 = vadd.f32 0.0, %v2910
        %v2912 = vpop.f32.mrb[0].mxu0
        %2913 = vdwg.mxu0
        %2930 = vrot.lane.b32.xlu0 %v2658, 32
        %v2931 = vpop.permute.xlu0 %2930
        %2932 = vrot.lane.b32.xlu0 %v2661, 32
        %v2933 = vpop.permute.xlu0 %2932
        %2934 = vrot.lane.b32.xlu0 %v2666, 32
        %v2935 = vpop.permute.xlu0 %2934
        %2936 = vrot.lane.b32.xlu0 %v2669, 32
        %v2937 = vpop.permute.xlu0 %2936
        %2938 = vrot.lane.b32.xlu0 %v2674, 32
        %v2939 = vpop.permute.xlu0 %2938
        %2940 = vrot.lane.b32.xlu0 %v2677, 32
        %v2941 = vpop.permute.xlu0 %2940
        %2942 = vrot.lane.b32.xlu0 %v2682, 32
        %v2943 = vpop.permute.xlu0 %2942
        %2944 = vrot.lane.b32.xlu0 %v2685, 32
        %v2945 = vpop.permute.xlu0 %2944
        %2946 = vrot.lane.b32.xlu0 %v2690, 32
        %v2947 = vpop.permute.xlu0 %2946
        %2948 = vrot.lane.b32.xlu0 %v2693, 32
        %v2949 = vpop.permute.xlu0 %2948
        %2950 = vrot.lane.b32.xlu0 %v2698, 32
        %v2951 = vpop.permute.xlu0 %2950
        %2952 = vrot.lane.b32.xlu0 %v2701, 32
        %v2953 = vpop.permute.xlu0 %2952
        %2954 = vrot.lane.b32.xlu0 %v2706, 32
        %v2955 = vpop.permute.xlu0 %2954
        %2956 = vrot.lane.b32.xlu0 %v2709, 32
        %v2957 = vpop.permute.xlu0 %2956
        %2958 = vrot.lane.b32.xlu0 %v2714, 32
        %v2959 = vpop.permute.xlu0 %2958
        %2960 = vrot.lane.b32.xlu0 %v2717, 32
        %v2961 = vpop.permute.xlu0 %2960
        %2994 = vrot.lane.b32.xlu0 %v2755, 64
        %v2995 = vpop.permute.xlu0 %2994
        %2996 = vrot.lane.b32.xlu0 %v2758, 64
        %v2997 = vpop.permute.xlu0 %2996
        %2998 = vrot.lane.b32.xlu0 %v2763, 64
        %v2999 = vpop.permute.xlu0 %2998
        %3000 = vrot.lane.b32.xlu0 %v2766, 64
        %v3001 = vpop.permute.xlu0 %3000
        %3002 = vrot.lane.b32.xlu0 %v2771, 64
        %v3003 = vpop.permute.xlu0 %3002
        %3004 = vrot.lane.b32.xlu0 %v2774, 64
        %v3005 = vpop.permute.xlu0 %3004
        %3006 = vrot.lane.b32.xlu0 %v2779, 64
        %v3007 = vpop.permute.xlu0 %3006
        %3008 = vrot.lane.b32.xlu0 %v2782, 64
        %v3009 = vpop.permute.xlu0 %3008
        %3010 = vrot.lane.b32.xlu0 %v2787, 64
        %v3011 = vpop.permute.xlu0 %3010
        %3012 = vrot.lane.b32.xlu0 %v2790, 64
        %v3013 = vpop.permute.xlu0 %3012
        %3014 = vrot.lane.b32.xlu0 %v2795, 64
        %v3015 = vpop.permute.xlu0 %3014
        %3016 = vrot.lane.b32.xlu0 %v2798, 64
        %v3017 = vpop.permute.xlu0 %3016
        %3018 = vrot.lane.b32.xlu0 %v2803, 64
        %v3019 = vpop.permute.xlu0 %3018
        %3020 = vrot.lane.b32.xlu0 %v2806, 64
        %v3021 = vpop.permute.xlu0 %3020
        %3022 = vrot.lane.b32.xlu0 %v2811, 64
        %v3023 = vpop.permute.xlu0 %3022
        %3024 = vrot.lane.b32.xlu0 %v2814, 64
        %v3025 = vpop.permute.xlu0 %3024
        %3058 = vrot.lane.b32.xlu0 %v2852, 96
        %v3059 = vpop.permute.xlu0 %3058
        %3060 = vrot.lane.b32.xlu0 %v2855, 96
        %v3061 = vpop.permute.xlu0 %3060
        %3062 = vrot.lane.b32.xlu0 %v2860, 96
        %v3063 = vpop.permute.xlu0 %3062
        %3064 = vrot.lane.b32.xlu0 %v2863, 96
        %v3065 = vpop.permute.xlu0 %3064
        %3066 = vrot.lane.b32.xlu0 %v2868, 96
        %v3067 = vpop.permute.xlu0 %3066
        %3068 = vrot.lane.b32.xlu0 %v2871, 96
        %v3069 = vpop.permute.xlu0 %3068
        %3070 = vrot.lane.b32.xlu0 %v2876, 96
        %v3071 = vpop.permute.xlu0 %3070
        %3072 = vrot.lane.b32.xlu0 %v2879, 96
        %v3073 = vpop.permute.xlu0 %3072
        %3074 = vrot.lane.b32.xlu0 %v2884, 96
        %v3075 = vpop.permute.xlu0 %3074
        %3076 = vrot.lane.b32.xlu0 %v2887, 96
        %v3077 = vpop.permute.xlu0 %3076
        %3078 = vrot.lane.b32.xlu0 %v2892, 96
        %v3079 = vpop.permute.xlu0 %3078
        %3080 = vrot.lane.b32.xlu0 %v2895, 96
        %v3081 = vpop.permute.xlu0 %3080
        %3082 = vrot.lane.b32.xlu0 %v2900, 96
        %v3083 = vpop.permute.xlu0 %3082
        %3084 = vrot.lane.b32.xlu0 %v2903, 96
        %v3085 = vpop.permute.xlu0 %3084
        %3086 = vrot.lane.b32.xlu0 %v2908, 96
        %v3087 = vpop.permute.xlu0 %3086
        %3088 = vrot.lane.b32.xlu0 %v2911, 96
        %v3089 = vpop.permute.xlu0 %3088
        %v3106 = vsel %vm1337, %v2561, %v2931
        %v3107 = vsel %vm1337, %v2564, %v2933
        %v3108 = vsel %vm1337, %v2569, %v2935
        %v3109 = vsel %vm1337, %v2572, %v2937
        %v3110 = vsel %vm1337, %v2577, %v2939
        %v3111 = vsel %vm1337, %v2580, %v2941
        %v3112 = vsel %vm1337, %v2585, %v2943
        %v3113 = vsel %vm1337, %v2588, %v2945
        %v3114 = vsel %vm1337, %v2593, %v2947
        %v3115 = vsel %vm1337, %v2596, %v2949
        %v3116 = vsel %vm1337, %v2601, %v2951
        %v3117 = vsel %vm1337, %v2604, %v2953
        %v3118 = vsel %vm1337, %v2609, %v2955
        %v3119 = vsel %vm1337, %v2612, %v2957
        %v3120 = vsel %vm1337, %v2617, %v2959
        %v3121 = vsel %vm1337, %v2620, %v2961
        %vm3122 = vcmask 523264
        %v3123 = vsel %vm3122, %v3106, %v2995
        %v3124 = vsel %vm3122, %v3107, %v2997
        %v3125 = vsel %vm3122, %v3108, %v2999
        %v3126 = vsel %vm3122, %v3109, %v3001
        %v3127 = vsel %vm3122, %v3110, %v3003
        %v3128 = vsel %vm3122, %v3111, %v3005
        %v3129 = vsel %vm3122, %v3112, %v3007
        %v3130 = vsel %vm3122, %v3113, %v3009
        %v3131 = vsel %vm3122, %v3114, %v3011
        %v3132 = vsel %vm3122, %v3115, %v3013
        %v3133 = vsel %vm3122, %v3116, %v3015
        %v3134 = vsel %vm3122, %v3117, %v3017
        %v3135 = vsel %vm3122, %v3118, %v3019
        %v3136 = vsel %vm3122, %v3119, %v3021
        %v3137 = vsel %vm3122, %v3120, %v3023
        %v3138 = vsel %vm3122, %v3121, %v3025
        %vm3139 = vcmask 785408
        %v3140 = vsel %vm3139, %v3123, %v3059
        %v3141 = vsel %vm3139, %v3124, %v3061
        %v3142 = vsel %vm3139, %v3125, %v3063
        %v3143 = vsel %vm3139, %v3126, %v3065
        %v3144 = vsel %vm3139, %v3127, %v3067
        %v3145 = vsel %vm3139, %v3128, %v3069
        %v3146 = vsel %vm3139, %v3129, %v3071
        %v3147 = vsel %vm3139, %v3130, %v3073
        %v3148 = vsel %vm3139, %v3131, %v3075
        %v3149 = vsel %vm3139, %v3132, %v3077
        %v3150 = vsel %vm3139, %v3133, %v3079
        %v3151 = vsel %vm3139, %v3134, %v3081
        %v3152 = vsel %vm3139, %v3135, %v3083
        %v3153 = vsel %vm3139, %v3136, %v3085
        %v3154 = vsel %vm3139, %v3137, %v3087
        %v3155 = vsel %vm3139, %v3138, %v3089
        %v3156 = vpack.c.bf16 %v3141, %v3140
        %v3157 = vpack.c.bf16 %v3143, %v3142
        %v3158 = vpack.c.bf16 %v3145, %v3144
        %v3159 = vpack.c.bf16 %v3147, %v3146
        %v3160 = vpack.c.bf16 %v3149, %v3148
        %v3161 = vpack.c.bf16 %v3151, %v3150
        %v3162 = vpack.c.bf16 %v3153, %v3152
        %v3163 = vpack.c.bf16 %v3155, %v3154
        %v3164 = vld [vmem:[#allocation7] sm:$0xf]
        %v3165 = vld [vmem:[#allocation7 + $0x4] sm:$0xf]
        %v3166 = vld [vmem:[#allocation7 + $0x8] sm:$0xf]
        %v3167 = vld [vmem:[#allocation7 + $0xc] sm:$0xf]
        %v3168 = vld [vmem:[#allocation7 + $0x10] sm:$0xf]
        %v3169 = vld [vmem:[#allocation7 + $0x14] sm:$0xf]
        %v3170 = vld [vmem:[#allocation7 + $0x18] sm:$0xf]
        %v3171 = vld [vmem:[#allocation7 + $0x1c] sm:$0xf]
        %v3172 = vld [vmem:[#allocation7 + $0x20] sm:$0xf]
        %v3173 = vld [vmem:[#allocation7 + $0x24] sm:$0xf]
        %v3174 = vld [vmem:[#allocation7 + $0x28] sm:$0xf]
        %v3175 = vld [vmem:[#allocation7 + $0x2c] sm:$0xf]
        %v3176 = vld [vmem:[#allocation7 + $0x30] sm:$0xf]
        %v3177 = vld [vmem:[#allocation7 + $0x34] sm:$0xf]
        %v3178 = vld [vmem:[#allocation7 + $0x38] sm:$0xf]
        %v3179 = vld [vmem:[#allocation7 + $0x3c] sm:$0xf]
        %v3196 = vunpack.c.l.b16 %v3164
        %v3197 = vunpack.c.l.b16 %v3165
        %v3198 = vunpack.c.l.b16 %v3166
        %v3199 = vunpack.c.l.b16 %v3167
        %v3200 = vunpack.c.l.b16 %v3168
        %v3201 = vunpack.c.l.b16 %v3169
        %v3202 = vunpack.c.l.b16 %v3170
        %v3203 = vunpack.c.l.b16 %v3171
        %v3204 = vunpack.c.l.b16 %v3172
        %v3205 = vunpack.c.l.b16 %v3173
        %v3206 = vunpack.c.l.b16 %v3174
        %v3207 = vunpack.c.l.b16 %v3175
        %v3208 = vunpack.c.l.b16 %v3176
        %v3209 = vunpack.c.l.b16 %v3177
        %v3210 = vunpack.c.l.b16 %v3178
        %v3211 = vunpack.c.l.b16 %v3179
        %v3212 = vpack.c.b16 %v3197, %v3196
        %v3213 = vpack.c.b16 %v3199, %v3198
        %v3214 = vpack.c.b16 %v3201, %v3200
        %v3215 = vpack.c.b16 %v3203, %v3202
        %v3216 = vpack.c.b16 %v3205, %v3204
        %v3217 = vpack.c.b16 %v3207, %v3206
        %v3218 = vpack.c.b16 %v3209, %v3208
        %v3219 = vpack.c.b16 %v3211, %v3210
        %3228 = vmatprep.subr.bf16.mxu0 0
        %3229 = vmatpush1.bf16.msra.mxu0 %v3212
        %3230 = vmatprep.subr.bf16.mxu0 0
        %3231 = vmatpush1.bf16.msra.mxu0 %v3213
        %3232 = vmatprep.subr.bf16.mxu0 0
        %3233 = vmatpush1.bf16.msra.mxu0 %v3214
        %3234 = vmatprep.subr.bf16.mxu0 0
        %3235 = vmatpush1.bf16.msra.mxu0 %v3215
        %3236 = vmatprep.subr.bf16.mxu0 0
        %3237 = vmatpush1.bf16.msra.mxu0 %v3216
        %3238 = vmatprep.subr.bf16.mxu0 0
        %3239 = vmatpush1.bf16.msra.mxu0 %v3217
        %3240 = vmatprep.subr.bf16.mxu0 0
        %3241 = vmatpush1.bf16.msra.mxu0 %v3218
        %3242 = vmatprep.subr.bf16.mxu0 0
        %3243 = vmatpush1.bf16.msra.mxu0 %v3219
        %3244 = vmatprep.subr.bf16.mxu0 0
        %3245 = vmatpush1.bf16.msra.mxu0 0
        %3246 = vmatprep.subr.bf16.mxu0 0
        %3247 = vmatpush1.bf16.msra.mxu0 0
        %3248 = vmatprep.subr.bf16.mxu0 0
        %3249 = vmatpush1.bf16.msra.mxu0 0
        %3250 = vmatprep.subr.bf16.mxu0 0
        %3251 = vmatpush1.bf16.msra.mxu0 0
        %3252 = vmatprep.subr.bf16.mxu0 0
        %3253 = vmatpush1.bf16.msra.mxu0 0
        %3254 = vmatprep.subr.bf16.mxu0 0
        %3255 = vmatpush1.bf16.msra.mxu0 0
        %3256 = vmatprep.subr.bf16.mxu0 0
        %3257 = vmatpush1.bf16.msra.mxu0 0
        %3258 = vmatprep.subr.bf16.mxu0 0
        %3259 = vmatpush1.bf16.msra.mxu0 0
        %3260 = vmatprep.mubr.bf16.mxu0 0
        %3261 = vmatmul.mubr.bf16.gmra.mrb[0].mxu0 %v3156
        %v3262 = vpop.f32.mrb[0].mxu0
        %v3263 = vadd.f32 %v345, %v3262
        %v3264 = vpop.f32.mrb[0].mxu0
        %v3265 = vpop.f32.mrb[0].mxu0
        %v3266 = vadd.f32 %v345, %v3265
        %v3267 = vpop.f32.mrb[0].mxu0
        %3268 = vmatprep.mubr.bf16.mxu0 0
        %3269 = vmatmul.mubr.bf16.gmra.mrb[0].mxu0 %v3157
        %v3270 = vpop.f32.mrb[0].mxu0
        %v3271 = vadd.f32 %v345, %v3270
        %v3272 = vpop.f32.mrb[0].mxu0
        %v3273 = vpop.f32.mrb[0].mxu0
        %v3274 = vadd.f32 %v345, %v3273
        %v3275 = vpop.f32.mrb[0].mxu0
        %3276 = vmatprep.mubr.bf16.mxu0 0
        %3277 = vmatmul.mubr.bf16.gmra.mrb[0].mxu0 %v3158
        %v3278 = vpop.f32.mrb[0].mxu0
        %v3279 = vadd.f32 %v345, %v3278
        %v3280 = vpop.f32.mrb[0].mxu0
        %v3281 = vpop.f32.mrb[0].mxu0
        %v3282 = vadd.f32 %v345, %v3281
        %v3283 = vpop.f32.mrb[0].mxu0
        %3284 = vmatprep.mubr.bf16.mxu0 0
        %3285 = vmatmul.mubr.bf16.gmra.mrb[0].mxu0 %v3159
        %v3286 = vpop.f32.mrb[0].mxu0
        %v3287 = vadd.f32 %v345, %v3286
        %v3288 = vpop.f32.mrb[0].mxu0
        %v3289 = vpop.f32.mrb[0].mxu0
        %v3290 = vadd.f32 %v345, %v3289
        %v3291 = vpop.f32.mrb[0].mxu0
        %3292 = vmatprep.mubr.bf16.mxu0 0
        %3293 = vmatmul.mubr.bf16.gmra.mrb[0].mxu0 %v3160
        %v3294 = vpop.f32.mrb[0].mxu0
        %v3295 = vadd.f32 %v345, %v3294
        %v3296 = vpop.f32.mrb[0].mxu0
        %v3297 = vpop.f32.mrb[0].mxu0
        %v3298 = vadd.f32 %v345, %v3297
        %v3299 = vpop.f32.mrb[0].mxu0
        %3300 = vmatprep.mubr.bf16.mxu0 0
        %3301 = vmatmul.mubr.bf16.gmra.mrb[0].mxu0 %v3161
        %v3302 = vpop.f32.mrb[0].mxu0
        %v3303 = vadd.f32 %v345, %v3302
        %v3304 = vpop.f32.mrb[0].mxu0
        %v3305 = vpop.f32.mrb[0].mxu0
        %v3306 = vadd.f32 %v345, %v3305
        %v3307 = vpop.f32.mrb[0].mxu0
        %3308 = vmatprep.mubr.bf16.mxu0 0
        %3309 = vmatmul.mubr.bf16.gmra.mrb[0].mxu0 %v3162
        %v3310 = vpop.f32.mrb[0].mxu0
        %v3311 = vadd.f32 %v345, %v3310
        %v3312 = vpop.f32.mrb[0].mxu0
        %v3313 = vpop.f32.mrb[0].mxu0
        %v3314 = vadd.f32 %v345, %v3313
        %v3315 = vpop.f32.mrb[0].mxu0
        %3316 = vmatprep.mubr.bf16.mxu0 0
        %3317 = vmatmul.mubr.bf16.gmra.mrb[0].mxu0 %v3163
        %v3318 = vpop.f32.mrb[0].mxu0
        %v3319 = vadd.f32 %v345, %v3318
        %v3320 = vpop.f32.mrb[0].mxu0
        %v3321 = vpop.f32.mrb[0].mxu0
        %v3322 = vadd.f32 %v345, %v3321
        %v3323 = vpop.f32.mrb[0].mxu0
        %3324 = vdwg.mxu0
        %v3325 = vadd.f32 %v351, %v3263
        %v3326 = vadd.f32 %v352, %v3266
        %v3327 = vadd.f32 %v353, %v3271
        %v3328 = vadd.f32 %v354, %v3274
        %v3329 = vadd.f32 %v355, %v3279
        %v3330 = vadd.f32 %v356, %v3282
        %v3331 = vadd.f32 %v357, %v3287
        %v3332 = vadd.f32 %v358, %v3290
        %v3333 = vadd.f32 %v359, %v3295
        %v3334 = vadd.f32 %v360, %v3298
        %v3335 = vadd.f32 %v361, %v3303
        %v3336 = vadd.f32 %v362, %v3306
        %v3337 = vadd.f32 %v363, %v3311
        %v3338 = vadd.f32 %v364, %v3314
        %v3339 = vadd.f32 %v365, %v3319
        %v3340 = vadd.f32 %v366, %v3322
        %3341 = vadd.xlane.f32.xlu0 %v3325
        %v3342 = vpop.xlane.xlu0 %3341
        %3343 = vadd.xlane.f32.xlu0 %v3326
        %v3344 = vpop.xlane.xlu0 %3343
        %3345 = vadd.xlane.f32.xlu0 %v3327
        %v3346 = vpop.xlane.xlu0 %3345
        %3347 = vadd.xlane.f32.xlu0 %v3328
        %v3348 = vpop.xlane.xlu0 %3347
        %3349 = vadd.xlane.f32.xlu0 %v3329
        %v3350 = vpop.xlane.xlu0 %3349
        %3351 = vadd.xlane.f32.xlu0 %v3330
        %v3352 = vpop.xlane.xlu0 %3351
        %3353 = vadd.xlane.f32.xlu0 %v3331
        %v3354 = vpop.xlane.xlu0 %3353
        %3355 = vadd.xlane.f32.xlu0 %v3332
        %v3356 = vpop.xlane.xlu0 %3355
        %3357 = vadd.xlane.f32.xlu0 %v3333
        %v3358 = vpop.xlane.xlu0 %3357
        %3359 = vadd.xlane.f32.xlu0 %v3334
        %v3360 = vpop.xlane.xlu0 %3359
        %3361 = vadd.xlane.f32.xlu0 %v3335
        %v3362 = vpop.xlane.xlu0 %3361
        %3363 = vadd.xlane.f32.xlu0 %v3336
        %v3364 = vpop.xlane.xlu0 %3363
        %3365 = vadd.xlane.f32.xlu0 %v3337
        %v3366 = vpop.xlane.xlu0 %3365
        %3367 = vadd.xlane.f32.xlu0 %v3338
        %v3368 = vpop.xlane.xlu0 %3367
        %3369 = vadd.xlane.f32.xlu0 %v3339
        %v3370 = vpop.xlane.xlu0 %3369
        %3371 = vadd.xlane.f32.xlu0 %v3340
        %v3372 = vpop.xlane.xlu0 %3371
        %v3373 = vrcp.pop 128.0
        %v3374 = vmul.f32 %v3342, %v3373
        %v3375 = vmul.f32 %v3344, %v3373
        %v3376 = vmul.f32 %v3346, %v3373
        %v3377 = vmul.f32 %v3348, %v3373
        %v3378 = vmul.f32 %v3350, %v3373
        %v3379 = vmul.f32 %v3352, %v3373
        %v3380 = vmul.f32 %v3354, %v3373
        %v3381 = vmul.f32 %v3356, %v3373
        %v3382 = vmul.f32 %v3358, %v3373
        %v3383 = vmul.f32 %v3360, %v3373
        %v3384 = vmul.f32 %v3362, %v3373
        %v3385 = vmul.f32 %v3364, %v3373
        %v3386 = vmul.f32 %v3366, %v3373
        %v3387 = vmul.f32 %v3368, %v3373
        %v3388 = vmul.f32 %v3370, %v3373
        %v3389 = vmul.f32 %v3372, %v3373
        %v3390 = vsub.f32 %v3325, %v3374
        %v3391 = vsub.f32 %v3326, %v3375
        %v3392 = vsub.f32 %v3327, %v3376
        %v3393 = vsub.f32 %v3328, %v3377
        %v3394 = vsub.f32 %v3329, %v3378
        %v3395 = vsub.f32 %v3330, %v3379
        %v3396 = vsub.f32 %v3331, %v3380
        %v3397 = vsub.f32 %v3332, %v3381
        %v3398 = vsub.f32 %v3333, %v3382
        %v3399 = vsub.f32 %v3334, %v3383
        %v3400 = vsub.f32 %v3335, %v3384
        %v3401 = vsub.f32 %v3336, %v3385
        %v3402 = vsub.f32 %v3337, %v3386
        %v3403 = vsub.f32 %v3338, %v3387
        %v3404 = vsub.f32 %v3339, %v3388
        %v3405 = vsub.f32 %v3340, %v3389
        %v3406 = vmul.f32 %v3390, %v3390
        %v3407 = vmul.f32 %v3391, %v3391
        %v3408 = vmul.f32 %v3392, %v3392
        %v3409 = vmul.f32 %v3393, %v3393
        %v3410 = vmul.f32 %v3394, %v3394
        %v3411 = vmul.f32 %v3395, %v3395
        %v3412 = vmul.f32 %v3396, %v3396
        %v3413 = vmul.f32 %v3397, %v3397
        %v3414 = vmul.f32 %v3398, %v3398
        %v3415 = vmul.f32 %v3399, %v3399
        %v3416 = vmul.f32 %v3400, %v3400
        %v3417 = vmul.f32 %v3401, %v3401
        %v3418 = vmul.f32 %v3402, %v3402
        %v3419 = vmul.f32 %v3403, %v3403
        %v3420 = vmul.f32 %v3404, %v3404
        %v3421 = vmul.f32 %v3405, %v3405
        %3422 = vadd.xlane.f32.xlu0 %v3406
        %v3423 = vpop.xlane.xlu0 %3422
        %3424 = vadd.xlane.f32.xlu0 %v3407
        %v3425 = vpop.xlane.xlu0 %3424
        %3426 = vadd.xlane.f32.xlu0 %v3408
        %v3427 = vpop.xlane.xlu0 %3426
        %3428 = vadd.xlane.f32.xlu0 %v3409
        %v3429 = vpop.xlane.xlu0 %3428
        %3430 = vadd.xlane.f32.xlu0 %v3410
        %v3431 = vpop.xlane.xlu0 %3430
        %3432 = vadd.xlane.f32.xlu0 %v3411
        %v3433 = vpop.xlane.xlu0 %3432
        %3434 = vadd.xlane.f32.xlu0 %v3412
        %v3435 = vpop.xlane.xlu0 %3434
        %3436 = vadd.xlane.f32.xlu0 %v3413
        %v3437 = vpop.xlane.xlu0 %3436
        %3438 = vadd.xlane.f32.xlu0 %v3414
        %v3439 = vpop.xlane.xlu0 %3438
        %3440 = vadd.xlane.f32.xlu0 %v3415
        %v3441 = vpop.xlane.xlu0 %3440
        %3442 = vadd.xlane.f32.xlu0 %v3416
        %v3443 = vpop.xlane.xlu0 %3442
        %3444 = vadd.xlane.f32.xlu0 %v3417
        %v3445 = vpop.xlane.xlu0 %3444
        %3446 = vadd.xlane.f32.xlu0 %v3418
        %v3447 = vpop.xlane.xlu0 %3446
        %3448 = vadd.xlane.f32.xlu0 %v3419
        %v3449 = vpop.xlane.xlu0 %3448
        %3450 = vadd.xlane.f32.xlu0 %v3420
        %v3451 = vpop.xlane.xlu0 %3450
        %3452 = vadd.xlane.f32.xlu0 %v3421
        %v3453 = vpop.xlane.xlu0 %3452
        %v3454 = vmul.f32 %v3423, %v3373
        %v3455 = vmul.f32 %v3425, %v3373
        %v3456 = vmul.f32 %v3427, %v3373
        %v3457 = vmul.f32 %v3429, %v3373
        %v3458 = vmul.f32 %v3431, %v3373
        %v3459 = vmul.f32 %v3433, %v3373
        %v3460 = vmul.f32 %v3435, %v3373
        %v3461 = vmul.f32 %v3437, %v3373
        %v3462 = vmul.f32 %v3439, %v3373
        %v3463 = vmul.f32 %v3441, %v3373
        %v3464 = vmul.f32 %v3443, %v3373
        %v3465 = vmul.f32 %v3445, %v3373
        %v3466 = vmul.f32 %v3447, %v3373
        %v3467 = vmul.f32 %v3449, %v3373
        %v3468 = vmul.f32 %v3451, %v3373
        %v3469 = vmul.f32 %v3453, %v3373
        %v3470 = vadd.f32 %v3454, 1e-05
        %v3471 = vadd.f32 %v3455, 1e-05
        %v3472 = vadd.f32 %v3456, 1e-05
        %v3473 = vadd.f32 %v3457, 1e-05
        %v3474 = vadd.f32 %v3458, 1e-05
        %v3475 = vadd.f32 %v3459, 1e-05
        %v3476 = vadd.f32 %v3460, 1e-05
        %v3477 = vadd.f32 %v3461, 1e-05
        %v3478 = vadd.f32 %v3462, 1e-05
        %v3479 = vadd.f32 %v3463, 1e-05
        %v3480 = vadd.f32 %v3464, 1e-05
        %v3481 = vadd.f32 %v3465, 1e-05
        %v3482 = vadd.f32 %v3466, 1e-05
        %v3483 = vadd.f32 %v3467, 1e-05
        %v3484 = vadd.f32 %v3468, 1e-05
        %v3485 = vadd.f32 %v3469, 1e-05
        %v3486 = vrsqrt.pop %v3470
        %v3487 = vrsqrt.pop %v3471
        %v3488 = vrsqrt.pop %v3472
        %v3489 = vrsqrt.pop %v3473
        %v3490 = vrsqrt.pop %v3474
        %v3491 = vrsqrt.pop %v3475
        %v3492 = vrsqrt.pop %v3476
        %v3493 = vrsqrt.pop %v3477
        %v3494 = vrsqrt.pop %v3478
        %v3495 = vrsqrt.pop %v3479
        %v3496 = vrsqrt.pop %v3480
        %v3497 = vrsqrt.pop %v3481
        %v3498 = vrsqrt.pop %v3482
        %v3499 = vrsqrt.pop %v3483
        %v3500 = vrsqrt.pop %v3484
        %v3501 = vrsqrt.pop %v3485
        %v3502 = vmul.f32 %v3390, %v3486
        %v3503 = vmul.f32 %v3391, %v3487
        %v3504 = vmul.f32 %v3392, %v3488
        %v3505 = vmul.f32 %v3393, %v3489
        %v3506 = vmul.f32 %v3394, %v3490
        %v3507 = vmul.f32 %v3395, %v3491
        %v3508 = vmul.f32 %v3396, %v3492
        %v3509 = vmul.f32 %v3397, %v3493
        %v3510 = vmul.f32 %v3398, %v3494
        %v3511 = vmul.f32 %v3399, %v3495
        %v3512 = vmul.f32 %v3400, %v3496
        %v3513 = vmul.f32 %v3401, %v3497
        %v3514 = vmul.f32 %v3402, %v3498
        %v3515 = vmul.f32 %v3403, %v3499
        %v3516 = vmul.f32 %v3404, %v3500
        %v3517 = vmul.f32 %v3405, %v3501
        %v3518 = vmul.f32 %v3502, %v347
        %v3519 = vmul.f32 %v3503, %v347
        %v3520 = vmul.f32 %v3504, %v347
        %v3521 = vmul.f32 %v3505, %v347
        %v3522 = vmul.f32 %v3506, %v347
        %v3523 = vmul.f32 %v3507, %v347
        %v3524 = vmul.f32 %v3508, %v347
        %v3525 = vmul.f32 %v3509, %v347
        %v3526 = vmul.f32 %v3510, %v347
        %v3527 = vmul.f32 %v3511, %v347
        %v3528 = vmul.f32 %v3512, %v347
        %v3529 = vmul.f32 %v3513, %v347
        %v3530 = vmul.f32 %v3514, %v347
        %v3531 = vmul.f32 %v3515, %v347
        %v3532 = vmul.f32 %v3516, %v347
        %v3533 = vmul.f32 %v3517, %v347
        %v3534 = vadd.f32 %v3518, %v348
        %v3535 = vadd.f32 %v3519, %v348
        %v3536 = vadd.f32 %v3520, %v348
        %v3537 = vadd.f32 %v3521, %v348
        %v3538 = vadd.f32 %v3522, %v348
        %v3539 = vadd.f32 %v3523, %v348
        %v3540 = vadd.f32 %v3524, %v348
        %v3541 = vadd.f32 %v3525, %v348
        %v3542 = vadd.f32 %v3526, %v348
        %v3543 = vadd.f32 %v3527, %v348
        %v3544 = vadd.f32 %v3528, %v348
        %v3545 = vadd.f32 %v3529, %v348
        %v3546 = vadd.f32 %v3530, %v348
        %v3547 = vadd.f32 %v3531, %v348
        %v3548 = vadd.f32 %v3532, %v348
        %v3549 = vadd.f32 %v3533, %v348
        %v3550 = vpack.c.bf16 %v3535, %v3534
        %v3551 = vpack.c.bf16 %v3537, %v3536
        %v3552 = vpack.c.bf16 %v3539, %v3538
        %v3553 = vpack.c.bf16 %v3541, %v3540
        %v3554 = vpack.c.bf16 %v3543, %v3542
        %v3555 = vpack.c.bf16 %v3545, %v3544
        %v3556 = vpack.c.bf16 %v3547, %v3546
        %v3557 = vpack.c.bf16 %v3549, %v3548
        %v3558 = vld [vmem:[#allocation8] sm:$0xff]
        %v3559 = vld [vmem:[#allocation8 + $0x8] sm:$0xff]
        %v3560 = vld [vmem:[#allocation8 + $0x10] sm:$0xff]
        %v3561 = vld [vmem:[#allocation8 + $0x18] sm:$0xff]
        %v3562 = vld [vmem:[#allocation8 + $0x20] sm:$0xff]
        %v3563 = vld [vmem:[#allocation8 + $0x28] sm:$0xff]
        %v3564 = vld [vmem:[#allocation8 + $0x30] sm:$0xff]
        %v3565 = vld [vmem:[#allocation8 + $0x38] sm:$0xff]
        %v3566 = vld [vmem:[#allocation8 + $0x40] sm:$0xff]
        %v3567 = vld [vmem:[#allocation8 + $0x48] sm:$0xff]
        %v3568 = vld [vmem:[#allocation8 + $0x50] sm:$0xff]
        %v3569 = vld [vmem:[#allocation8 + $0x58] sm:$0xff]
        %v3570 = vld [vmem:[#allocation8 + $0x60] sm:$0xff]
        %v3571 = vld [vmem:[#allocation8 + $0x68] sm:$0xff]
        %v3572 = vld [vmem:[#allocation8 + $0x70] sm:$0xff]
        %v3573 = vld [vmem:[#allocation8 + $0x78] sm:$0xff]
        %v3575 = vlaneseq
        %v3576 = vshrl.u32 %v3575, 7
        %v3577 = vsub.s32 0, %v3576
        %v3578 = vrot.slane %v344, %v3577
        %v3579 = vlaneseq
        %v3580 = vshrl.u32 %v3579, 7
        %v3581 = vsub.s32 1, %v3580
        %v3582 = vrot.slane %v344, %v3581
        %v3601 = vunpack.c.l.b16 %v3558
        %v3602 = vunpack.c.h.b16 %v3558
        %v3603 = vunpack.c.l.b16 %v3559
        %v3604 = vunpack.c.h.b16 %v3559
        %v3605 = vunpack.c.l.b16 %v3560
        %v3606 = vunpack.c.h.b16 %v3560
        %v3607 = vunpack.c.l.b16 %v3561
        %v3608 = vunpack.c.h.b16 %v3561
        %v3609 = vunpack.c.l.b16 %v3562
        %v3610 = vunpack.c.h.b16 %v3562
        %v3611 = vunpack.c.l.b16 %v3563
        %v3612 = vunpack.c.h.b16 %v3563
        %v3613 = vunpack.c.l.b16 %v3564
        %v3614 = vunpack.c.h.b16 %v3564
        %v3615 = vunpack.c.l.b16 %v3565
        %v3616 = vunpack.c.h.b16 %v3565
        %v3617 = vunpack.c.l.b16 %v3566
        %v3618 = vunpack.c.h.b16 %v3566
        %v3619 = vunpack.c.l.b16 %v3567
        %v3620 = vunpack.c.h.b16 %v3567
        %v3621 = vunpack.c.l.b16 %v3568
        %v3622 = vunpack.c.h.b16 %v3568
        %v3623 = vunpack.c.l.b16 %v3569
        %v3624 = vunpack.c.h.b16 %v3569
        %v3625 = vunpack.c.l.b16 %v3570
        %v3626 = vunpack.c.h.b16 %v3570
        %v3627 = vunpack.c.l.b16 %v3571
        %v3628 = vunpack.c.h.b16 %v3571
        %v3629 = vunpack.c.l.b16 %v3572
        %v3630 = vunpack.c.h.b16 %v3572
        %v3631 = vunpack.c.l.b16 %v3573
        %v3632 = vunpack.c.h.b16 %v3573
        %v3633 = vpack.c.b16 %v3603, %v3601
        %v3634 = vpack.c.b16 %v3604, %v3602
        %v3635 = vpack.c.b16 %v3607, %v3605
        %v3636 = vpack.c.b16 %v3608, %v3606
        %v3637 = vpack.c.b16 %v3611, %v3609
        %v3638 = vpack.c.b16 %v3612, %v3610
        %v3639 = vpack.c.b16 %v3615, %v3613
        %v3640 = vpack.c.b16 %v3616, %v3614
        %v3641 = vpack.c.b16 %v3619, %v3617
        %v3642 = vpack.c.b16 %v3620, %v3618
        %v3643 = vpack.c.b16 %v3623, %v3621
        %v3644 = vpack.c.b16 %v3624, %v3622
        %v3645 = vpack.c.b16 %v3627, %v3625
        %v3646 = vpack.c.b16 %v3628, %v3626
        %v3647 = vpack.c.b16 %v3631, %v3629
        %v3648 = vpack.c.b16 %v3632, %v3630
        %3665 = vmatprep.subr.bf16.mxu0 %v3634
        %3666 = vmatpush1.bf16.msra.mxu0 %v3633
        %3667 = vmatprep.subr.bf16.mxu0 %v3636
        %3668 = vmatpush1.bf16.msra.mxu0 %v3635
        %3669 = vmatprep.subr.bf16.mxu0 %v3638
        %3670 = vmatpush1.bf16.msra.mxu0 %v3637
        %3671 = vmatprep.subr.bf16.mxu0 %v3640
        %3672 = vmatpush1.bf16.msra.mxu0 %v3639
        %3673 = vmatprep.subr.bf16.mxu0 %v3642
        %3674 = vmatpush1.bf16.msra.mxu0 %v3641
        %3675 = vmatprep.subr.bf16.mxu0 %v3644
        %3676 = vmatpush1.bf16.msra.mxu0 %v3643
        %3677 = vmatprep.subr.bf16.mxu0 %v3646
        %3678 = vmatpush1.bf16.msra.mxu0 %v3645
        %3679 = vmatprep.subr.bf16.mxu0 %v3648
        %3680 = vmatpush1.bf16.msra.mxu0 %v3647
        %3681 = vmatprep.subr.bf16.mxu0 0
        %3682 = vmatpush1.bf16.msra.mxu0 0
        %3683 = vmatprep.subr.bf16.mxu0 0
        %3684 = vmatpush1.bf16.msra.mxu0 0
        %3685 = vmatprep.subr.bf16.mxu0 0
        %3686 = vmatpush1.bf16.msra.mxu0 0
        %3687 = vmatprep.subr.bf16.mxu0 0
        %3688 = vmatpush1.bf16.msra.mxu0 0
        %3689 = vmatprep.subr.bf16.mxu0 0
        %3690 = vmatpush1.bf16.msra.mxu0 0
        %3691 = vmatprep.subr.bf16.mxu0 0
        %3692 = vmatpush1.bf16.msra.mxu0 0
        %3693 = vmatprep.subr.bf16.mxu0 0
        %3694 = vmatpush1.bf16.msra.mxu0 0
        %3695 = vmatprep.subr.bf16.mxu0 0
        %3696 = vmatpush1.bf16.msra.mxu0 0
        %3697 = vmatprep.mubr.bf16.mxu0 0
        %3698 = vmatmul.mubr.bf16.gmra.mrb[0].mxu0 %v3550
        %v3699 = vpop.f32.mrb[0].mxu0
        %v3700 = vadd.f32 %v3578, %v3699
        %v3701 = vpop.f32.mrb[0].mxu0
        %v3702 = vadd.f32 %v3582, %v3701
        %v3703 = vpop.f32.mrb[0].mxu0
        %v3704 = vadd.f32 %v3578, %v3703
        %v3705 = vpop.f32.mrb[0].mxu0
        %v3706 = vadd.f32 %v3582, %v3705
        %3707 = vmatprep.mubr.bf16.mxu0 0
        %3708 = vmatmul.mubr.bf16.gmra.mrb[0].mxu0 %v3551
        %v3709 = vpop.f32.mrb[0].mxu0
        %v3710 = vadd.f32 %v3578, %v3709
        %v3711 = vpop.f32.mrb[0].mxu0
        %v3712 = vadd.f32 %v3582, %v3711
        %v3713 = vpop.f32.mrb[0].mxu0
        %v3714 = vadd.f32 %v3578, %v3713
        %v3715 = vpop.f32.mrb[0].mxu0
        %v3716 = vadd.f32 %v3582, %v3715
        %3717 = vmatprep.mubr.bf16.mxu0 0
        %3718 = vmatmul.mubr.bf16.gmra.mrb[0].mxu0 %v3552
        %v3719 = vpop.f32.mrb[0].mxu0
        %v3720 = vadd.f32 %v3578, %v3719
        %v3721 = vpop.f32.mrb[0].mxu0
        %v3722 = vadd.f32 %v3582, %v3721
        %v3723 = vpop.f32.mrb[0].mxu0
        %v3724 = vadd.f32 %v3578, %v3723
        %v3725 = vpop.f32.mrb[0].mxu0
        %v3726 = vadd.f32 %v3582, %v3725
        %3727 = vmatprep.mubr.bf16.mxu0 0
        %3728 = vmatmul.mubr.bf16.gmra.mrb[0].mxu0 %v3553
        %v3729 = vpop.f32.mrb[0].mxu0
        %v3730 = vadd.f32 %v3578, %v3729
        %v3731 = vpop.f32.mrb[0].mxu0
        %v3732 = vadd.f32 %v3582, %v3731
        %v3733 = vpop.f32.mrb[0].mxu0
        %v3734 = vadd.f32 %v3578, %v3733
        %v3735 = vpop.f32.mrb[0].mxu0
        %v3736 = vadd.f32 %v3582, %v3735
        %3737 = vmatprep.mubr.bf16.mxu0 0
        %3738 = vmatmul.mubr.bf16.gmra.mrb[0].mxu0 %v3554
        %v3739 = vpop.f32.mrb[0].mxu0
        %v3740 = vadd.f32 %v3578, %v3739
        %v3741 = vpop.f32.mrb[0].mxu0
        %v3742 = vadd.f32 %v3582, %v3741
        %v3743 = vpop.f32.mrb[0].mxu0
        %v3744 = vadd.f32 %v3578, %v3743
        %v3745 = vpop.f32.mrb[0].mxu0
        %v3746 = vadd.f32 %v3582, %v3745
        %3747 = vmatprep.mubr.bf16.mxu0 0
        %3748 = vmatmul.mubr.bf16.gmra.mrb[0].mxu0 %v3555
        %v3749 = vpop.f32.mrb[0].mxu0
        %v3750 = vadd.f32 %v3578, %v3749
        %v3751 = vpop.f32.mrb[0].mxu0
        %v3752 = vadd.f32 %v3582, %v3751
        %v3753 = vpop.f32.mrb[0].mxu0
        %v3754 = vadd.f32 %v3578, %v3753
        %v3755 = vpop.f32.mrb[0].mxu0
        %v3756 = vadd.f32 %v3582, %v3755
        %3757 = vmatprep.mubr.bf16.mxu0 0
        %3758 = vmatmul.mubr.bf16.gmra.mrb[0].mxu0 %v3556
        %v3759 = vpop.f32.mrb[0].mxu0
        %v3760 = vadd.f32 %v3578, %v3759
        %v3761 = vpop.f32.mrb[0].mxu0
        %v3762 = vadd.f32 %v3582, %v3761
        %v3763 = vpop.f32.mrb[0].mxu0
        %v3764 = vadd.f32 %v3578, %v3763
        %v3765 = vpop.f32.mrb[0].mxu0
        %v3766 = vadd.f32 %v3582, %v3765
        %3767 = vmatprep.mubr.bf16.mxu0 0
        %3768 = vmatmul.mubr.bf16.gmra.mrb[0].mxu0 %v3557
        %v3769 = vpop.f32.mrb[0].mxu0
        %v3770 = vadd.f32 %v3578, %v3769
        %v3771 = vpop.f32.mrb[0].mxu0
        %v3772 = vadd.f32 %v3582, %v3771
        %v3773 = vpop.f32.mrb[0].mxu0
        %v3774 = vadd.f32 %v3578, %v3773
        %v3775 = vpop.f32.mrb[0].mxu0
        %v3776 = vadd.f32 %v3582, %v3775
        %3777 = vdwg.mxu0
        %v3778 = vmax.f32 %v3700, 0.0
        %v3779 = vmax.f32 %v3702, 0.0
        %v3780 = vmax.f32 %v3704, 0.0
        %v3781 = vmax.f32 %v3706, 0.0
        %v3782 = vmax.f32 %v3710, 0.0
        %v3783 = vmax.f32 %v3712, 0.0
        %v3784 = vmax.f32 %v3714, 0.0
        %v3785 = vmax.f32 %v3716, 0.0
        %v3786 = vmax.f32 %v3720, 0.0
        %v3787 = vmax.f32 %v3722, 0.0
        %v3788 = vmax.f32 %v3724, 0.0
        %v3789 = vmax.f32 %v3726, 0.0
        %v3790 = vmax.f32 %v3730, 0.0
        %v3791 = vmax.f32 %v3732, 0.0
        %v3792 = vmax.f32 %v3734, 0.0
        %v3793 = vmax.f32 %v3736, 0.0
        %v3794 = vmax.f32 %v3740, 0.0
        %v3795 = vmax.f32 %v3742, 0.0
        %v3796 = vmax.f32 %v3744, 0.0
        %v3797 = vmax.f32 %v3746, 0.0
        %v3798 = vmax.f32 %v3750, 0.0
        %v3799 = vmax.f32 %v3752, 0.0
        %v3800 = vmax.f32 %v3754, 0.0
        %v3801 = vmax.f32 %v3756, 0.0
        %v3802 = vmax.f32 %v3760, 0.0
        %v3803 = vmax.f32 %v3762, 0.0
        %v3804 = vmax.f32 %v3764, 0.0
        %v3805 = vmax.f32 %v3766, 0.0
        %v3806 = vmax.f32 %v3770, 0.0
        %v3807 = vmax.f32 %v3772, 0.0
        %v3808 = vmax.f32 %v3774, 0.0
        %v3809 = vmax.f32 %v3776, 0.0
        %v3810 = vpack.c.bf16 %v3780, %v3778
        %v3811 = vpack.c.bf16 %v3781, %v3779
        %v3812 = vpack.c.bf16 %v3784, %v3782
        %v3813 = vpack.c.bf16 %v3785, %v3783
        %v3814 = vpack.c.bf16 %v3788, %v3786
        %v3815 = vpack.c.bf16 %v3789, %v3787
        %v3816 = vpack.c.bf16 %v3792, %v3790
        %v3817 = vpack.c.bf16 %v3793, %v3791
        %v3818 = vpack.c.bf16 %v3796, %v3794
        %v3819 = vpack.c.bf16 %v3797, %v3795
        %v3820 = vpack.c.bf16 %v3800, %v3798
        %v3821 = vpack.c.bf16 %v3801, %v3799
        %v3822 = vpack.c.bf16 %v3804, %v3802
        %v3823 = vpack.c.bf16 %v3805, %v3803
        %v3824 = vpack.c.bf16 %v3808, %v3806
        %v3825 = vpack.c.bf16 %v3809, %v3807
        %v3826 = vld [vmem:[#allocation10] sm:$0xf]
        %v3827 = vld [vmem:[#allocation10 + $0x4] sm:$0xf]
        %v3828 = vld [vmem:[#allocation10 + $0x8] sm:$0xf]
        %v3829 = vld [vmem:[#allocation10 + $0xc] sm:$0xf]
        %v3830 = vld [vmem:[#allocation10 + $0x10] sm:$0xf]
        %v3831 = vld [vmem:[#allocation10 + $0x14] sm:$0xf]
        %v3832 = vld [vmem:[#allocation10 + $0x18] sm:$0xf]
        %v3833 = vld [vmem:[#allocation10 + $0x1c] sm:$0xf]
        %v3834 = vld [vmem:[#allocation10 + $0x20] sm:$0xf]
        %v3835 = vld [vmem:[#allocation10 + $0x24] sm:$0xf]
        %v3836 = vld [vmem:[#allocation10 + $0x28] sm:$0xf]
        %v3837 = vld [vmem:[#allocation10 + $0x2c] sm:$0xf]
        %v3838 = vld [vmem:[#allocation10 + $0x30] sm:$0xf]
        %v3839 = vld [vmem:[#allocation10 + $0x34] sm:$0xf]
        %v3840 = vld [vmem:[#allocation10 + $0x38] sm:$0xf]
        %v3841 = vld [vmem:[#allocation10 + $0x3c] sm:$0xf]
        %v3842 = vld [vmem:[#allocation10 + $0x40] sm:$0xf]
        %v3843 = vld [vmem:[#allocation10 + $0x44] sm:$0xf]
        %v3844 = vld [vmem:[#allocation10 + $0x48] sm:$0xf]
        %v3845 = vld [vmem:[#allocation10 + $0x4c] sm:$0xf]
        %v3846 = vld [vmem:[#allocation10 + $0x50] sm:$0xf]
        %v3847 = vld [vmem:[#allocation10 + $0x54] sm:$0xf]
        %v3848 = vld [vmem:[#allocation10 + $0x58] sm:$0xf]
        %v3849 = vld [vmem:[#allocation10 + $0x5c] sm:$0xf]
        %v3850 = vld [vmem:[#allocation10 + $0x60] sm:$0xf]
        %v3851 = vld [vmem:[#allocation10 + $0x64] sm:$0xf]
        %v3852 = vld [vmem:[#allocation10 + $0x68] sm:$0xf]
        %v3853 = vld [vmem:[#allocation10 + $0x6c] sm:$0xf]
        %v3854 = vld [vmem:[#allocation10 + $0x70] sm:$0xf]
        %v3855 = vld [vmem:[#allocation10 + $0x74] sm:$0xf]
        %v3856 = vld [vmem:[#allocation10 + $0x78] sm:$0xf]
        %v3857 = vld [vmem:[#allocation10 + $0x7c] sm:$0xf]
        %v3890 = vunpack.c.l.b16 %v3826
        %v3891 = vunpack.c.l.b16 %v3827
        %v3892 = vunpack.c.l.b16 %v3828
        %v3893 = vunpack.c.l.b16 %v3829
        %v3894 = vunpack.c.l.b16 %v3830
        %v3895 = vunpack.c.l.b16 %v3831
        %v3896 = vunpack.c.l.b16 %v3832
        %v3897 = vunpack.c.l.b16 %v3833
        %v3898 = vunpack.c.l.b16 %v3834
        %v3899 = vunpack.c.l.b16 %v3835
        %v3900 = vunpack.c.l.b16 %v3836
        %v3901 = vunpack.c.l.b16 %v3837
        %v3902 = vunpack.c.l.b16 %v3838
        %v3903 = vunpack.c.l.b16 %v3839
        %v3904 = vunpack.c.l.b16 %v3840
        %v3905 = vunpack.c.l.b16 %v3841
        %v3906 = vunpack.c.l.b16 %v3842
        %v3907 = vunpack.c.l.b16 %v3843
        %v3908 = vunpack.c.l.b16 %v3844
        %v3909 = vunpack.c.l.b16 %v3845
        %v3910 = vunpack.c.l.b16 %v3846
        %v3911 = vunpack.c.l.b16 %v3847
        %v3912 = vunpack.c.l.b16 %v3848
        %v3913 = vunpack.c.l.b16 %v3849
        %v3914 = vunpack.c.l.b16 %v3850
        %v3915 = vunpack.c.l.b16 %v3851
        %v3916 = vunpack.c.l.b16 %v3852
        %v3917 = vunpack.c.l.b16 %v3853
        %v3918 = vunpack.c.l.b16 %v3854
        %v3919 = vunpack.c.l.b16 %v3855
        %v3920 = vunpack.c.l.b16 %v3856
        %v3921 = vunpack.c.l.b16 %v3857
        %v3922 = vpack.c.b16 %v3891, %v3890
        %v3923 = vpack.c.b16 %v3893, %v3892
        %v3924 = vpack.c.b16 %v3895, %v3894
        %v3925 = vpack.c.b16 %v3897, %v3896
        %v3926 = vpack.c.b16 %v3899, %v3898
        %v3927 = vpack.c.b16 %v3901, %v3900
        %v3928 = vpack.c.b16 %v3903, %v3902
        %v3929 = vpack.c.b16 %v3905, %v3904
        %v3930 = vpack.c.b16 %v3907, %v3906
        %v3931 = vpack.c.b16 %v3909, %v3908
        %v3932 = vpack.c.b16 %v3911, %v3910
        %v3933 = vpack.c.b16 %v3913, %v3912
        %v3934 = vpack.c.b16 %v3915, %v3914
        %v3935 = vpack.c.b16 %v3917, %v3916
        %v3936 = vpack.c.b16 %v3919, %v3918
        %v3937 = vpack.c.b16 %v3921, %v3920
        %3954 = vmatprep.subr.bf16.mxu0 0
        %3955 = vmatpush1.bf16.msra.mxu0 %v3922
        %3956 = vmatprep.subr.bf16.mxu0 0
        %3957 = vmatpush1.bf16.msra.mxu0 %v3923
        %3958 = vmatprep.subr.bf16.mxu0 0
        %3959 = vmatpush1.bf16.msra.mxu0 %v3924
        %3960 = vmatprep.subr.bf16.mxu0 0
        %3961 = vmatpush1.bf16.msra.mxu0 %v3925
        %3962 = vmatprep.subr.bf16.mxu0 0
        %3963 = vmatpush1.bf16.msra.mxu0 %v3926
        %3964 = vmatprep.subr.bf16.mxu0 0
        %3965 = vmatpush1.bf16.msra.mxu0 %v3927
        %3966 = vmatprep.subr.bf16.mxu0 0
        %3967 = vmatpush1.bf16.msra.mxu0 %v3928
        %3968 = vmatprep.subr.bf16.mxu0 0
        %3969 = vmatpush1.bf16.msra.mxu0 %v3929
        %3970 = vmatprep.subr.bf16.mxu0 0
        %3971 = vmatpush1.bf16.msra.mxu0 %v3930
        %3972 = vmatprep.subr.bf16.mxu0 0
        %3973 = vmatpush1.bf16.msra.mxu0 %v3931
        %3974 = vmatprep.subr.bf16.mxu0 0
        %3975 = vmatpush1.bf16.msra.mxu0 %v3932
        %3976 = vmatprep.subr.bf16.mxu0 0
        %3977 = vmatpush1.bf16.msra.mxu0 %v3933
        %3978 = vmatprep.subr.bf16.mxu0 0
        %3979 = vmatpush1.bf16.msra.mxu0 %v3934
        %3980 = vmatprep.subr.bf16.mxu0 0
        %3981 = vmatpush1.bf16.msra.mxu0 %v3935
        %3982 = vmatprep.subr.bf16.mxu0 0
        %3983 = vmatpush1.bf16.msra.mxu0 %v3936
        %3984 = vmatprep.subr.bf16.mxu0 0
        %3985 = vmatpush1.bf16.msra.mxu0 %v3937
        %3986 = vmatprep.mubr.bf16.mxu0 %v3811
        %3987 = vmatmul.mubr.bf16.gmra.mrb[0].mxu0 %v3810
        %v3988 = vpop.f32.mrb[0].mxu0
        %v3989 = vadd.f32 %v346, %v3988
        %v3990 = vpop.f32.mrb[0].mxu0
        %v3991 = vpop.f32.mrb[0].mxu0
        %v3992 = vadd.f32 %v346, %v3991
        %v3993 = vpop.f32.mrb[0].mxu0
        %3994 = vmatprep.mubr.bf16.mxu0 %v3813
        %3995 = vmatmul.mubr.bf16.gmra.mrb[0].mxu0 %v3812
        %v3996 = vpop.f32.mrb[0].mxu0
        %v3997 = vadd.f32 %v346, %v3996
        %v3998 = vpop.f32.mrb[0].mxu0
        %v3999 = vpop.f32.mrb[0].mxu0
        %v4000 = vadd.f32 %v346, %v3999
        %v4001 = vpop.f32.mrb[0].mxu0
        %4002 = vmatprep.mubr.bf16.mxu0 %v3815
        %4003 = vmatmul.mubr.bf16.gmra.mrb[0].mxu0 %v3814
        %v4004 = vpop.f32.mrb[0].mxu0
        %v4005 = vadd.f32 %v346, %v4004
        %v4006 = vpop.f32.mrb[0].mxu0
        %v4007 = vpop.f32.mrb[0].mxu0
        %v4008 = vadd.f32 %v346, %v4007
        %v4009 = vpop.f32.mrb[0].mxu0
        %4010 = vmatprep.mubr.bf16.mxu0 %v3817
        %4011 = vmatmul.mubr.bf16.gmra.mrb[0].mxu0 %v3816
        %v4012 = vpop.f32.mrb[0].mxu0
        %v4013 = vadd.f32 %v346, %v4012
        %v4014 = vpop.f32.mrb[0].mxu0
        %v4015 = vpop.f32.mrb[0].mxu0
        %v4016 = vadd.f32 %v346, %v4015
        %v4017 = vpop.f32.mrb[0].mxu0
        %4018 = vmatprep.mubr.bf16.mxu0 %v3819
        %4019 = vmatmul.mubr.bf16.gmra.mrb[0].mxu0 %v3818
        %v4020 = vpop.f32.mrb[0].mxu0
        %v4021 = vadd.f32 %v346, %v4020
        %v4022 = vpop.f32.mrb[0].mxu0
        %v4023 = vpop.f32.mrb[0].mxu0
        %v4024 = vadd.f32 %v346, %v4023
        %v4025 = vpop.f32.mrb[0].mxu0
        %4026 = vmatprep.mubr.bf16.mxu0 %v3821
        %4027 = vmatmul.mubr.bf16.gmra.mrb[0].mxu0 %v3820
        %v4028 = vpop.f32.mrb[0].mxu0
        %v4029 = vadd.f32 %v346, %v4028
        %v4030 = vpop.f32.mrb[0].mxu0
        %v4031 = vpop.f32.mrb[0].mxu0
        %v4032 = vadd.f32 %v346, %v4031
        %v4033 = vpop.f32.mrb[0].mxu0
        %4034 = vmatprep.mubr.bf16.mxu0 %v3823
        %4035 = vmatmul.mubr.bf16.gmra.mrb[0].mxu0 %v3822
        %v4036 = vpop.f32.mrb[0].mxu0
        %v4037 = vadd.f32 %v346, %v4036
        %v4038 = vpop.f32.mrb[0].mxu0
        %v4039 = vpop.f32.mrb[0].mxu0
        %v4040 = vadd.f32 %v346, %v4039
        %v4041 = vpop.f32.mrb[0].mxu0
        %4042 = vmatprep.mubr.bf16.mxu0 %v3825
        %4043 = vmatmul.mubr.bf16.gmra.mrb[0].mxu0 %v3824
        %v4044 = vpop.f32.mrb[0].mxu0
        %v4045 = vadd.f32 %v346, %v4044
        %v4046 = vpop.f32.mrb[0].mxu0
        %v4047 = vpop.f32.mrb[0].mxu0
        %v4048 = vadd.f32 %v346, %v4047
        %v4049 = vpop.f32.mrb[0].mxu0
        %4050 = vdwg.mxu0
        %v4051 = vadd.f32 %v3534, %v3989
        %v4052 = vadd.f32 %v3535, %v3992
        %v4053 = vadd.f32 %v3536, %v3997
        %v4054 = vadd.f32 %v3537, %v4000
        %v4055 = vadd.f32 %v3538, %v4005
        %v4056 = vadd.f32 %v3539, %v4008
        %v4057 = vadd.f32 %v3540, %v4013
        %v4058 = vadd.f32 %v3541, %v4016
        %v4059 = vadd.f32 %v3542, %v4021
        %v4060 = vadd.f32 %v3543, %v4024
        %v4061 = vadd.f32 %v3544, %v4029
        %v4062 = vadd.f32 %v3545, %v4032
        %v4063 = vadd.f32 %v3546, %v4037
        %v4064 = vadd.f32 %v3547, %v4040
        %v4065 = vadd.f32 %v3548, %v4045
        %v4066 = vadd.f32 %v3549, %v4048
        %4067 = vadd.xlane.f32.xlu0 %v4051
        %v4068 = vpop.xlane.xlu0 %4067
        %4069 = vadd.xlane.f32.xlu0 %v4052
        %v4070 = vpop.xlane.xlu0 %4069
        %4071 = vadd.xlane.f32.xlu0 %v4053
        %v4072 = vpop.xlane.xlu0 %4071
        %4073 = vadd.xlane.f32.xlu0 %v4054
        %v4074 = vpop.xlane.xlu0 %4073
        %4075 = vadd.xlane.f32.xlu0 %v4055
        %v4076 = vpop.xlane.xlu0 %4075
        %4077 = vadd.xlane.f32.xlu0 %v4056
        %v4078 = vpop.xlane.xlu0 %4077
        %4079 = vadd.xlane.f32.xlu0 %v4057
        %v4080 = vpop.xlane.xlu0 %4079
        %4081 = vadd.xlane.f32.xlu0 %v4058
        %v4082 = vpop.xlane.xlu0 %4081
        %4083 = vadd.xlane.f32.xlu0 %v4059
        %v4084 = vpop.xlane.xlu0 %4083
        %4085 = vadd.xlane.f32.xlu0 %v4060
        %v4086 = vpop.xlane.xlu0 %4085
        %4087 = vadd.xlane.f32.xlu0 %v4061
        %v4088 = vpop.xlane.xlu0 %4087
        %4089 = vadd.xlane.f32.xlu0 %v4062
        %v4090 = vpop.xlane.xlu0 %4089
        %4091 = vadd.xlane.f32.xlu0 %v4063
        %v4092 = vpop.xlane.xlu0 %4091
        %4093 = vadd.xlane.f32.xlu0 %v4064
        %v4094 = vpop.xlane.xlu0 %4093
        %4095 = vadd.xlane.f32.xlu0 %v4065
        %v4096 = vpop.xlane.xlu0 %4095
        %4097 = vadd.xlane.f32.xlu0 %v4066
        %v4098 = vpop.xlane.xlu0 %4097
        %v4099 = vmul.f32 %v4068, %v3373
        %v4100 = vmul.f32 %v4070, %v3373
        %v4101 = vmul.f32 %v4072, %v3373
        %v4102 = vmul.f32 %v4074, %v3373
        %v4103 = vmul.f32 %v4076, %v3373
        %v4104 = vmul.f32 %v4078, %v3373
        %v4105 = vmul.f32 %v4080, %v3373
        %v4106 = vmul.f32 %v4082, %v3373
        %v4107 = vmul.f32 %v4084, %v3373
        %v4108 = vmul.f32 %v4086, %v3373
        %v4109 = vmul.f32 %v4088, %v3373
        %v4110 = vmul.f32 %v4090, %v3373
        %v4111 = vmul.f32 %v4092, %v3373
        %v4112 = vmul.f32 %v4094, %v3373
        %v4113 = vmul.f32 %v4096, %v3373
        %v4114 = vmul.f32 %v4098, %v3373
        %v4115 = vsub.f32 %v4051, %v4099
        %v4116 = vsub.f32 %v4052, %v4100
        %v4117 = vsub.f32 %v4053, %v4101
        %v4118 = vsub.f32 %v4054, %v4102
        %v4119 = vsub.f32 %v4055, %v4103
        %v4120 = vsub.f32 %v4056, %v4104
        %v4121 = vsub.f32 %v4057, %v4105
        %v4122 = vsub.f32 %v4058, %v4106
        %v4123 = vsub.f32 %v4059, %v4107
        %v4124 = vsub.f32 %v4060, %v4108
        %v4125 = vsub.f32 %v4061, %v4109
        %v4126 = vsub.f32 %v4062, %v4110
        %v4127 = vsub.f32 %v4063, %v4111
        %v4128 = vsub.f32 %v4064, %v4112
        %v4129 = vsub.f32 %v4065, %v4113
        %v4130 = vsub.f32 %v4066, %v4114
        %v4131 = vmul.f32 %v4115, %v4115
        %v4132 = vmul.f32 %v4116, %v4116
        %v4133 = vmul.f32 %v4117, %v4117
        %v4134 = vmul.f32 %v4118, %v4118
        %v4135 = vmul.f32 %v4119, %v4119
        %v4136 = vmul.f32 %v4120, %v4120
        %v4137 = vmul.f32 %v4121, %v4121
        %v4138 = vmul.f32 %v4122, %v4122
        %v4139 = vmul.f32 %v4123, %v4123
        %v4140 = vmul.f32 %v4124, %v4124
        %v4141 = vmul.f32 %v4125, %v4125
        %v4142 = vmul.f32 %v4126, %v4126
        %v4143 = vmul.f32 %v4127, %v4127
        %v4144 = vmul.f32 %v4128, %v4128
        %v4145 = vmul.f32 %v4129, %v4129
        %v4146 = vmul.f32 %v4130, %v4130
        %4147 = vadd.xlane.f32.xlu0 %v4131
        %v4148 = vpop.xlane.xlu0 %4147
        %4149 = vadd.xlane.f32.xlu0 %v4132
        %v4150 = vpop.xlane.xlu0 %4149
        %4151 = vadd.xlane.f32.xlu0 %v4133
        %v4152 = vpop.xlane.xlu0 %4151
        %4153 = vadd.xlane.f32.xlu0 %v4134
        %v4154 = vpop.xlane.xlu0 %4153
        %4155 = vadd.xlane.f32.xlu0 %v4135
        %v4156 = vpop.xlane.xlu0 %4155
        %4157 = vadd.xlane.f32.xlu0 %v4136
        %v4158 = vpop.xlane.xlu0 %4157
        %4159 = vadd.xlane.f32.xlu0 %v4137
        %v4160 = vpop.xlane.xlu0 %4159
        %4161 = vadd.xlane.f32.xlu0 %v4138
        %v4162 = vpop.xlane.xlu0 %4161
        %4163 = vadd.xlane.f32.xlu0 %v4139
        %v4164 = vpop.xlane.xlu0 %4163
        %4165 = vadd.xlane.f32.xlu0 %v4140
        %v4166 = vpop.xlane.xlu0 %4165
        %4167 = vadd.xlane.f32.xlu0 %v4141
        %v4168 = vpop.xlane.xlu0 %4167
        %4169 = vadd.xlane.f32.xlu0 %v4142
        %v4170 = vpop.xlane.xlu0 %4169
        %4171 = vadd.xlane.f32.xlu0 %v4143
        %v4172 = vpop.xlane.xlu0 %4171
        %4173 = vadd.xlane.f32.xlu0 %v4144
        %v4174 = vpop.xlane.xlu0 %4173
        %4175 = vadd.xlane.f32.xlu0 %v4145
        %v4176 = vpop.xlane.xlu0 %4175
        %4177 = vadd.xlane.f32.xlu0 %v4146
        %v4178 = vpop.xlane.xlu0 %4177
        %v4179 = vmul.f32 %v4148, %v3373
        %v4180 = vmul.f32 %v4150, %v3373
        %v4181 = vmul.f32 %v4152, %v3373
        %v4182 = vmul.f32 %v4154, %v3373
        %v4183 = vmul.f32 %v4156, %v3373
        %v4184 = vmul.f32 %v4158, %v3373
        %v4185 = vmul.f32 %v4160, %v3373
        %v4186 = vmul.f32 %v4162, %v3373
        %v4187 = vmul.f32 %v4164, %v3373
        %v4188 = vmul.f32 %v4166, %v3373
        %v4189 = vmul.f32 %v4168, %v3373
        %v4190 = vmul.f32 %v4170, %v3373
        %v4191 = vmul.f32 %v4172, %v3373
        %v4192 = vmul.f32 %v4174, %v3373
        %v4193 = vmul.f32 %v4176, %v3373
        %v4194 = vmul.f32 %v4178, %v3373
        %v4195 = vadd.f32 %v4179, 1e-05
        %v4196 = vadd.f32 %v4180, 1e-05
        %v4197 = vadd.f32 %v4181, 1e-05
        %v4198 = vadd.f32 %v4182, 1e-05
        %v4199 = vadd.f32 %v4183, 1e-05
        %v4200 = vadd.f32 %v4184, 1e-05
        %v4201 = vadd.f32 %v4185, 1e-05
        %v4202 = vadd.f32 %v4186, 1e-05
        %v4203 = vadd.f32 %v4187, 1e-05
        %v4204 = vadd.f32 %v4188, 1e-05
        %v4205 = vadd.f32 %v4189, 1e-05
        %v4206 = vadd.f32 %v4190, 1e-05
        %v4207 = vadd.f32 %v4191, 1e-05
        %v4208 = vadd.f32 %v4192, 1e-05
        %v4209 = vadd.f32 %v4193, 1e-05
        %v4210 = vadd.f32 %v4194, 1e-05
        %v4211 = vrsqrt.pop %v4195
        %v4212 = vrsqrt.pop %v4196
        %v4213 = vrsqrt.pop %v4197
        %v4214 = vrsqrt.pop %v4198
        %v4215 = vrsqrt.pop %v4199
        %v4216 = vrsqrt.pop %v4200
        %v4217 = vrsqrt.pop %v4201
        %v4218 = vrsqrt.pop %v4202
        %v4219 = vrsqrt.pop %v4203
        %v4220 = vrsqrt.pop %v4204
        %v4221 = vrsqrt.pop %v4205
        %v4222 = vrsqrt.pop %v4206
        %v4223 = vrsqrt.pop %v4207
        %v4224 = vrsqrt.pop %v4208
        %v4225 = vrsqrt.pop %v4209
        %v4226 = vrsqrt.pop %v4210
        %v4227 = vmul.f32 %v4115, %v4211
        %v4228 = vmul.f32 %v4116, %v4212
        %v4229 = vmul.f32 %v4117, %v4213
        %v4230 = vmul.f32 %v4118, %v4214
        %v4231 = vmul.f32 %v4119, %v4215
        %v4232 = vmul.f32 %v4120, %v4216
        %v4233 = vmul.f32 %v4121, %v4217
        %v4234 = vmul.f32 %v4122, %v4218
        %v4235 = vmul.f32 %v4123, %v4219
        %v4236 = vmul.f32 %v4124, %v4220
        %v4237 = vmul.f32 %v4125, %v4221
        %v4238 = vmul.f32 %v4126, %v4222
        %v4239 = vmul.f32 %v4127, %v4223
        %v4240 = vmul.f32 %v4128, %v4224
        %v4241 = vmul.f32 %v4129, %v4225
        %v4242 = vmul.f32 %v4130, %v4226
        %v4243 = vmul.f32 %v4227, %v349
        %v4244 = vmul.f32 %v4228, %v349
        %v4245 = vmul.f32 %v4229, %v349
        %v4246 = vmul.f32 %v4230, %v349
        %v4247 = vmul.f32 %v4231, %v349
        %v4248 = vmul.f32 %v4232, %v349
        %v4249 = vmul.f32 %v4233, %v349
        %v4250 = vmul.f32 %v4234, %v349
        %v4251 = vmul.f32 %v4235, %v349
        %v4252 = vmul.f32 %v4236, %v349
        %v4253 = vmul.f32 %v4237, %v349
        %v4254 = vmul.f32 %v4238, %v349
        %v4255 = vmul.f32 %v4239, %v349
        %v4256 = vmul.f32 %v4240, %v349
        %v4257 = vmul.f32 %v4241, %v349
        %v4258 = vmul.f32 %v4242, %v349
        %v4259 = vadd.f32 %v4243, %v350
        %v4260 = vadd.f32 %v4244, %v350
        %v4261 = vadd.f32 %v4245, %v350
        %v4262 = vadd.f32 %v4246, %v350
        %v4263 = vadd.f32 %v4247, %v350
        %v4264 = vadd.f32 %v4248, %v350
        %v4265 = vadd.f32 %v4249, %v350
        %v4266 = vadd.f32 %v4250, %v350
        %v4267 = vadd.f32 %v4251, %v350
        %v4268 = vadd.f32 %v4252, %v350
        %v4269 = vadd.f32 %v4253, %v350
        %v4270 = vadd.f32 %v4254, %v350
        %v4271 = vadd.f32 %v4255, %v350
        %v4272 = vadd.f32 %v4256, %v350
        %v4273 = vadd.f32 %v4257, %v350
        %v4274 = vadd.f32 %v4258, %v350
        %4275 = vst [vmem:[%s340] sm:$0xff] %v4259
        %4276 = vst [vmem:[%s340 + $0x8] sm:$0xff] %v4260
        %4277 = vst [vmem:[%s340 + $0x10] sm:$0xff] %v4261
        %4278 = vst [vmem:[%s340 + $0x18] sm:$0xff] %v4262
        %4279 = vst [vmem:[%s340 + $0x20] sm:$0xff] %v4263
        %4280 = vst [vmem:[%s340 + $0x28] sm:$0xff] %v4264
        %4281 = vst [vmem:[%s340 + $0x30] sm:$0xff] %v4265
        %4282 = vst [vmem:[%s340 + $0x38] sm:$0xff] %v4266
        %4283 = vst [vmem:[%s340 + $0x40] sm:$0xff] %v4267
        %4284 = vst [vmem:[%s340 + $0x48] sm:$0xff] %v4268
        %4285 = vst [vmem:[%s340 + $0x50] sm:$0xff] %v4269
        %4286 = vst [vmem:[%s340 + $0x58] sm:$0xff] %v4270
        %4287 = vst [vmem:[%s340 + $0x60] sm:$0xff] %v4271
        %4288 = vst [vmem:[%s340 + $0x68] sm:$0xff] %v4272
        %4289 = vst [vmem:[%s340 + $0x70] sm:$0xff] %v4273
        %4290 = vst [vmem:[%s340 + $0x78] sm:$0xff] %v4274
        %s4291 = sand.u32 %s165, 1
        %s4292 = scalar_lea.sflag [#allocation4], %s4291
        %s4293 = sand.u32 %s165, 1
        %s4294 = smul.addr %s4293, 128
        %s4295 = scalar_lea.vmem [#allocation13], %s4294
        // Predicated region
        $region69: #{tpu_custom_call.1} parent=43 // pred_check
          %p4296 = pneg %p175
        $region70: #{tpu_custom_call.1} parent=43 // pred_check_branch
          %4298 = sbr.rel (%p4296) target = $region72
        $region71: #{tpu_custom_call.1} parent=43 // pred_region
          %s4300 = ssub.s32 2048, 2048
          %4301 = vsyncadd %s4292, %s4300
          %s4302 = smul.addr %s26, 16
          %s4303 = smul.addr %s4302, 128
          %s4304 = scalar_lea.hbm %s6, %s4303
          %s4305 = sshll.u32 %s4295, 4
          %s4306 = int_to_ptr.vmem [resolvable:$true] %s4305
          %4311 = dma.vmem_to_hbm [thread:$0]  %s4306, 2048, %s4304, %s4292, 128, 128, 8
        $region72: #{tpu_custom_call.1} parent=43 // pred_fallthru
          _
      $region44: #{tpu_custom_call.1} parent=5 // pred_fallthru
        _
      %p4312 = scmp.le.s32.totalorder 2, %s21
      // Predicated region
      $region73: #{tpu_custom_call.1} parent=5 // pred_check
        %p4313 = pneg %p4312
      $region74: #{tpu_custom_call.1} parent=5 // pred_check_branch
        %4315 = sbr.rel (%p4313) target = $region76
      $region75: #{tpu_custom_call.1} parent=5 // pred_region
        %s4316 = ssub.s32 %s21, 2
        // Predicated region
        $region77: #{tpu_custom_call.1} parent=75 // pred_check
          %p4317 = pneg %p181
        $region78: #{tpu_custom_call.1} parent=75 // pred_check_branch
          %4319 = sbr.rel (%p4317) target = $region80
        $region79: #{tpu_custom_call.1} parent=75 // pred_region
          %s4320 = sand.u32 %s166, 1
          %s4321 = scalar_lea.sflag [#allocation4], %s4320
          %s4322 = sand.u32 %s166, 1
          %s4323 = smul.addr %s4322, 128
          %s4324 = scalar_lea.vmem [#allocation13], %s4323
          %4325 = dma.done %s4321, 2048
        $region80: #{tpu_custom_call.1} parent=75 // pred_fallthru
          _
      $region76: #{tpu_custom_call.1} parent=5 // pred_fallthru
        _
    $region6: #{tpu_custom_call.1} parent=1 // loop_footer
      %s25 = sadd.s32 1, %s21
    $region7: #{tpu_custom_call.1} parent=1 // loop_footer_branch
      %20 = sbr.rel target = $region3
    $region8: #{tpu_custom_call.1} parent=1 // loop_exit
      _
    %4326 = vsyncpa [#allocation3], 1
    %s4327 = scalar_lea.sflag [#allocation3], 1
    %4328 = vsyncpa %s4327, 1
    %4329 = vsyncpa [#allocation6], 1
    %4330 = vsyncpa [#allocation9], 1
    %4331 = vsyncpa [#allocation12], 1
    %4332 = vsyncpa [#allocation4], 1
    %s4333 = scalar_lea.sflag [#allocation4], 1
    %4334 = vsyncpa %s4333, 1

</llo_original>
